<compile_context>
chip_gen: v7x
topology: tpu7x:2x2x1
jax: 0.10.0
libtpu: 0.0.40
codegen_flags: <defaults>
</compile_context>

<pallas_src>
import functools

import jax
import jax.numpy as jnp
import numpy as np
from jax.experimental import pallas as pl
from jax.experimental.pallas import tpu as pltpu


def _round_up(x, m):
    return (x + m - 1) // m * m


def _conv_bn_relu_kernel(x_ref, w_ref, scale_ref, shift_ref, o_ref, acc_ref,
                         *, stride):
    # x_ref:     (Hp, Wp, TCin)        padded input slab of one batch image
    # w_ref:     (KH, KW, TCin, TCout)
    # scale_ref: (1, TCout)            gamma / sqrt(running_var + eps)
    # shift_ref: (1, TCout)            beta - running_mean * scale
    # o_ref:     (Ho, Wo, TCout)
    # acc_ref:   (Ho*Wo, TCout)        persistent fp32 accumulator (VMEM scratch)
    KH, KW, tcin, tcout = w_ref.shape
    Ho, Wo, _ = o_ref.shape
    k = pl.program_id(2)

    @pl.when(k == 0)
    def _init():
        acc_ref[...] = jnp.zeros_like(acc_ref)

    # Direct convolution: KH*KW shifted (Ho*Wo, TCin) @ (TCin, TCout) matmuls
    # on the MXU. Window slices are taken on the ref (pl.ds) -> no full-tile
    # value copies / relayouts per tap.
    for kh in range(KH):
        for kw in range(KW):
            if stride == 1:
                patch = x_ref[pl.ds(kh, Ho), pl.ds(kw, Wo), :]
            else:
                patch = x_ref[pl.ds(kh, Ho, stride=stride),
                              pl.ds(kw, Wo, stride=stride), :]
            acc_ref[...] += jnp.dot(
                patch.reshape(Ho * Wo, tcin),
                w_ref[kh, kw],
                preferred_element_type=jnp.float32)

    # Finalize once per output tile: fused BatchNorm (inference) + ReLU.
    @pl.when(k == pl.num_programs(2) - 1)
    def _finalize():
        y = acc_ref[...] * scale_ref[...] + shift_ref[...]
        y = jnp.maximum(y, 0.0)
        o_ref[...] = y.reshape(Ho, Wo, tcout).astype(o_ref.dtype)


def rtdetr_resnet_conv_layer(x_nchw, weight_oihw, gamma, beta,
                             running_mean, running_var,
                             *, stride=1, eps=1e-5):
    """Forward pass of RTDetrResNetConvLayer. Input/output are NCHW (PyTorch)."""
    N, Cin, H, W = x_nchw.shape
    Cout, _, KH, KW = weight_oihw.shape
    pad = KH // 2

    # Fold BatchNorm (inference) into per-channel scale/shift.
    scale = (gamma.astype(jnp.float32) /
             jnp.sqrt(running_var.astype(jnp.float32) + eps))
    shift = beta.astype(jnp.float32) - running_mean.astype(jnp.float32) * scale

    # Lane-dense output channels: pad Cout up to a multiple of 128.
    LANE = 128
    cout_p = _round_up(Cout, LANE)

    # NCHW -> NHWC, zero pad spatial dims once (padding = kernel_size // 2).
    x_nhwc = jnp.transpose(x_nchw, (0, 2, 3, 1))
    x_pad = jnp.pad(x_nhwc, ((0, 0), (pad, pad), (pad, pad), (0, 0)))

    # OIHW -> HWIO, pad Cout (zero weights -> zero outputs in padded channels).
    w_hwio = jnp.transpose(weight_oihw, (2, 3, 1, 0))
    if cout_p != Cout:
        w_hwio = jnp.pad(w_hwio, ((0, 0), (0, 0), (0, 0), (0, cout_p - Cout)))
        scale = jnp.pad(scale, (0, cout_p - Cout))
        shift = jnp.pad(shift, (0, cout_p - Cout))
    scale2d = scale.reshape(1, cout_p)
    shift2d = shift.reshape(1, cout_p)

    Hp, Wp = H + 2 * pad, W + 2 * pad
    Ho = (Hp - KH) // stride + 1
    Wo = (Wp - KW) // stride + 1

    # Tile sizes: lane-dense Cout tiles (256 when it divides, else 128);
    # Cin reduction tiled in chunks of 256 when it divides, else whole.
    tcout = 256 if cout_p % 256 == 0 else 128
    tcin = 256 if Cin % 256 == 0 else Cin

    grid = (N, cout_p // tcout, Cin // tcin)

    kernel = functools.partial(_conv_bn_relu_kernel, stride=stride)

    flops = 2 * N * Ho * Wo * Cin * cout_p * KH * KW
    bytes_accessed = (x_pad.size * x_pad.dtype.itemsize
                      + w_hwio.size * w_hwio.dtype.itemsize
                      + N * Ho * Wo * cout_p * x_nchw.dtype.itemsize)

    out_nhwc = pl.pallas_call(
        kernel,
        out_shape=jax.ShapeDtypeStruct((N, Ho, Wo, cout_p), x_nchw.dtype),
        grid=grid,
        in_specs=[
            # batch dim squeezed out of the kernel ref (None in block_shape)
            pl.BlockSpec((None, Hp, Wp, tcin), lambda n, j, k: (n, 0, 0, k)),
            pl.BlockSpec((KH, KW, tcin, tcout), lambda n, j, k: (0, 0, k, j)),
            pl.BlockSpec((1, tcout), lambda n, j, k: (0, j)),
            pl.BlockSpec((1, tcout), lambda n, j, k: (0, j)),
        ],
        out_specs=pl.BlockSpec((None, Ho, Wo, tcout),
                               lambda n, j, k: (n, 0, 0, j)),
        scratch_shapes=[pltpu.VMEM((Ho * Wo, tcout), jnp.float32)],
        compiler_params=pltpu.CompilerParams(
            dimension_semantics=("parallel", "parallel", "arbitrary"),
            vmem_limit_bytes=32 * 1024 * 1024),
        cost_estimate=pl.CostEstimate(
            flops=flops, transcendentals=0, bytes_accessed=bytes_accessed),
    )(x_pad, w_hwio, scale2d, shift2d)

    # Drop channel padding; NHWC -> NCHW to match PyTorch output convention.
    return jnp.transpose(out_nhwc[..., :Cout], (0, 3, 1, 2))


def _reference(x_nchw, weight_oihw, gamma, beta, running_mean, running_var,
               *, stride=1, eps=1e-5):
    pad = weight_oihw.shape[2] // 2
    y = jax.lax.conv_general_dilated(
        x_nchw.astype(jnp.float32), weight_oihw.astype(jnp.float32),
        window_strides=(stride, stride),
        padding=[(pad, pad), (pad, pad)],
        dimension_numbers=("NCHW", "OIHW", "NCHW"))
    scale = (gamma / jnp.sqrt(running_var + eps)).reshape(1, -1, 1, 1)
    shift = (beta - running_mean * gamma / jnp.sqrt(running_var + eps)).reshape(1, -1, 1, 1)
    return jnp.maximum(y * scale + shift, 0.0)


if __name__ == "__main__":
    # Small shapes consistent with the module: batch=2, in_ch=4, out_ch=8, 16x16.
    N, Cin, H, W = 2, 4, 16, 16
    Cout, K, stride = 8, 3, 1

    key = jax.random.PRNGKey(0)
    k_x, k_w, k_g, k_b, k_m, k_v = jax.random.split(key, 6)

    x = jax.random.normal(k_x, (N, Cin, H, W), dtype=jnp.float32)
    # Conv2d weight (no bias): (out_channels, in_channels, k, k)
    weight = jax.random.normal(k_w, (Cout, Cin, K, K), dtype=jnp.float32) * 0.1
    # BatchNorm2d parameters / running stats (deterministic).
    gamma = 1.0 + 0.1 * jax.random.normal(k_g, (Cout,), dtype=jnp.float32)
    beta = 0.1 * jax.random.normal(k_b, (Cout,), dtype=jnp.float32)
    running_mean = 0.05 * jax.random.normal(k_m, (Cout,), dtype=jnp.float32)
    running_var = jax.random.uniform(k_v, (Cout,), minval=0.5, maxval=1.5,
                                     dtype=jnp.float32)

    out = rtdetr_resnet_conv_layer(x, weight, gamma, beta,
                                   running_mean, running_var, stride=stride)
    out = jax.block_until_ready(out)

    ref = _reference(x, weight, gamma, beta, running_mean, running_var,
                     stride=stride)
    np.testing.assert_allclose(np.asarray(out), np.asarray(ref),
                               rtol=1e-4, atol=1e-4)

    assert out.shape == (N, Cout, H, W)
    print("KERNEL_OK")
</pallas_src>

<mosaic_0001>
module attributes {stable_mosaic.version = 11 : i64} {
  func.func @_conv_bn_relu_kernel(%arg0: i32, %arg1: i32, %arg2: i32, %arg3: memref<1x18x18x4xf32, #tpu.memory_space<vmem>>, %arg4: memref<3x3x4x128xf32, #tpu.memory_space<vmem>>, %arg5: memref<1x128xf32, #tpu.memory_space<vmem>>, %arg6: memref<1x128xf32, #tpu.memory_space<vmem>>, %arg7: memref<1x16x16x128xf32, #tpu.memory_space<vmem>>, %arg8: memref<256x128xf32, #tpu.memory_space<vmem>>) attributes {dimension_semantics = [#tpu.dimension_semantics<parallel>, #tpu.dimension_semantics<parallel>, #tpu.dimension_semantics<arbitrary>], iteration_bounds = array<i64: 2, 1, 1>, scalar_prefetch = 0 : i64, scratch_operands = 1 : i64, tpu.core_type = #tpu.core_type<tc>, window_params = [{transform_indices = @transform_0, window_bounds = array<i64: 1, 18, 18, 4>}, {transform_indices = @transform_1, window_bounds = array<i64: 3, 3, 4, 128>}, {transform_indices = @transform_2, window_bounds = array<i64: 1, 128>}, {transform_indices = @transform_3, window_bounds = array<i64: 1, 128>}, {transform_indices = @transform_4, window_bounds = array<i64: 1, 16, 16, 128>}]} {
    %c0_i32 = arith.constant 0 : i32
    %0 = arith.cmpi eq, %arg2, %c0_i32 : i32
    %1 = arith.extui %0 : i1 to i32
    %c0_i32_0 = arith.constant 0 : i32
    %2 = arith.cmpi ne, %1, %c0_i32_0 : i32
    scf.if %2 {
      %cst_116 = arith.constant 0.000000e+00 : f32
      %87 = vector.broadcast %cst_116 : f32 to vector<256x128xf32>
      %c0_117 = arith.constant 0 : index
      %c0_118 = arith.constant 0 : index
      %88 = vector.load %arg8[%c0_117, %c0_118] : memref<256x128xf32, #tpu.memory_space<vmem>>, vector<256x128xf32>
      tpu.vector_store %arg8[%c0_117, %c0_118], %87 {strides = array<i32>} : memref<256x128xf32, #tpu.memory_space<vmem>>, vector<256x128xf32>,
    } else {
    }
    %c0 = arith.constant 0 : index
    %c0_1 = arith.constant 0 : index
    %c0_2 = arith.constant 0 : index
    %c0_3 = arith.constant 0 : index
    %3 = vector.load %arg3[%c0, %c0_1, %c0_2, %c0_3] : memref<1x18x18x4xf32, #tpu.memory_space<vmem>>, vector<1x16x16x4xf32>
    %4 = vector.shape_cast %3 : vector<1x16x16x4xf32> to vector<16x16x4xf32>
    %c0_4 = arith.constant 0 : index
    %c0_5 = arith.constant 0 : index
    %5 = vector.load %arg8[%c0_4, %c0_5] : memref<256x128xf32, #tpu.memory_space<vmem>>, vector<256x128xf32>
    %6 = vector.shape_cast %4 : vector<16x16x4xf32> to vector<256x4xf32>
    %c0_6 = arith.constant 0 : index
    %c0_7 = arith.constant 0 : index
    %c0_8 = arith.constant 0 : index
    %c0_9 = arith.constant 0 : index
    %7 = vector.load %arg4[%c0_6, %c0_7, %c0_8, %c0_9] : memref<3x3x4x128xf32, #tpu.memory_space<vmem>>, vector<1x1x4x128xf32>
    %8 = vector.shape_cast %7 : vector<1x1x4x128xf32> to vector<4x128xf32>
    %cst = arith.constant dense<0.000000e+00> : vector<256x128xf32>
    %9 = tpu.matmul %6, %8, %cst {dimension_numbers = #tpu.dot_dimension_numbers<[1], [0], [0], [1], [0, 0, 1, 1], [], []>} : vector<256x4xf32>, vector<4x128xf32>, vector<256x128xf32> -> vector<256x128xf32>
    %10 = arith.addf %5, %9 : vector<256x128xf32>
    %c0_10 = arith.constant 0 : index
    %c0_11 = arith.constant 0 : index
    %11 = vector.load %arg8[%c0_10, %c0_11] : memref<256x128xf32, #tpu.memory_space<vmem>>, vector<256x128xf32>
    tpu.vector_store %arg8[%c0_10, %c0_11], %10 {strides = array<i32>} : memref<256x128xf32, #tpu.memory_space<vmem>>, vector<256x128xf32>,
    %c0_12 = arith.constant 0 : index
    %c0_13 = arith.constant 0 : index
    %c1 = arith.constant 1 : index
    %c0_14 = arith.constant 0 : index
    %12 = vector.load %arg3[%c0_12, %c0_13, %c1, %c0_14] : memref<1x18x18x4xf32, #tpu.memory_space<vmem>>, vector<1x16x16x4xf32>
    %13 = vector.shape_cast %12 : vector<1x16x16x4xf32> to vector<16x16x4xf32>
    %c0_15 = arith.constant 0 : index
    %c0_16 = arith.constant 0 : index
    %14 = vector.load %arg8[%c0_15, %c0_16] : memref<256x128xf32, #tpu.memory_space<vmem>>, vector<256x128xf32>
    %15 = vector.shape_cast %13 : vector<16x16x4xf32> to vector<256x4xf32>
    %c0_17 = arith.constant 0 : index
    %c1_18 = arith.constant 1 : index
    %c0_19 = arith.constant 0 : index
    %c0_20 = arith.constant 0 : index
    %16 = vector.load %arg4[%c0_17, %c1_18, %c0_19, %c0_20] : memref<3x3x4x128xf32, #tpu.memory_space<vmem>>, vector<1x1x4x128xf32>
    %17 = vector.shape_cast %16 : vector<1x1x4x128xf32> to vector<4x128xf32>
    %cst_21 = arith.constant dense<0.000000e+00> : vector<256x128xf32>
    %18 = tpu.matmul %15, %17, %cst_21 {dimension_numbers = #tpu.dot_dimension_numbers<[1], [0], [0], [1], [0, 0, 1, 1], [], []>} : vector<256x4xf32>, vector<4x128xf32>, vector<256x128xf32> -> vector<256x128xf32>
    %19 = arith.addf %14, %18 : vector<256x128xf32>
    %c0_22 = arith.constant 0 : index
    %c0_23 = arith.constant 0 : index
    %20 = vector.load %arg8[%c0_22, %c0_23] : memref<256x128xf32, #tpu.memory_space<vmem>>, vector<256x128xf32>
    tpu.vector_store %arg8[%c0_22, %c0_23], %19 {strides = array<i32>} : memref<256x128xf32, #tpu.memory_space<vmem>>, vector<256x128xf32>,
    %c0_24 = arith.constant 0 : index
    %c0_25 = arith.constant 0 : index
    %c2 = arith.constant 2 : index
    %c0_26 = arith.constant 0 : index
    %21 = vector.load %arg3[%c0_24, %c0_25, %c2, %c0_26] : memref<1x18x18x4xf32, #tpu.memory_space<vmem>>, vector<1x16x16x4xf32>
    %22 = vector.shape_cast %21 : vector<1x16x16x4xf32> to vector<16x16x4xf32>
    %c0_27 = arith.constant 0 : index
    %c0_28 = arith.constant 0 : index
    %23 = vector.load %arg8[%c0_27, %c0_28] : memref<256x128xf32, #tpu.memory_space<vmem>>, vector<256x128xf32>
    %24 = vector.shape_cast %22 : vector<16x16x4xf32> to vector<256x4xf32>
    %c0_29 = arith.constant 0 : index
    %c2_30 = arith.constant 2 : index
    %c0_31 = arith.constant 0 : index
    %c0_32 = arith.constant 0 : index
    %25 = vector.load %arg4[%c0_29, %c2_30, %c0_31, %c0_32] : memref<3x3x4x128xf32, #tpu.memory_space<vmem>>, vector<1x1x4x128xf32>
    %26 = vector.shape_cast %25 : vector<1x1x4x128xf32> to vector<4x128xf32>
    %cst_33 = arith.constant dense<0.000000e+00> : vector<256x128xf32>
    %27 = tpu.matmul %24, %26, %cst_33 {dimension_numbers = #tpu.dot_dimension_numbers<[1], [0], [0], [1], [0, 0, 1, 1], [], []>} : vector<256x4xf32>, vector<4x128xf32>, vector<256x128xf32> -> vector<256x128xf32>
    %28 = arith.addf %23, %27 : vector<256x128xf32>
    %c0_34 = arith.constant 0 : index
    %c0_35 = arith.constant 0 : index
    %29 = vector.load %arg8[%c0_34, %c0_35] : memref<256x128xf32, #tpu.memory_space<vmem>>, vector<256x128xf32>
    tpu.vector_store %arg8[%c0_34, %c0_35], %28 {strides = array<i32>} : memref<256x128xf32, #tpu.memory_space<vmem>>, vector<256x128xf32>,
    %c0_36 = arith.constant 0 : index
    %c1_37 = arith.constant 1 : index
    %c0_38 = arith.constant 0 : index
    %c0_39 = arith.constant 0 : index
    %30 = vector.load %arg3[%c0_36, %c1_37, %c0_38, %c0_39] : memref<1x18x18x4xf32, #tpu.memory_space<vmem>>, vector<1x16x16x4xf32>
    %31 = vector.shape_cast %30 : vector<1x16x16x4xf32> to vector<16x16x4xf32>
    %c0_40 = arith.constant 0 : index
    %c0_41 = arith.constant 0 : index
    %32 = vector.load %arg8[%c0_40, %c0_41] : memref<256x128xf32, #tpu.memory_space<vmem>>, vector<256x128xf32>
    %33 = vector.shape_cast %31 : vector<16x16x4xf32> to vector<256x4xf32>
    %c1_42 = arith.constant 1 : index
    %c0_43 = arith.constant 0 : index
    %c0_44 = arith.constant 0 : index
    %c0_45 = arith.constant 0 : index
    %34 = vector.load %arg4[%c1_42, %c0_43, %c0_44, %c0_45] : memref<3x3x4x128xf32, #tpu.memory_space<vmem>>, vector<1x1x4x128xf32>
    %35 = vector.shape_cast %34 : vector<1x1x4x128xf32> to vector<4x128xf32>
    %cst_46 = arith.constant dense<0.000000e+00> : vector<256x128xf32>
    %36 = tpu.matmul %33, %35, %cst_46 {dimension_numbers = #tpu.dot_dimension_numbers<[1], [0], [0], [1], [0, 0, 1, 1], [], []>} : vector<256x4xf32>, vector<4x128xf32>, vector<256x128xf32> -> vector<256x128xf32>
    %37 = arith.addf %32, %36 : vector<256x128xf32>
    %c0_47 = arith.constant 0 : index
    %c0_48 = arith.constant 0 : index
    %38 = vector.load %arg8[%c0_47, %c0_48] : memref<256x128xf32, #tpu.memory_space<vmem>>, vector<256x128xf32>
    tpu.vector_store %arg8[%c0_47, %c0_48], %37 {strides = array<i32>} : memref<256x128xf32, #tpu.memory_space<vmem>>, vector<256x128xf32>,
    %c0_49 = arith.constant 0 : index
    %c1_50 = arith.constant 1 : index
    %c1_51 = arith.constant 1 : index
    %c0_52 = arith.constant 0 : index
    %39 = vector.load %arg3[%c0_49, %c1_50, %c1_51, %c0_52] : memref<1x18x18x4xf32, #tpu.memory_space<vmem>>, vector<1x16x16x4xf32>
    %40 = vector.shape_cast %39 : vector<1x16x16x4xf32> to vector<16x16x4xf32>
    %c0_53 = arith.constant 0 : index
    %c0_54 = arith.constant 0 : index
    %41 = vector.load %arg8[%c0_53, %c0_54] : memref<256x128xf32, #tpu.memory_space<vmem>>, vector<256x128xf32>
    %42 = vector.shape_cast %40 : vector<16x16x4xf32> to vector<256x4xf32>
    %c1_55 = arith.constant 1 : index
    %c1_56 = arith.constant 1 : index
    %c0_57 = arith.constant 0 : index
    %c0_58 = arith.constant 0 : index
    %43 = vector.load %arg4[%c1_55, %c1_56, %c0_57, %c0_58] : memref<3x3x4x128xf32, #tpu.memory_space<vmem>>, vector<1x1x4x128xf32>
    %44 = vector.shape_cast %43 : vector<1x1x4x128xf32> to vector<4x128xf32>
    %cst_59 = arith.constant dense<0.000000e+00> : vector<256x128xf32>
    %45 = tpu.matmul %42, %44, %cst_59 {dimension_numbers = #tpu.dot_dimension_numbers<[1], [0], [0], [1], [0, 0, 1, 1], [], []>} : vector<256x4xf32>, vector<4x128xf32>, vector<256x128xf32> -> vector<256x128xf32>
    %46 = arith.addf %41, %45 : vector<256x128xf32>
    %c0_60 = arith.constant 0 : index
    %c0_61 = arith.constant 0 : index
    %47 = vector.load %arg8[%c0_60, %c0_61] : memref<256x128xf32, #tpu.memory_space<vmem>>, vector<256x128xf32>
    tpu.vector_store %arg8[%c0_60, %c0_61], %46 {strides = array<i32>} : memref<256x128xf32, #tpu.memory_space<vmem>>, vector<256x128xf32>,
    %c0_62 = arith.constant 0 : index
    %c1_63 = arith.constant 1 : index
    %c2_64 = arith.constant 2 : index
    %c0_65 = arith.constant 0 : index
    %48 = vector.load %arg3[%c0_62, %c1_63, %c2_64, %c0_65] : memref<1x18x18x4xf32, #tpu.memory_space<vmem>>, vector<1x16x16x4xf32>
    %49 = vector.shape_cast %48 : vector<1x16x16x4xf32> to vector<16x16x4xf32>
    %c0_66 = arith.constant 0 : index
    %c0_67 = arith.constant 0 : index
    %50 = vector.load %arg8[%c0_66, %c0_67] : memref<256x128xf32, #tpu.memory_space<vmem>>, vector<256x128xf32>
    %51 = vector.shape_cast %49 : vector<16x16x4xf32> to vector<256x4xf32>
    %c1_68 = arith.constant 1 : index
    %c2_69 = arith.constant 2 : index
    %c0_70 = arith.constant 0 : index
    %c0_71 = arith.constant 0 : index
    %52 = vector.load %arg4[%c1_68, %c2_69, %c0_70, %c0_71] : memref<3x3x4x128xf32, #tpu.memory_space<vmem>>, vector<1x1x4x128xf32>
    %53 = vector.shape_cast %52 : vector<1x1x4x128xf32> to vector<4x128xf32>
    %cst_72 = arith.constant dense<0.000000e+00> : vector<256x128xf32>
    %54 = tpu.matmul %51, %53, %cst_72 {dimension_numbers = #tpu.dot_dimension_numbers<[1], [0], [0], [1], [0, 0, 1, 1], [], []>} : vector<256x4xf32>, vector<4x128xf32>, vector<256x128xf32> -> vector<256x128xf32>
    %55 = arith.addf %50, %54 : vector<256x128xf32>
    %c0_73 = arith.constant 0 : index
    %c0_74 = arith.constant 0 : index
    %56 = vector.load %arg8[%c0_73, %c0_74] : memref<256x128xf32, #tpu.memory_space<vmem>>, vector<256x128xf32>
    tpu.vector_store %arg8[%c0_73, %c0_74], %55 {strides = array<i32>} : memref<256x128xf32, #tpu.memory_space<vmem>>, vector<256x128xf32>,
    %c0_75 = arith.constant 0 : index
    %c2_76 = arith.constant 2 : index
    %c0_77 = arith.constant 0 : index
    %c0_78 = arith.constant 0 : index
    %57 = vector.load %arg3[%c0_75, %c2_76, %c0_77, %c0_78] : memref<1x18x18x4xf32, #tpu.memory_space<vmem>>, vector<1x16x16x4xf32>
    %58 = vector.shape_cast %57 : vector<1x16x16x4xf32> to vector<16x16x4xf32>
    %c0_79 = arith.constant 0 : index
    %c0_80 = arith.constant 0 : index
    %59 = vector.load %arg8[%c0_79, %c0_80] : memref<256x128xf32, #tpu.memory_space<vmem>>, vector<256x128xf32>
    %60 = vector.shape_cast %58 : vector<16x16x4xf32> to vector<256x4xf32>
    %c2_81 = arith.constant 2 : index
    %c0_82 = arith.constant 0 : index
    %c0_83 = arith.constant 0 : index
    %c0_84 = arith.constant 0 : index
    %61 = vector.load %arg4[%c2_81, %c0_82, %c0_83, %c0_84] : memref<3x3x4x128xf32, #tpu.memory_space<vmem>>, vector<1x1x4x128xf32>
    %62 = vector.shape_cast %61 : vector<1x1x4x128xf32> to vector<4x128xf32>
    %cst_85 = arith.constant dense<0.000000e+00> : vector<256x128xf32>
    %63 = tpu.matmul %60, %62, %cst_85 {dimension_numbers = #tpu.dot_dimension_numbers<[1], [0], [0], [1], [0, 0, 1, 1], [], []>} : vector<256x4xf32>, vector<4x128xf32>, vector<256x128xf32> -> vector<256x128xf32>
    %64 = arith.addf %59, %63 : vector<256x128xf32>
    %c0_86 = arith.constant 0 : index
    %c0_87 = arith.constant 0 : index
    %65 = vector.load %arg8[%c0_86, %c0_87] : memref<256x128xf32, #tpu.memory_space<vmem>>, vector<256x128xf32>
    tpu.vector_store %arg8[%c0_86, %c0_87], %64 {strides = array<i32>} : memref<256x128xf32, #tpu.memory_space<vmem>>, vector<256x128xf32>,
    %c0_88 = arith.constant 0 : index
    %c2_89 = arith.constant 2 : index
    %c1_90 = arith.constant 1 : index
    %c0_91 = arith.constant 0 : index
    %66 = vector.load %arg3[%c0_88, %c2_89, %c1_90, %c0_91] : memref<1x18x18x4xf32, #tpu.memory_space<vmem>>, vector<1x16x16x4xf32>
    %67 = vector.shape_cast %66 : vector<1x16x16x4xf32> to vector<16x16x4xf32>
    %c0_92 = arith.constant 0 : index
    %c0_93 = arith.constant 0 : index
    %68 = vector.load %arg8[%c0_92, %c0_93] : memref<256x128xf32, #tpu.memory_space<vmem>>, vector<256x128xf32>
    %69 = vector.shape_cast %67 : vector<16x16x4xf32> to vector<256x4xf32>
    %c2_94 = arith.constant 2 : index
    %c1_95 = arith.constant 1 : index
    %c0_96 = arith.constant 0 : index
    %c0_97 = arith.constant 0 : index
    %70 = vector.load %arg4[%c2_94, %c1_95, %c0_96, %c0_97] : memref<3x3x4x128xf32, #tpu.memory_space<vmem>>, vector<1x1x4x128xf32>
    %71 = vector.shape_cast %70 : vector<1x1x4x128xf32> to vector<4x128xf32>
    %cst_98 = arith.constant dense<0.000000e+00> : vector<256x128xf32>
    %72 = tpu.matmul %69, %71, %cst_98 {dimension_numbers = #tpu.dot_dimension_numbers<[1], [0], [0], [1], [0, 0, 1, 1], [], []>} : vector<256x4xf32>, vector<4x128xf32>, vector<256x128xf32> -> vector<256x128xf32>
    %73 = arith.addf %68, %72 : vector<256x128xf32>
    %c0_99 = arith.constant 0 : index
    %c0_100 = arith.constant 0 : index
    %74 = vector.load %arg8[%c0_99, %c0_100] : memref<256x128xf32, #tpu.memory_space<vmem>>, vector<256x128xf32>
    tpu.vector_store %arg8[%c0_99, %c0_100], %73 {strides = array<i32>} : memref<256x128xf32, #tpu.memory_space<vmem>>, vector<256x128xf32>,
    %c0_101 = arith.constant 0 : index
    %c2_102 = arith.constant 2 : index
    %c2_103 = arith.constant 2 : index
    %c0_104 = arith.constant 0 : index
    %75 = vector.load %arg3[%c0_101, %c2_102, %c2_103, %c0_104] : memref<1x18x18x4xf32, #tpu.memory_space<vmem>>, vector<1x16x16x4xf32>
    %76 = vector.shape_cast %75 : vector<1x16x16x4xf32> to vector<16x16x4xf32>
    %c0_105 = arith.constant 0 : index
    %c0_106 = arith.constant 0 : index
    %77 = vector.load %arg8[%c0_105, %c0_106] : memref<256x128xf32, #tpu.memory_space<vmem>>, vector<256x128xf32>
    %78 = vector.shape_cast %76 : vector<16x16x4xf32> to vector<256x4xf32>
    %c2_107 = arith.constant 2 : index
    %c2_108 = arith.constant 2 : index
    %c0_109 = arith.constant 0 : index
    %c0_110 = arith.constant 0 : index
    %79 = vector.load %arg4[%c2_107, %c2_108, %c0_109, %c0_110] : memref<3x3x4x128xf32, #tpu.memory_space<vmem>>, vector<1x1x4x128xf32>
    %80 = vector.shape_cast %79 : vector<1x1x4x128xf32> to vector<4x128xf32>
    %cst_111 = arith.constant dense<0.000000e+00> : vector<256x128xf32>
    %81 = tpu.matmul %78, %80, %cst_111 {dimension_numbers = #tpu.dot_dimension_numbers<[1], [0], [0], [1], [0, 0, 1, 1], [], []>} : vector<256x4xf32>, vector<4x128xf32>, vector<256x128xf32> -> vector<256x128xf32>
    %82 = arith.addf %77, %81 : vector<256x128xf32>
    %c0_112 = arith.constant 0 : index
    %c0_113 = arith.constant 0 : index
    %83 = vector.load %arg8[%c0_112, %c0_113] : memref<256x128xf32, #tpu.memory_space<vmem>>, vector<256x128xf32>
    tpu.vector_store %arg8[%c0_112, %c0_113], %82 {strides = array<i32>} : memref<256x128xf32, #tpu.memory_space<vmem>>, vector<256x128xf32>,
    %c0_i32_114 = arith.constant 0 : i32
    %84 = arith.cmpi eq, %arg2, %c0_i32_114 : i32
    %85 = arith.extui %84 : i1 to i32
    %c0_i32_115 = arith.constant 0 : i32
    %86 = arith.cmpi ne, %85, %c0_i32_115 : i32
    scf.if %86 {
      %c0_116 = arith.constant 0 : index
      %c0_117 = arith.constant 0 : index
      %87 = vector.load %arg8[%c0_116, %c0_117] : memref<256x128xf32, #tpu.memory_space<vmem>>, vector<256x128xf32>
      %c0_118 = arith.constant 0 : index
      %c0_119 = arith.constant 0 : index
      %88 = vector.load %arg5[%c0_118, %c0_119] : memref<1x128xf32, #tpu.memory_space<vmem>>, vector<1x128xf32>
      %89 = vector.broadcast %88 : vector<1x128xf32> to vector<256x128xf32>
      %90 = arith.mulf %87, %89 : vector<256x128xf32>
      %c0_120 = arith.constant 0 : index
      %c0_121 = arith.constant 0 : index
      %91 = vector.load %arg6[%c0_120, %c0_121] : memref<1x128xf32, #tpu.memory_space<vmem>>, vector<1x128xf32>
      %92 = vector.broadcast %91 : vector<1x128xf32> to vector<256x128xf32>
      %93 = arith.addf %90, %92 : vector<256x128xf32>
      %cst_122 = arith.constant 0.000000e+00 : f32
      %94 = vector.broadcast %cst_122 : f32 to vector<256x128xf32>
      %95 = arith.maximumf %93, %94 : vector<256x128xf32>
      %96 = vector.shape_cast %95 : vector<256x128xf32> to vector<16x16x128xf32>
      %c0_123 = arith.constant 0 : index
      %c0_124 = arith.constant 0 : index
      %c0_125 = arith.constant 0 : index
      %c0_126 = arith.constant 0 : index
      %97 = vector.load %arg7[%c0_123, %c0_124, %c0_125, %c0_126] : memref<1x16x16x128xf32, #tpu.memory_space<vmem>>, vector<1x16x16x128xf32>
      %98 = vector.shape_cast %97 : vector<1x16x16x128xf32> to vector<16x16x128xf32>
      %99 = vector.shape_cast %96 : vector<16x16x128xf32> to vector<1x16x16x128xf32>
      tpu.vector_store %arg7[%c0_123, %c0_124, %c0_125, %c0_126], %99 {strides = array<i32>} : memref<1x16x16x128xf32, #tpu.memory_space<vmem>>, vector<1x16x16x128xf32>,
    } else {
    }
    return
  }
  func.func @transform_0(%arg0: i32, %arg1: i32, %arg2: i32) -> (i32, i32, i32, i32) {
    %c0_i32 = arith.constant 0 : i32
    %c0_i32_0 = arith.constant 0 : i32
    %c0_i32_1 = arith.constant 0 : i32
    return %arg0, %c0_i32, %c0_i32_0, %arg2 : i32, i32, i32, i32
  }
  func.func @transform_1(%arg0: i32, %arg1: i32, %arg2: i32) -> (i32, i32, i32, i32) {
    %c0_i32 = arith.constant 0 : i32
    %c0_i32_0 = arith.constant 0 : i32
    %c0_i32_1 = arith.constant 0 : i32
    return %c0_i32, %c0_i32_0, %arg2, %arg1 : i32, i32, i32, i32
  }
  func.func @transform_2(%arg0: i32, %arg1: i32, %arg2: i32) -> (i32, i32) {
    %c0_i32 = arith.constant 0 : i32
    %c0_i32_0 = arith.constant 0 : i32
    return %c0_i32, %arg1 : i32, i32
  }
  func.func @transform_3(%arg0: i32, %arg1: i32, %arg2: i32) -> (i32, i32) {
    %c0_i32 = arith.constant 0 : i32
    %c0_i32_0 = arith.constant 0 : i32
    return %c0_i32, %arg1 : i32, i32
  }
  func.func @transform_4(%arg0: i32, %arg1: i32, %arg2: i32) -> (i32, i32, i32, i32) {
    %c0_i32 = arith.constant 0 : i32
    %c0_i32_0 = arith.constant 0 : i32
    %c0_i32_1 = arith.constant 0 : i32
    return %arg0, %c0_i32, %c0_i32_0, %arg1 : i32, i32, i32, i32
  }
}

</mosaic_0001>

<llo_original>
// kernel: tpu_custom_call.1
$region0: #{tpu_custom_call.1}
  #allocation0 [shape = 'u32[]', space=smem, size = 0x4, offset = 0x4, fixed_abs, tag = 'smem constant byte address 0x4 - core index']
  #allocation1 [shape = 'u32[144,128]{1,0:T(1,128)}', space=vmem, size = 0x12000, scoped, tag = 'internal scratch']
  #allocation2 [shape = 'f32[256,128]{1,0:T(8,128)}', space=vmem, size = 0x20000, scoped, tag = 'scratch operand']
  %s0 = inlined_call_operand.vmem [shape: f32[2,18,18,4], index: 0, kind: input, shape index: {}]
  %s1 = inlined_call_operand.vmem [shape: f32[3,3,4,128], index: 1, kind: input, shape index: {}]
  %s2 = inlined_call_operand.vmem [shape: f32[1,128], index: 2, kind: input, shape index: {}]
  %s3 = inlined_call_operand.vmem [shape: f32[1,128], index: 3, kind: input, shape index: {}]
  %s4 = inlined_call_operand.hbm [shape: f32[2,16,16,128], index: 4, kind: output, shape index: {}]
  %s5 = sld [smem:[#allocation0]]
  $region57: #{tpu_custom_call.1} parent=0
    _
  %s7 = ssub.s32 1, %s5
  %s8 = scalar_select 0, %s7, %s5
  $region1: #{tpu_custom_call.1} parent=0
    #allocation3 [shape = 'u8[262144]{0}', space=vmem, size = 0x40000, scoped, tag = 'output window, operand 0']
    #allocation4 [shape = 's32[2]{0}', space=sflag, size = 0x8, scoped, tag = 'scoped memory for tpu_custom_call.1']
    %9 = vsyncpa [#allocation4], 0
    %s10 = scalar_lea.sflag [#allocation4], 1
    %11 = vsyncpa %s10, 0
    loop: start=0, step=1, limit=4
    $region2: #{tpu_custom_call.1} parent=1 // loop_pre_header
      _
    $region3: #{tpu_custom_call.1} parent=1 // loop_header
      %s13 = sphi 0, %s17
      %p14 = scmp.ge.s32.totalorder %s13, 4
      %s20 = sphi 0, %s39
      %s21 = sphi 0, %s35
      %s22 = sphi 0, %s31
      %s23 = sphi 0, %s20
      %s24 = sphi 0, %s21
      %s25 = sphi 0, %s22
      %s26 = sphi 0, %s23
      %s27 = sphi 0, %s24
      %s28 = sphi 0, %s25
      %s44 = sphi 0, %s46
      %s47 = sphi 0, %s44
      %s48 = sphi 0, %s47
      %s64 = sphi 0, %s48
      %s72 = sphi 0, %s74
      %s75 = sphi 0, %s72
      %s76 = sphi 0, %s75
      %s92 = sphi 0, %s76
      %s98 = sphi 0, %s100
      %s101 = sphi 0, %s98
      %s102 = sphi 0, %s101
      %s118 = sphi 0, %s102
      %s124 = sphi 0, %s126
      %s127 = sphi 0, %s124
      %s128 = sphi 0, %s127
      %s144 = sphi 0, %s128
      %s152 = sphi 0, %s154
      %s155 = sphi 0, %s152
      %s156 = sphi 0, %s155
      %s172 = sphi 0, %s156
    $region4: #{tpu_custom_call.1} parent=1 // loop_header_branch
      %16 = sbr.rel (%p14) target = $region8
    $region5: #{tpu_custom_call.1} parent=1 // loop_body
      %s18 = ssub.s32 %s13, 1
      %s19 = ssub.s32 %s13, 2
      %s29 = sadd.s32 1, %s22
      %p30 = scmp.ge.s32.totalorder %s29, 1
      %s31 = scalar_select %p30, 0, %s29
      %s32 = sadd.s32 1, %s21
      %s33 = scalar_select %p30, %s32, %s21
      %p34 = scmp.ge.s32.totalorder %s33, 1
      %s35 = scalar_select %p34, 0, %s33
      %s36 = sadd.s32 1, %s20
      %s37 = scalar_select %p34, %s36, %s20
      %p38 = scmp.ge.s32.totalorder %s37, 2
      %s39 = scalar_select %p38, 0, %s37
      %s40 = ssub.s32 %s20, %s39
      %s41 = ssub.s32 %s22, %s31
      %s42 = sor.u32 %s40, %s41
      %p43 = scmp.eq.s32.totalorder %s42, 0
      %s45 = sadd.s32 %s44, 1
      %s46 = scalar_select %p43, %s44, %s45
      %p49 = pneg %p43
      %p50 = scmp.eq.s32.totalorder %s13, 1
      %p51 = por %p49, %p50
      %p52 = scmp.ne.s32.totalorder %s44, %s47
      %p53 = scmp.eq.s32.totalorder %s13, 0
      %p54 = por %p52, %p53
      %p55 = scmp.ne.s32.totalorder %s44, %s47
      %p56 = scmp.eq.s32.totalorder %s18, 1
      %p57 = por %p55, %p56
      %p58 = scmp.ne.s32.totalorder %s47, %s48
      %p59 = scmp.eq.s32.totalorder %s18, 0
      %p60 = por %p58, %p59
      %p61 = scmp.ne.s32.totalorder %s47, %s48
      %p62 = scmp.eq.s32.totalorder %s19, 1
      %p63 = por %p61, %p62
      %p65 = scmp.ne.s32.totalorder %s48, %s64
      %p66 = scmp.eq.s32.totalorder %s19, 0
      %p67 = por %p65, %p66
      %s68 = ssub.s32 %s22, %s31
      %s69 = ssub.s32 %s21, %s35
      %s70 = sor.u32 %s68, %s69
      %p71 = scmp.eq.s32.totalorder %s70, 0
      %s73 = sadd.s32 %s72, 1
      %s74 = scalar_select %p71, %s72, %s73
      %p77 = pneg %p71
      %p78 = scmp.eq.s32.totalorder %s13, 1
      %p79 = por %p77, %p78
      %p80 = scmp.ne.s32.totalorder %s72, %s75
      %p81 = scmp.eq.s32.totalorder %s13, 0
      %p82 = por %p80, %p81
      %p83 = scmp.ne.s32.totalorder %s72, %s75
      %p84 = scmp.eq.s32.totalorder %s18, 1
      %p85 = por %p83, %p84
      %p86 = scmp.ne.s32.totalorder %s75, %s76
      %p87 = scmp.eq.s32.totalorder %s18, 0
      %p88 = por %p86, %p87
      %p89 = scmp.ne.s32.totalorder %s75, %s76
      %p90 = scmp.eq.s32.totalorder %s19, 1
      %p91 = por %p89, %p90
      %p93 = scmp.ne.s32.totalorder %s76, %s92
      %p94 = scmp.eq.s32.totalorder %s19, 0
      %p95 = por %p93, %p94
      %s96 = ssub.s32 %s21, %s35
      %p97 = scmp.eq.s32.totalorder %s96, 0
      %s99 = sadd.s32 %s98, 1
      %s100 = scalar_select %p97, %s98, %s99
      %p103 = pneg %p97
      %p104 = scmp.eq.s32.totalorder %s13, 1
      %p105 = por %p103, %p104
      %p106 = scmp.ne.s32.totalorder %s98, %s101
      %p107 = scmp.eq.s32.totalorder %s13, 0
      %p108 = por %p106, %p107
      %p109 = scmp.ne.s32.totalorder %s98, %s101
      %p110 = scmp.eq.s32.totalorder %s18, 1
      %p111 = por %p109, %p110
      %p112 = scmp.ne.s32.totalorder %s101, %s102
      %p113 = scmp.eq.s32.totalorder %s18, 0
      %p114 = por %p112, %p113
      %p115 = scmp.ne.s32.totalorder %s101, %s102
      %p116 = scmp.eq.s32.totalorder %s19, 1
      %p117 = por %p115, %p116
      %p119 = scmp.ne.s32.totalorder %s102, %s118
      %p120 = scmp.eq.s32.totalorder %s19, 0
      %p121 = por %p119, %p120
      %s122 = ssub.s32 %s21, %s35
      %p123 = scmp.eq.s32.totalorder %s122, 0
      %s125 = sadd.s32 %s124, 1
      %s126 = scalar_select %p123, %s124, %s125
      %p129 = pneg %p123
      %p130 = scmp.eq.s32.totalorder %s13, 1
      %p131 = por %p129, %p130
      %p132 = scmp.ne.s32.totalorder %s124, %s127
      %p133 = scmp.eq.s32.totalorder %s13, 0
      %p134 = por %p132, %p133
      %p135 = scmp.ne.s32.totalorder %s124, %s127
      %p136 = scmp.eq.s32.totalorder %s18, 1
      %p137 = por %p135, %p136
      %p138 = scmp.ne.s32.totalorder %s127, %s128
      %p139 = scmp.eq.s32.totalorder %s18, 0
      %p140 = por %p138, %p139
      %p141 = scmp.ne.s32.totalorder %s127, %s128
      %p142 = scmp.eq.s32.totalorder %s19, 1
      %p143 = por %p141, %p142
      %p145 = scmp.ne.s32.totalorder %s128, %s144
      %p146 = scmp.eq.s32.totalorder %s19, 0
      %p147 = por %p145, %p146
      %s148 = ssub.s32 %s20, %s39
      %s149 = ssub.s32 %s21, %s35
      %s150 = sor.u32 %s148, %s149
      %p151 = scmp.eq.s32.totalorder %s150, 0
      %s153 = sadd.s32 %s152, 1
      %s154 = scalar_select %p151, %s152, %s153
      %p157 = pneg %p151
      %p158 = scmp.eq.s32.totalorder %s13, 1
      %p159 = por %p157, %p158
      %p160 = scmp.ne.s32.totalorder %s152, %s155
      %p161 = scmp.eq.s32.totalorder %s13, 0
      %p162 = por %p160, %p161
      %p163 = scmp.ne.s32.totalorder %s152, %s155
      %p164 = scmp.eq.s32.totalorder %s18, 1
      %p165 = por %p163, %p164
      %p166 = scmp.ne.s32.totalorder %s155, %s156
      %p167 = scmp.eq.s32.totalorder %s18, 0
      %p168 = por %p166, %p167
      %p169 = scmp.ne.s32.totalorder %s155, %s156
      %p170 = scmp.eq.s32.totalorder %s19, 1
      %p171 = por %p169, %p170
      %p173 = scmp.ne.s32.totalorder %s156, %s172
      %p174 = scmp.eq.s32.totalorder %s19, 0
      %p175 = por %p173, %p174
      %p176 = scmp.le.s32.totalorder 1, %s13
      %p177 = scmp.lt.s32.totalorder %s13, 3
      %p178 = pnand %p176, %p177
      %p179 = pneg %p178
      // Predicated region
      $region9: #{tpu_custom_call.1} parent=5 // pred_check
        _
      $region10: #{tpu_custom_call.1} parent=5 // pred_check_branch
        %181 = sbr.rel (%p178) target = $region12
      $region11: #{tpu_custom_call.1} parent=5 // pred_region
        %s182 = ssub.s32 %s13, 1
        // Predicated region
        $region13: #{tpu_custom_call.1} parent=11 // pred_check
          %p183 = pneg %p88
        $region14: #{tpu_custom_call.1} parent=11 // pred_check_branch
          %185 = sbr.rel (%p183) target = $region16
        $region15: #{tpu_custom_call.1} parent=11 // pred_region
          %p186 = scmp.lt.s32.totalorder %s25, 0
          %s187 = scalar_select %p186, %s25, 0
          %p188 = scmp.lt.s32.totalorder %s24, 0
          %s189 = scalar_select %p188, %s24, 0
          %s190 = sadd.s32 %s189, %s187
          %s191 = smul.addr %s190, 4
          %s192 = scalar_lea.vmem %s1, %s191
        $region16: #{tpu_custom_call.1} parent=11 // pred_fallthru
          _
        // Predicated region
        $region17: #{tpu_custom_call.1} parent=11 // pred_check
          %p193 = pneg %p114
        $region18: #{tpu_custom_call.1} parent=11 // pred_check_branch
          %195 = sbr.rel (%p193) target = $region20
        $region19: #{tpu_custom_call.1} parent=11 // pred_region
          %p196 = scmp.lt.s32.totalorder %s24, 0
          %s197 = scalar_select %p196, %s24, 0
          %s198 = scalar_lea.vmem %s2, %s197
        $region20: #{tpu_custom_call.1} parent=11 // pred_fallthru
          _
        // Predicated region
        $region21: #{tpu_custom_call.1} parent=11 // pred_check
          %p199 = pneg %p140
        $region22: #{tpu_custom_call.1} parent=11 // pred_check_branch
          %201 = sbr.rel (%p199) target = $region24
        $region23: #{tpu_custom_call.1} parent=11 // pred_region
          %p202 = scmp.lt.s32.totalorder %s24, 0
          %s203 = scalar_select %p202, %s24, 0
          %s204 = scalar_lea.vmem %s3, %s203
        $region24: #{tpu_custom_call.1} parent=11 // pred_fallthru
          _
      $region12: #{tpu_custom_call.1} parent=5 // pred_fallthru
        _
      %p205 = scmp.lt.s32.totalorder %s13, 2
      // Predicated region
      $region25: #{tpu_custom_call.1} parent=5 // pred_check
        %p206 = pneg %p205
      $region26: #{tpu_custom_call.1} parent=5 // pred_check_branch
        %208 = sbr.rel (%p206) target = $region28
      $region27: #{tpu_custom_call.1} parent=5 // pred_region
        // Predicated region
        $region29: #{tpu_custom_call.1} parent=27 // pred_check
          %p209 = pneg %p54
        $region30: #{tpu_custom_call.1} parent=27 // pred_check_branch
          %211 = sbr.rel (%p209) target = $region32
        $region31: #{tpu_custom_call.1} parent=27 // pred_region
          %p212 = scmp.lt.s32.totalorder %s20, 1
          %s213 = scalar_select %p212, %s20, 1
          %p214 = scmp.lt.s32.totalorder %s22, 0
          %s215 = scalar_select %p214, %s22, 0
          %s216 = smul.addr %s213, 54
          %s217 = sadd.s32 %s215, %s216
          %s218 = smul.addr %s217, 8
          %s219 = scalar_lea.vmem %s0, %s218
        $region32: #{tpu_custom_call.1} parent=27 // pred_fallthru
          _
      $region28: #{tpu_custom_call.1} parent=5 // pred_fallthru
        _
      %p220 = scmp.le.s32.totalorder 1, %s13
      %p221 = scmp.lt.s32.totalorder %s13, 3
      %p222 = pnand %p220, %p221
      %p223 = pneg %p222
      // Predicated region
      $region33: #{tpu_custom_call.1} parent=5 // pred_check
        _
      $region34: #{tpu_custom_call.1} parent=5 // pred_check_branch
        %225 = sbr.rel (%p222) target = $region36
      $region35: #{tpu_custom_call.1} parent=5 // pred_region
        %s226 = ssub.s32 %s13, 1
        %p227 = scmp.lt.s32.totalorder %s23, 1
        %s228 = scalar_select %p227, %s23, 1
        %p229 = scmp.lt.s32.totalorder %s25, 0
        %s230 = scalar_select %p229, %s25, 0
        %s231 = smul.addr %s228, 54
        %s232 = sadd.s32 %s230, %s231
        %s233 = smul.addr %s232, 8
        %s234 = scalar_lea.vmem %s0, %s233
        %p235 = pneg %p60
        %p236 = pneg %p57
        %p237 = scmp.lt.s32.totalorder %s25, 0
        %s238 = scalar_select %p237, %s25, 0
        %p239 = scmp.lt.s32.totalorder %s24, 0
        %s240 = scalar_select %p239, %s24, 0
        %s241 = sadd.s32 %s240, %s238
        %s242 = smul.addr %s241, 4
        %s243 = scalar_lea.vmem %s1, %s242
        %p244 = pneg %p88
        %p245 = pneg %p85
        %p246 = scmp.lt.s32.totalorder %s24, 0
        %s247 = scalar_select %p246, %s24, 0
        %s248 = scalar_lea.vmem %s2, %s247
        %p249 = pneg %p114
        %p250 = pneg %p111
        %p251 = scmp.lt.s32.totalorder %s24, 0
        %s252 = scalar_select %p251, %s24, 0
        %s253 = scalar_lea.vmem %s3, %s252
        %p254 = pneg %p140
        %p255 = pneg %p137
        %p256 = pneg %p168
        %p257 = pneg %p165
        %s258 = sand.u32 %s155, 1
        %s259 = scalar_lea.sflag [#allocation4], %s258
        %s260 = sand.u32 %s155, 1
        %s261 = smul.addr %s260, 256
        %s262 = scalar_lea.vmem [#allocation3], %s261
        %p263 = scmp.lt.s32.totalorder %s23, 1
        %s264 = scalar_select %p263, %s23, 1
        %p265 = scmp.lt.s32.totalorder %s25, 0
        %s266 = scalar_select %p265, %s25, 0
        %s267 = smul.addr %s264, 54
        %s268 = sadd.s32 %s266, %s267
        %s269 = smul.addr %s268, 8
        %s270 = scalar_lea.vmem %s0, %s269
        %p271 = scmp.lt.s32.totalorder %s25, 0
        %s272 = scalar_select %p271, %s25, 0
        %p273 = scmp.lt.s32.totalorder %s24, 0
        %s274 = scalar_select %p273, %s24, 0
        %s275 = sadd.s32 %s274, %s272
        %s276 = smul.addr %s275, 4
        %s277 = scalar_lea.vmem %s1, %s276
        %p278 = scmp.lt.s32.totalorder %s24, 0
        %s279 = scalar_select %p278, %s24, 0
        %s280 = scalar_lea.vmem %s2, %s279
        %p281 = scmp.lt.s32.totalorder %s24, 0
        %s282 = scalar_select %p281, %s24, 0
        %s283 = scalar_lea.vmem %s3, %s282
        %p284 = scmp.eq.s32.totalorder %s25, 0
        // Predicated region
        $region37: #{tpu_custom_call.1} parent=35 // pred_check
          %p285 = pneg %p284
        $region38: #{tpu_custom_call.1} parent=35 // pred_check_branch
          %287 = sbr.rel (%p285) target = $region40
        $region39: #{tpu_custom_call.1} parent=35 // pred_region
          %288 = vst [vmem:[#allocation2] sm:$0xff] 0.0
          %289 = vst [vmem:[#allocation2 + $0x8] sm:$0xff] 0.0
          %290 = vst [vmem:[#allocation2 + $0x10] sm:$0xff] 0.0
          %291 = vst [vmem:[#allocation2 + $0x18] sm:$0xff] 0.0
          %292 = vst [vmem:[#allocation2 + $0x20] sm:$0xff] 0.0
          %293 = vst [vmem:[#allocation2 + $0x28] sm:$0xff] 0.0
          %294 = vst [vmem:[#allocation2 + $0x30] sm:$0xff] 0.0
          %295 = vst [vmem:[#allocation2 + $0x38] sm:$0xff] 0.0
          %296 = vst [vmem:[#allocation2 + $0x40] sm:$0xff] 0.0
          %297 = vst [vmem:[#allocation2 + $0x48] sm:$0xff] 0.0
          %298 = vst [vmem:[#allocation2 + $0x50] sm:$0xff] 0.0
          %299 = vst [vmem:[#allocation2 + $0x58] sm:$0xff] 0.0
          %300 = vst [vmem:[#allocation2 + $0x60] sm:$0xff] 0.0
          %301 = vst [vmem:[#allocation2 + $0x68] sm:$0xff] 0.0
          %302 = vst [vmem:[#allocation2 + $0x70] sm:$0xff] 0.0
          %303 = vst [vmem:[#allocation2 + $0x78] sm:$0xff] 0.0
          %304 = vst [vmem:[#allocation2 + $0x80] sm:$0xff] 0.0
          %305 = vst [vmem:[#allocation2 + $0x88] sm:$0xff] 0.0
          %306 = vst [vmem:[#allocation2 + $0x90] sm:$0xff] 0.0
          %307 = vst [vmem:[#allocation2 + $0x98] sm:$0xff] 0.0
          %308 = vst [vmem:[#allocation2 + $0xa0] sm:$0xff] 0.0
          %309 = vst [vmem:[#allocation2 + $0xa8] sm:$0xff] 0.0
          %310 = vst [vmem:[#allocation2 + $0xb0] sm:$0xff] 0.0
          %311 = vst [vmem:[#allocation2 + $0xb8] sm:$0xff] 0.0
          %312 = vst [vmem:[#allocation2 + $0xc0] sm:$0xff] 0.0
          %313 = vst [vmem:[#allocation2 + $0xc8] sm:$0xff] 0.0
          %314 = vst [vmem:[#allocation2 + $0xd0] sm:$0xff] 0.0
          %315 = vst [vmem:[#allocation2 + $0xd8] sm:$0xff] 0.0
          %316 = vst [vmem:[#allocation2 + $0xe0] sm:$0xff] 0.0
          %317 = vst [vmem:[#allocation2 + $0xe8] sm:$0xff] 0.0
          %318 = vst [vmem:[#allocation2 + $0xf0] sm:$0xff] 0.0
          %319 = vst [vmem:[#allocation2 + $0xf8] sm:$0xff] 0.0
        $region40: #{tpu_custom_call.1} parent=35 // pred_fallthru
          _
        %v320 = vld [vmem:[%s270] sm:$0xff]
        %v321 = vld [vmem:[%s270 + $0x8] sm:$0xff]
        %v322 = vld [vmem:[%s270 + $0x18] sm:$0xff]
        %v323 = vld [vmem:[%s270 + $0x20] sm:$0xff]
        %v324 = vld [vmem:[%s270 + $0x30] sm:$0xff]
        %v325 = vld [vmem:[%s270 + $0x38] sm:$0xff]
        %v326 = vld [vmem:[%s270 + $0x48] sm:$0xff]
        %v327 = vld [vmem:[%s270 + $0x50] sm:$0xff]
        %v328 = vld [vmem:[%s270 + $0x60] sm:$0xff]
        %v329 = vld [vmem:[%s270 + $0x68] sm:$0xff]
        %v330 = vld [vmem:[%s270 + $0x78] sm:$0xff]
        %v331 = vld [vmem:[%s270 + $0x80] sm:$0xff]
        %v332 = vld [vmem:[%s270 + $0x90] sm:$0xff]
        %v333 = vld [vmem:[%s270 + $0x98] sm:$0xff]
        %v334 = vld [vmem:[%s270 + $0xa8] sm:$0xff]
        %v335 = vld [vmem:[%s270 + $0xb0] sm:$0xff]
        %v336 = vld [vmem:[%s270 + $0xc0] sm:$0xff]
        %v337 = vld [vmem:[%s270 + $0xc8] sm:$0xff]
        %v338 = vld [vmem:[%s270 + $0xd8] sm:$0xff]
        %v339 = vld [vmem:[%s270 + $0xe0] sm:$0xff]
        %v340 = vld [vmem:[%s270 + $0xf0] sm:$0xff]
        %v341 = vld [vmem:[%s270 + $0xf8] sm:$0xff]
        %v342 = vld [vmem:[%s270 + $0x108] sm:$0xff]
        %v343 = vld [vmem:[%s270 + $0x110] sm:$0xff]
        %v344 = vld [vmem:[%s270 + $0x120] sm:$0xff]
        %v345 = vld [vmem:[%s270 + $0x128] sm:$0xff]
        %v346 = vld [vmem:[%s270 + $0x138] sm:$0xff]
        %v347 = vld [vmem:[%s270 + $0x140] sm:$0xff]
        %v348 = vld [vmem:[%s270 + $0x150] sm:$0xff]
        %v349 = vld [vmem:[%s270 + $0x158] sm:$0xff]
        %v350 = vld [vmem:[%s270 + $0x168] sm:$0xff]
        %v351 = vld [vmem:[%s270 + $0x170] sm:$0xff]
        %v352 = vld [vmem:[#allocation2] sm:$0xff]
        %v353 = vld [vmem:[#allocation2 + $0x8] sm:$0xff]
        %v354 = vld [vmem:[#allocation2 + $0x10] sm:$0xff]
        %v355 = vld [vmem:[#allocation2 + $0x18] sm:$0xff]
        %v356 = vld [vmem:[#allocation2 + $0x20] sm:$0xff]
        %v357 = vld [vmem:[#allocation2 + $0x28] sm:$0xff]
        %v358 = vld [vmem:[#allocation2 + $0x30] sm:$0xff]
        %v359 = vld [vmem:[#allocation2 + $0x38] sm:$0xff]
        %v360 = vld [vmem:[#allocation2 + $0x40] sm:$0xff]
        %v361 = vld [vmem:[#allocation2 + $0x48] sm:$0xff]
        %v362 = vld [vmem:[#allocation2 + $0x50] sm:$0xff]
        %v363 = vld [vmem:[#allocation2 + $0x58] sm:$0xff]
        %v364 = vld [vmem:[#allocation2 + $0x60] sm:$0xff]
        %v365 = vld [vmem:[#allocation2 + $0x68] sm:$0xff]
        %v366 = vld [vmem:[#allocation2 + $0x70] sm:$0xff]
        %v367 = vld [vmem:[#allocation2 + $0x78] sm:$0xff]
        %v368 = vld [vmem:[#allocation2 + $0x80] sm:$0xff]
        %v369 = vld [vmem:[#allocation2 + $0x88] sm:$0xff]
        %v370 = vld [vmem:[#allocation2 + $0x90] sm:$0xff]
        %v371 = vld [vmem:[#allocation2 + $0x98] sm:$0xff]
        %v372 = vld [vmem:[#allocation2 + $0xa0] sm:$0xff]
        %v373 = vld [vmem:[#allocation2 + $0xa8] sm:$0xff]
        %v374 = vld [vmem:[#allocation2 + $0xb0] sm:$0xff]
        %v375 = vld [vmem:[#allocation2 + $0xb8] sm:$0xff]
        %v376 = vld [vmem:[#allocation2 + $0xc0] sm:$0xff]
        %v377 = vld [vmem:[#allocation2 + $0xc8] sm:$0xff]
        %v378 = vld [vmem:[#allocation2 + $0xd0] sm:$0xff]
        %v379 = vld [vmem:[#allocation2 + $0xd8] sm:$0xff]
        %v380 = vld [vmem:[#allocation2 + $0xe0] sm:$0xff]
        %v381 = vld [vmem:[#allocation2 + $0xe8] sm:$0xff]
        %v382 = vld [vmem:[#allocation2 + $0xf0] sm:$0xff]
        %v383 = vld [vmem:[#allocation2 + $0xf8] sm:$0xff]
        %v384 = vld [vmem:[%s277] sm:$0xf]
        %vm385 = vcmask 31744
        %v387 = vsel %vm385, %v320, 0
        %v390 = vsel %vm385, %v321, 0
        %v393 = vsel %vm385, %v322, 0
        %v396 = vsel %vm385, %v323, 0
        %v399 = vsel %vm385, %v324, 0
        %v402 = vsel %vm385, %v325, 0
        %v405 = vsel %vm385, %v326, 0
        %v408 = vsel %vm385, %v327, 0
        %v411 = vsel %vm385, %v328, 0
        %v414 = vsel %vm385, %v329, 0
        %v417 = vsel %vm385, %v330, 0
        %v420 = vsel %vm385, %v331, 0
        %v423 = vsel %vm385, %v332, 0
        %v426 = vsel %vm385, %v333, 0
        %v429 = vsel %vm385, %v334, 0
        %v432 = vsel %vm385, %v335, 0
        %v435 = vsel %vm385, %v336, 0
        %v438 = vsel %vm385, %v337, 0
        %v441 = vsel %vm385, %v338, 0
        %v444 = vsel %vm385, %v339, 0
        %v447 = vsel %vm385, %v340, 0
        %v450 = vsel %vm385, %v341, 0
        %v453 = vsel %vm385, %v342, 0
        %v456 = vsel %vm385, %v343, 0
        %v459 = vsel %vm385, %v344, 0
        %v462 = vsel %vm385, %v345, 0
        %v465 = vsel %vm385, %v346, 0
        %v468 = vsel %vm385, %v347, 0
        %v471 = vsel %vm385, %v348, 0
        %v474 = vsel %vm385, %v349, 0
        %v477 = vsel %vm385, %v350, 0
        %v480 = vsel %vm385, %v351, 0
        %vm482 = vcmask 1043456
        %v484 = vsel %vm482, %v384, 0
        %486 = vmatprep.subr.mxu0 0.0
        %487 = vmatpush1.msra.mxu0 %v484
        %488 = vmatprep.subr.mxu0 0.0
        %489 = vmatpush1.msra.mxu0 0.0
        %490 = vmatprep.subr.mxu0 0.0
        %491 = vmatpush1.msra.mxu0 0.0
        %492 = vmatprep.subr.mxu0 0.0
        %493 = vmatpush1.msra.mxu0 0.0
        %494 = vmatprep.subr.mxu0 0.0
        %495 = vmatpush1.msra.mxu0 0.0
        %496 = vmatprep.subr.mxu0 0.0
        %497 = vmatpush1.msra.mxu0 0.0
        %498 = vmatprep.subr.mxu0 0.0
        %499 = vmatpush1.msra.mxu0 0.0
        %500 = vmatprep.subr.mxu0 0.0
        %501 = vmatpush1.msra.mxu0 0.0
        %502 = vmatprep.subr.mxu0 0.0
        %503 = vmatpush1.msra.mxu0 0.0
        %504 = vmatprep.subr.mxu0 0.0
        %505 = vmatpush1.msra.mxu0 0.0
        %506 = vmatprep.subr.mxu0 0.0
        %507 = vmatpush1.msra.mxu0 0.0
        %508 = vmatprep.subr.mxu0 0.0
        %509 = vmatpush1.msra.mxu0 0.0
        %510 = vmatprep.subr.mxu0 0.0
        %511 = vmatpush1.msra.mxu0 0.0
        %512 = vmatprep.subr.mxu0 0.0
        %513 = vmatpush1.msra.mxu0 0.0
        %514 = vmatprep.subr.mxu0 0.0
        %515 = vmatpush1.msra.mxu0 0.0
        %516 = vmatprep.subr.mxu0 0.0
        %517 = vmatpush1.msra.mxu0 0.0
        %518 = vmatprep.subr.mxu0 0.0
        %519 = vmatpush1.msra.mxu0 0.0
        %520 = vmatprep.subr.mxu0 0.0
        %521 = vmatpush1.msra.mxu0 0.0
        %522 = vmatprep.subr.mxu0 0.0
        %523 = vmatpush1.msra.mxu0 0.0
        %524 = vmatprep.subr.mxu0 0.0
        %525 = vmatpush1.msra.mxu0 0.0
        %526 = vmatprep.subr.mxu0 0.0
        %527 = vmatpush1.msra.mxu0 0.0
        %528 = vmatprep.subr.mxu0 0.0
        %529 = vmatpush1.msra.mxu0 0.0
        %530 = vmatprep.subr.mxu0 0.0
        %531 = vmatpush1.msra.mxu0 0.0
        %532 = vmatprep.subr.mxu0 0.0
        %533 = vmatpush1.msra.mxu0 0.0
        %534 = vmatprep.subr.mxu0 0.0
        %535 = vmatpush1.msra.mxu0 0.0
        %536 = vmatprep.subr.mxu0 0.0
        %537 = vmatpush1.msra.mxu0 0.0
        %538 = vmatprep.subr.mxu0 0.0
        %539 = vmatpush1.msra.mxu0 0.0
        %540 = vmatprep.subr.mxu0 0.0
        %541 = vmatpush1.msra.mxu0 0.0
        %542 = vmatprep.subr.mxu0 0.0
        %543 = vmatpush1.msra.mxu0 0.0
        %544 = vmatprep.subr.mxu0 0.0
        %545 = vmatpush1.msra.mxu0 0.0
        %546 = vmatprep.subr.mxu0 0.0
        %547 = vmatpush1.msra.mxu0 0.0
        %548 = vmatprep.subr.mxu0 0.0
        %549 = vmatpush1.msra.mxu0 0.0
        %550 = vmatprep.mubr.f32.mxu0 0.0
        %551 = vmatmul.mubr.f32.gmra.mrb[0].mxu0 %v387
        %v552 = vpop.f32.mrb[0].mxu0
        %v553 = vadd.f32 0.0, %v552
        %v554 = vpop.f32.mrb[0].mxu0
        %555 = vmatprep.mubr.f32.mxu0 0.0
        %556 = vmatmul.mubr.f32.gmra.mrb[0].mxu0 %v390
        %v557 = vpop.f32.mrb[0].mxu0
        %v558 = vadd.f32 0.0, %v557
        %v559 = vpop.f32.mrb[0].mxu0
        %560 = vmatprep.mubr.f32.mxu0 0.0
        %561 = vmatmul.mubr.f32.gmra.mrb[0].mxu0 %v393
        %v562 = vpop.f32.mrb[0].mxu0
        %v563 = vadd.f32 0.0, %v562
        %v564 = vpop.f32.mrb[0].mxu0
        %565 = vmatprep.mubr.f32.mxu0 0.0
        %566 = vmatmul.mubr.f32.gmra.mrb[0].mxu0 %v396
        %v567 = vpop.f32.mrb[0].mxu0
        %v568 = vadd.f32 0.0, %v567
        %v569 = vpop.f32.mrb[0].mxu0
        %570 = vmatprep.mubr.f32.mxu0 0.0
        %571 = vmatmul.mubr.f32.gmra.mrb[0].mxu0 %v399
        %v572 = vpop.f32.mrb[0].mxu0
        %v573 = vadd.f32 0.0, %v572
        %v574 = vpop.f32.mrb[0].mxu0
        %575 = vmatprep.mubr.f32.mxu0 0.0
        %576 = vmatmul.mubr.f32.gmra.mrb[0].mxu0 %v402
        %v577 = vpop.f32.mrb[0].mxu0
        %v578 = vadd.f32 0.0, %v577
        %v579 = vpop.f32.mrb[0].mxu0
        %580 = vmatprep.mubr.f32.mxu0 0.0
        %581 = vmatmul.mubr.f32.gmra.mrb[0].mxu0 %v405
        %v582 = vpop.f32.mrb[0].mxu0
        %v583 = vadd.f32 0.0, %v582
        %v584 = vpop.f32.mrb[0].mxu0
        %585 = vmatprep.mubr.f32.mxu0 0.0
        %586 = vmatmul.mubr.f32.gmra.mrb[0].mxu0 %v408
        %v587 = vpop.f32.mrb[0].mxu0
        %v588 = vadd.f32 0.0, %v587
        %v589 = vpop.f32.mrb[0].mxu0
        %590 = vmatprep.mubr.f32.mxu0 0.0
        %591 = vmatmul.mubr.f32.gmra.mrb[0].mxu0 %v411
        %v592 = vpop.f32.mrb[0].mxu0
        %v593 = vadd.f32 0.0, %v592
        %v594 = vpop.f32.mrb[0].mxu0
        %595 = vmatprep.mubr.f32.mxu0 0.0
        %596 = vmatmul.mubr.f32.gmra.mrb[0].mxu0 %v414
        %v597 = vpop.f32.mrb[0].mxu0
        %v598 = vadd.f32 0.0, %v597
        %v599 = vpop.f32.mrb[0].mxu0
        %600 = vmatprep.mubr.f32.mxu0 0.0
        %601 = vmatmul.mubr.f32.gmra.mrb[0].mxu0 %v417
        %v602 = vpop.f32.mrb[0].mxu0
        %v603 = vadd.f32 0.0, %v602
        %v604 = vpop.f32.mrb[0].mxu0
        %605 = vmatprep.mubr.f32.mxu0 0.0
        %606 = vmatmul.mubr.f32.gmra.mrb[0].mxu0 %v420
        %v607 = vpop.f32.mrb[0].mxu0
        %v608 = vadd.f32 0.0, %v607
        %v609 = vpop.f32.mrb[0].mxu0
        %610 = vmatprep.mubr.f32.mxu0 0.0
        %611 = vmatmul.mubr.f32.gmra.mrb[0].mxu0 %v423
        %v612 = vpop.f32.mrb[0].mxu0
        %v613 = vadd.f32 0.0, %v612
        %v614 = vpop.f32.mrb[0].mxu0
        %615 = vmatprep.mubr.f32.mxu0 0.0
        %616 = vmatmul.mubr.f32.gmra.mrb[0].mxu0 %v426
        %v617 = vpop.f32.mrb[0].mxu0
        %v618 = vadd.f32 0.0, %v617
        %v619 = vpop.f32.mrb[0].mxu0
        %620 = vmatprep.mubr.f32.mxu0 0.0
        %621 = vmatmul.mubr.f32.gmra.mrb[0].mxu0 %v429
        %v622 = vpop.f32.mrb[0].mxu0
        %v623 = vadd.f32 0.0, %v622
        %v624 = vpop.f32.mrb[0].mxu0
        %625 = vmatprep.mubr.f32.mxu0 0.0
        %626 = vmatmul.mubr.f32.gmra.mrb[0].mxu0 %v432
        %v627 = vpop.f32.mrb[0].mxu0
        %v628 = vadd.f32 0.0, %v627
        %v629 = vpop.f32.mrb[0].mxu0
        %630 = vmatprep.mubr.f32.mxu0 0.0
        %631 = vmatmul.mubr.f32.gmra.mrb[0].mxu0 %v435
        %v632 = vpop.f32.mrb[0].mxu0
        %v633 = vadd.f32 0.0, %v632
        %v634 = vpop.f32.mrb[0].mxu0
        %635 = vmatprep.mubr.f32.mxu0 0.0
        %636 = vmatmul.mubr.f32.gmra.mrb[0].mxu0 %v438
        %v637 = vpop.f32.mrb[0].mxu0
        %v638 = vadd.f32 0.0, %v637
        %v639 = vpop.f32.mrb[0].mxu0
        %640 = vmatprep.mubr.f32.mxu0 0.0
        %641 = vmatmul.mubr.f32.gmra.mrb[0].mxu0 %v441
        %v642 = vpop.f32.mrb[0].mxu0
        %v643 = vadd.f32 0.0, %v642
        %v644 = vpop.f32.mrb[0].mxu0
        %645 = vmatprep.mubr.f32.mxu0 0.0
        %646 = vmatmul.mubr.f32.gmra.mrb[0].mxu0 %v444
        %v647 = vpop.f32.mrb[0].mxu0
        %v648 = vadd.f32 0.0, %v647
        %v649 = vpop.f32.mrb[0].mxu0
        %650 = vmatprep.mubr.f32.mxu0 0.0
        %651 = vmatmul.mubr.f32.gmra.mrb[0].mxu0 %v447
        %v652 = vpop.f32.mrb[0].mxu0
        %v653 = vadd.f32 0.0, %v652
        %v654 = vpop.f32.mrb[0].mxu0
        %655 = vmatprep.mubr.f32.mxu0 0.0
        %656 = vmatmul.mubr.f32.gmra.mrb[0].mxu0 %v450
        %v657 = vpop.f32.mrb[0].mxu0
        %v658 = vadd.f32 0.0, %v657
        %v659 = vpop.f32.mrb[0].mxu0
        %660 = vmatprep.mubr.f32.mxu0 0.0
        %661 = vmatmul.mubr.f32.gmra.mrb[0].mxu0 %v453
        %v662 = vpop.f32.mrb[0].mxu0
        %v663 = vadd.f32 0.0, %v662
        %v664 = vpop.f32.mrb[0].mxu0
        %665 = vmatprep.mubr.f32.mxu0 0.0
        %666 = vmatmul.mubr.f32.gmra.mrb[0].mxu0 %v456
        %v667 = vpop.f32.mrb[0].mxu0
        %v668 = vadd.f32 0.0, %v667
        %v669 = vpop.f32.mrb[0].mxu0
        %670 = vmatprep.mubr.f32.mxu0 0.0
        %671 = vmatmul.mubr.f32.gmra.mrb[0].mxu0 %v459
        %v672 = vpop.f32.mrb[0].mxu0
        %v673 = vadd.f32 0.0, %v672
        %v674 = vpop.f32.mrb[0].mxu0
        %675 = vmatprep.mubr.f32.mxu0 0.0
        %676 = vmatmul.mubr.f32.gmra.mrb[0].mxu0 %v462
        %v677 = vpop.f32.mrb[0].mxu0
        %v678 = vadd.f32 0.0, %v677
        %v679 = vpop.f32.mrb[0].mxu0
        %680 = vmatprep.mubr.f32.mxu0 0.0
        %681 = vmatmul.mubr.f32.gmra.mrb[0].mxu0 %v465
        %v682 = vpop.f32.mrb[0].mxu0
        %v683 = vadd.f32 0.0, %v682
        %v684 = vpop.f32.mrb[0].mxu0
        %685 = vmatprep.mubr.f32.mxu0 0.0
        %686 = vmatmul.mubr.f32.gmra.mrb[0].mxu0 %v468
        %v687 = vpop.f32.mrb[0].mxu0
        %v688 = vadd.f32 0.0, %v687
        %v689 = vpop.f32.mrb[0].mxu0
        %690 = vmatprep.mubr.f32.mxu0 0.0
        %691 = vmatmul.mubr.f32.gmra.mrb[0].mxu0 %v471
        %v692 = vpop.f32.mrb[0].mxu0
        %v693 = vadd.f32 0.0, %v692
        %v694 = vpop.f32.mrb[0].mxu0
        %695 = vmatprep.mubr.f32.mxu0 0.0
        %696 = vmatmul.mubr.f32.gmra.mrb[0].mxu0 %v474
        %v697 = vpop.f32.mrb[0].mxu0
        %v698 = vadd.f32 0.0, %v697
        %v699 = vpop.f32.mrb[0].mxu0
        %700 = vmatprep.mubr.f32.mxu0 0.0
        %701 = vmatmul.mubr.f32.gmra.mrb[0].mxu0 %v477
        %v702 = vpop.f32.mrb[0].mxu0
        %v703 = vadd.f32 0.0, %v702
        %v704 = vpop.f32.mrb[0].mxu0
        %705 = vmatprep.mubr.f32.mxu0 0.0
        %706 = vmatmul.mubr.f32.gmra.mrb[0].mxu0 %v480
        %v707 = vpop.f32.mrb[0].mxu0
        %v708 = vadd.f32 0.0, %v707
        %v709 = vpop.f32.mrb[0].mxu0
        %710 = vdwg.mxu0
        %v711 = vadd.f32 %v352, %v553
        %v712 = vadd.f32 %v353, %v558
        %v713 = vadd.f32 %v354, %v563
        %v714 = vadd.f32 %v355, %v568
        %v715 = vadd.f32 %v356, %v573
        %v716 = vadd.f32 %v357, %v578
        %v717 = vadd.f32 %v358, %v583
        %v718 = vadd.f32 %v359, %v588
        %v719 = vadd.f32 %v360, %v593
        %v720 = vadd.f32 %v361, %v598
        %v721 = vadd.f32 %v362, %v603
        %v722 = vadd.f32 %v363, %v608
        %v723 = vadd.f32 %v364, %v613
        %v724 = vadd.f32 %v365, %v618
        %v725 = vadd.f32 %v366, %v623
        %v726 = vadd.f32 %v367, %v628
        %v727 = vadd.f32 %v368, %v633
        %v728 = vadd.f32 %v369, %v638
        %v729 = vadd.f32 %v370, %v643
        %v730 = vadd.f32 %v371, %v648
        %v731 = vadd.f32 %v372, %v653
        %v732 = vadd.f32 %v373, %v658
        %v733 = vadd.f32 %v374, %v663
        %v734 = vadd.f32 %v375, %v668
        %v735 = vadd.f32 %v376, %v673
        %v736 = vadd.f32 %v377, %v678
        %v737 = vadd.f32 %v378, %v683
        %v738 = vadd.f32 %v379, %v688
        %v739 = vadd.f32 %v380, %v693
        %v740 = vadd.f32 %v381, %v698
        %v741 = vadd.f32 %v382, %v703
        %v742 = vadd.f32 %v383, %v708
        %743 = vst [vmem:[#allocation2] sm:$0xff] %v711
        %744 = vst [vmem:[#allocation2 + $0x8] sm:$0xff] %v712
        %745 = vst [vmem:[#allocation2 + $0x10] sm:$0xff] %v713
        %746 = vst [vmem:[#allocation2 + $0x18] sm:$0xff] %v714
        %747 = vst [vmem:[#allocation2 + $0x20] sm:$0xff] %v715
        %748 = vst [vmem:[#allocation2 + $0x28] sm:$0xff] %v716
        %749 = vst [vmem:[#allocation2 + $0x30] sm:$0xff] %v717
        %750 = vst [vmem:[#allocation2 + $0x38] sm:$0xff] %v718
        %751 = vst [vmem:[#allocation2 + $0x40] sm:$0xff] %v719
        %752 = vst [vmem:[#allocation2 + $0x48] sm:$0xff] %v720
        %753 = vst [vmem:[#allocation2 + $0x50] sm:$0xff] %v721
        %754 = vst [vmem:[#allocation2 + $0x58] sm:$0xff] %v722
        %755 = vst [vmem:[#allocation2 + $0x60] sm:$0xff] %v723
        %756 = vst [vmem:[#allocation2 + $0x68] sm:$0xff] %v724
        %757 = vst [vmem:[#allocation2 + $0x70] sm:$0xff] %v725
        %758 = vst [vmem:[#allocation2 + $0x78] sm:$0xff] %v726
        %759 = vst [vmem:[#allocation2 + $0x80] sm:$0xff] %v727
        %760 = vst [vmem:[#allocation2 + $0x88] sm:$0xff] %v728
        %761 = vst [vmem:[#allocation2 + $0x90] sm:$0xff] %v729
        %762 = vst [vmem:[#allocation2 + $0x98] sm:$0xff] %v730
        %763 = vst [vmem:[#allocation2 + $0xa0] sm:$0xff] %v731
        %764 = vst [vmem:[#allocation2 + $0xa8] sm:$0xff] %v732
        %765 = vst [vmem:[#allocation2 + $0xb0] sm:$0xff] %v733
        %766 = vst [vmem:[#allocation2 + $0xb8] sm:$0xff] %v734
        %767 = vst [vmem:[#allocation2 + $0xc0] sm:$0xff] %v735
        %768 = vst [vmem:[#allocation2 + $0xc8] sm:$0xff] %v736
        %769 = vst [vmem:[#allocation2 + $0xd0] sm:$0xff] %v737
        %770 = vst [vmem:[#allocation2 + $0xd8] sm:$0xff] %v738
        %771 = vst [vmem:[#allocation2 + $0xe0] sm:$0xff] %v739
        %772 = vst [vmem:[#allocation2 + $0xe8] sm:$0xff] %v740
        %773 = vst [vmem:[#allocation2 + $0xf0] sm:$0xff] %v741
        %774 = vst [vmem:[#allocation2 + $0xf8] sm:$0xff] %v742
        %v775 = vld [vmem:[%s270 + $0x1] sm:$0xff]
        %v776 = vld [vmem:[%s270 + $0x9] sm:$0xff]
        %v777 = vld [vmem:[%s270 + $0x19] sm:$0xff]
        %v778 = vld [vmem:[%s270 + $0x21] sm:$0xff]
        %v779 = vld [vmem:[%s270 + $0x31] sm:$0xff]
        %v780 = vld [vmem:[%s270 + $0x39] sm:$0xff]
        %v781 = vld [vmem:[%s270 + $0x49] sm:$0xff]
        %v782 = vld [vmem:[%s270 + $0x51] sm:$0xff]
        %v783 = vld [vmem:[%s270 + $0x61] sm:$0xff]
        %v784 = vld [vmem:[%s270 + $0x69] sm:$0xff]
        %v785 = vld [vmem:[%s270 + $0x79] sm:$0xff]
        %v786 = vld [vmem:[%s270 + $0x81] sm:$0xff]
        %v787 = vld [vmem:[%s270 + $0x91] sm:$0xff]
        %v788 = vld [vmem:[%s270 + $0x99] sm:$0xff]
        %v789 = vld [vmem:[%s270 + $0xa9] sm:$0xff]
        %v790 = vld [vmem:[%s270 + $0xb1] sm:$0xff]
        %v791 = vld [vmem:[%s270 + $0xc1] sm:$0xff]
        %v792 = vld [vmem:[%s270 + $0xc9] sm:$0xff]
        %v793 = vld [vmem:[%s270 + $0xd9] sm:$0xff]
        %v794 = vld [vmem:[%s270 + $0xe1] sm:$0xff]
        %v795 = vld [vmem:[%s270 + $0xf1] sm:$0xff]
        %v796 = vld [vmem:[%s270 + $0xf9] sm:$0xff]
        %v797 = vld [vmem:[%s270 + $0x109] sm:$0xff]
        %v798 = vld [vmem:[%s270 + $0x111] sm:$0xff]
        %v799 = vld [vmem:[%s270 + $0x121] sm:$0xff]
        %v800 = vld [vmem:[%s270 + $0x129] sm:$0xff]
        %v801 = vld [vmem:[%s270 + $0x139] sm:$0xff]
        %v802 = vld [vmem:[%s270 + $0x141] sm:$0xff]
        %v803 = vld [vmem:[%s270 + $0x151] sm:$0xff]
        %v804 = vld [vmem:[%s270 + $0x159] sm:$0xff]
        %v805 = vld [vmem:[%s270 + $0x169] sm:$0xff]
        %v806 = vld [vmem:[%s270 + $0x171] sm:$0xff]
        %v807 = vld [vmem:[#allocation2] sm:$0xff]
        %v808 = vld [vmem:[#allocation2 + $0x8] sm:$0xff]
        %v809 = vld [vmem:[#allocation2 + $0x10] sm:$0xff]
        %v810 = vld [vmem:[#allocation2 + $0x18] sm:$0xff]
        %v811 = vld [vmem:[#allocation2 + $0x20] sm:$0xff]
        %v812 = vld [vmem:[#allocation2 + $0x28] sm:$0xff]
        %v813 = vld [vmem:[#allocation2 + $0x30] sm:$0xff]
        %v814 = vld [vmem:[#allocation2 + $0x38] sm:$0xff]
        %v815 = vld [vmem:[#allocation2 + $0x40] sm:$0xff]
        %v816 = vld [vmem:[#allocation2 + $0x48] sm:$0xff]
        %v817 = vld [vmem:[#allocation2 + $0x50] sm:$0xff]
        %v818 = vld [vmem:[#allocation2 + $0x58] sm:$0xff]
        %v819 = vld [vmem:[#allocation2 + $0x60] sm:$0xff]
        %v820 = vld [vmem:[#allocation2 + $0x68] sm:$0xff]
        %v821 = vld [vmem:[#allocation2 + $0x70] sm:$0xff]
        %v822 = vld [vmem:[#allocation2 + $0x78] sm:$0xff]
        %v823 = vld [vmem:[#allocation2 + $0x80] sm:$0xff]
        %v824 = vld [vmem:[#allocation2 + $0x88] sm:$0xff]
        %v825 = vld [vmem:[#allocation2 + $0x90] sm:$0xff]
        %v826 = vld [vmem:[#allocation2 + $0x98] sm:$0xff]
        %v827 = vld [vmem:[#allocation2 + $0xa0] sm:$0xff]
        %v828 = vld [vmem:[#allocation2 + $0xa8] sm:$0xff]
        %v829 = vld [vmem:[#allocation2 + $0xb0] sm:$0xff]
        %v830 = vld [vmem:[#allocation2 + $0xb8] sm:$0xff]
        %v831 = vld [vmem:[#allocation2 + $0xc0] sm:$0xff]
        %v832 = vld [vmem:[#allocation2 + $0xc8] sm:$0xff]
        %v833 = vld [vmem:[#allocation2 + $0xd0] sm:$0xff]
        %v834 = vld [vmem:[#allocation2 + $0xd8] sm:$0xff]
        %v835 = vld [vmem:[#allocation2 + $0xe0] sm:$0xff]
        %v836 = vld [vmem:[#allocation2 + $0xe8] sm:$0xff]
        %v837 = vld [vmem:[#allocation2 + $0xf0] sm:$0xff]
        %v838 = vld [vmem:[#allocation2 + $0xf8] sm:$0xff]
        %s839 = scalar_lea.vmem %s277, 4
        %v840 = vld [vmem:[%s839] sm:$0xf]
        %v842 = vsel %vm385, %v775, 0
        %v845 = vsel %vm385, %v776, 0
        %v848 = vsel %vm385, %v777, 0
        %v851 = vsel %vm385, %v778, 0
        %v854 = vsel %vm385, %v779, 0
        %v857 = vsel %vm385, %v780, 0
        %v860 = vsel %vm385, %v781, 0
        %v863 = vsel %vm385, %v782, 0
        %v866 = vsel %vm385, %v783, 0
        %v869 = vsel %vm385, %v784, 0
        %v872 = vsel %vm385, %v785, 0
        %v875 = vsel %vm385, %v786, 0
        %v878 = vsel %vm385, %v787, 0
        %v881 = vsel %vm385, %v788, 0
        %v884 = vsel %vm385, %v789, 0
        %v887 = vsel %vm385, %v790, 0
        %v890 = vsel %vm385, %v791, 0
        %v893 = vsel %vm385, %v792, 0
        %v896 = vsel %vm385, %v793, 0
        %v899 = vsel %vm385, %v794, 0
        %v902 = vsel %vm385, %v795, 0
        %v905 = vsel %vm385, %v796, 0
        %v908 = vsel %vm385, %v797, 0
        %v911 = vsel %vm385, %v798, 0
        %v914 = vsel %vm385, %v799, 0
        %v917 = vsel %vm385, %v800, 0
        %v920 = vsel %vm385, %v801, 0
        %v923 = vsel %vm385, %v802, 0
        %v926 = vsel %vm385, %v803, 0
        %v929 = vsel %vm385, %v804, 0
        %v932 = vsel %vm385, %v805, 0
        %v935 = vsel %vm385, %v806, 0
        %v938 = vsel %vm482, %v840, 0
        %940 = vmatprep.subr.mxu0 0.0
        %941 = vmatpush1.msra.mxu0 %v938
        %942 = vmatprep.subr.mxu0 0.0
        %943 = vmatpush1.msra.mxu0 0.0
        %944 = vmatprep.subr.mxu0 0.0
        %945 = vmatpush1.msra.mxu0 0.0
        %946 = vmatprep.subr.mxu0 0.0
        %947 = vmatpush1.msra.mxu0 0.0
        %948 = vmatprep.subr.mxu0 0.0
        %949 = vmatpush1.msra.mxu0 0.0
        %950 = vmatprep.subr.mxu0 0.0
        %951 = vmatpush1.msra.mxu0 0.0
        %952 = vmatprep.subr.mxu0 0.0
        %953 = vmatpush1.msra.mxu0 0.0
        %954 = vmatprep.subr.mxu0 0.0
        %955 = vmatpush1.msra.mxu0 0.0
        %956 = vmatprep.subr.mxu0 0.0
        %957 = vmatpush1.msra.mxu0 0.0
        %958 = vmatprep.subr.mxu0 0.0
        %959 = vmatpush1.msra.mxu0 0.0
        %960 = vmatprep.subr.mxu0 0.0
        %961 = vmatpush1.msra.mxu0 0.0
        %962 = vmatprep.subr.mxu0 0.0
        %963 = vmatpush1.msra.mxu0 0.0
        %964 = vmatprep.subr.mxu0 0.0
        %965 = vmatpush1.msra.mxu0 0.0
        %966 = vmatprep.subr.mxu0 0.0
        %967 = vmatpush1.msra.mxu0 0.0
        %968 = vmatprep.subr.mxu0 0.0
        %969 = vmatpush1.msra.mxu0 0.0
        %970 = vmatprep.subr.mxu0 0.0
        %971 = vmatpush1.msra.mxu0 0.0
        %972 = vmatprep.subr.mxu0 0.0
        %973 = vmatpush1.msra.mxu0 0.0
        %974 = vmatprep.subr.mxu0 0.0
        %975 = vmatpush1.msra.mxu0 0.0
        %976 = vmatprep.subr.mxu0 0.0
        %977 = vmatpush1.msra.mxu0 0.0
        %978 = vmatprep.subr.mxu0 0.0
        %979 = vmatpush1.msra.mxu0 0.0
        %980 = vmatprep.subr.mxu0 0.0
        %981 = vmatpush1.msra.mxu0 0.0
        %982 = vmatprep.subr.mxu0 0.0
        %983 = vmatpush1.msra.mxu0 0.0
        %984 = vmatprep.subr.mxu0 0.0
        %985 = vmatpush1.msra.mxu0 0.0
        %986 = vmatprep.subr.mxu0 0.0
        %987 = vmatpush1.msra.mxu0 0.0
        %988 = vmatprep.subr.mxu0 0.0
        %989 = vmatpush1.msra.mxu0 0.0
        %990 = vmatprep.subr.mxu0 0.0
        %991 = vmatpush1.msra.mxu0 0.0
        %992 = vmatprep.subr.mxu0 0.0
        %993 = vmatpush1.msra.mxu0 0.0
        %994 = vmatprep.subr.mxu0 0.0
        %995 = vmatpush1.msra.mxu0 0.0
        %996 = vmatprep.subr.mxu0 0.0
        %997 = vmatpush1.msra.mxu0 0.0
        %998 = vmatprep.subr.mxu0 0.0
        %999 = vmatpush1.msra.mxu0 0.0
        %1000 = vmatprep.subr.mxu0 0.0
        %1001 = vmatpush1.msra.mxu0 0.0
        %1002 = vmatprep.subr.mxu0 0.0
        %1003 = vmatpush1.msra.mxu0 0.0
        %1004 = vmatprep.mubr.f32.mxu0 0.0
        %1005 = vmatmul.mubr.f32.gmra.mrb[0].mxu0 %v842
        %v1006 = vpop.f32.mrb[0].mxu0
        %v1007 = vadd.f32 0.0, %v1006
        %v1008 = vpop.f32.mrb[0].mxu0
        %1009 = vmatprep.mubr.f32.mxu0 0.0
        %1010 = vmatmul.mubr.f32.gmra.mrb[0].mxu0 %v845
        %v1011 = vpop.f32.mrb[0].mxu0
        %v1012 = vadd.f32 0.0, %v1011
        %v1013 = vpop.f32.mrb[0].mxu0
        %1014 = vmatprep.mubr.f32.mxu0 0.0
        %1015 = vmatmul.mubr.f32.gmra.mrb[0].mxu0 %v848
        %v1016 = vpop.f32.mrb[0].mxu0
        %v1017 = vadd.f32 0.0, %v1016
        %v1018 = vpop.f32.mrb[0].mxu0
        %1019 = vmatprep.mubr.f32.mxu0 0.0
        %1020 = vmatmul.mubr.f32.gmra.mrb[0].mxu0 %v851
        %v1021 = vpop.f32.mrb[0].mxu0
        %v1022 = vadd.f32 0.0, %v1021
        %v1023 = vpop.f32.mrb[0].mxu0
        %1024 = vmatprep.mubr.f32.mxu0 0.0
        %1025 = vmatmul.mubr.f32.gmra.mrb[0].mxu0 %v854
        %v1026 = vpop.f32.mrb[0].mxu0
        %v1027 = vadd.f32 0.0, %v1026
        %v1028 = vpop.f32.mrb[0].mxu0
        %1029 = vmatprep.mubr.f32.mxu0 0.0
        %1030 = vmatmul.mubr.f32.gmra.mrb[0].mxu0 %v857
        %v1031 = vpop.f32.mrb[0].mxu0
        %v1032 = vadd.f32 0.0, %v1031
        %v1033 = vpop.f32.mrb[0].mxu0
        %1034 = vmatprep.mubr.f32.mxu0 0.0
        %1035 = vmatmul.mubr.f32.gmra.mrb[0].mxu0 %v860
        %v1036 = vpop.f32.mrb[0].mxu0
        %v1037 = vadd.f32 0.0, %v1036
        %v1038 = vpop.f32.mrb[0].mxu0
        %1039 = vmatprep.mubr.f32.mxu0 0.0
        %1040 = vmatmul.mubr.f32.gmra.mrb[0].mxu0 %v863
        %v1041 = vpop.f32.mrb[0].mxu0
        %v1042 = vadd.f32 0.0, %v1041
        %v1043 = vpop.f32.mrb[0].mxu0
        %1044 = vmatprep.mubr.f32.mxu0 0.0
        %1045 = vmatmul.mubr.f32.gmra.mrb[0].mxu0 %v866
        %v1046 = vpop.f32.mrb[0].mxu0
        %v1047 = vadd.f32 0.0, %v1046
        %v1048 = vpop.f32.mrb[0].mxu0
        %1049 = vmatprep.mubr.f32.mxu0 0.0
        %1050 = vmatmul.mubr.f32.gmra.mrb[0].mxu0 %v869
        %v1051 = vpop.f32.mrb[0].mxu0
        %v1052 = vadd.f32 0.0, %v1051
        %v1053 = vpop.f32.mrb[0].mxu0
        %1054 = vmatprep.mubr.f32.mxu0 0.0
        %1055 = vmatmul.mubr.f32.gmra.mrb[0].mxu0 %v872
        %v1056 = vpop.f32.mrb[0].mxu0
        %v1057 = vadd.f32 0.0, %v1056
        %v1058 = vpop.f32.mrb[0].mxu0
        %1059 = vmatprep.mubr.f32.mxu0 0.0
        %1060 = vmatmul.mubr.f32.gmra.mrb[0].mxu0 %v875
        %v1061 = vpop.f32.mrb[0].mxu0
        %v1062 = vadd.f32 0.0, %v1061
        %v1063 = vpop.f32.mrb[0].mxu0
        %1064 = vmatprep.mubr.f32.mxu0 0.0
        %1065 = vmatmul.mubr.f32.gmra.mrb[0].mxu0 %v878
        %v1066 = vpop.f32.mrb[0].mxu0
        %v1067 = vadd.f32 0.0, %v1066
        %v1068 = vpop.f32.mrb[0].mxu0
        %1069 = vmatprep.mubr.f32.mxu0 0.0
        %1070 = vmatmul.mubr.f32.gmra.mrb[0].mxu0 %v881
        %v1071 = vpop.f32.mrb[0].mxu0
        %v1072 = vadd.f32 0.0, %v1071
        %v1073 = vpop.f32.mrb[0].mxu0
        %1074 = vmatprep.mubr.f32.mxu0 0.0
        %1075 = vmatmul.mubr.f32.gmra.mrb[0].mxu0 %v884
        %v1076 = vpop.f32.mrb[0].mxu0
        %v1077 = vadd.f32 0.0, %v1076
        %v1078 = vpop.f32.mrb[0].mxu0
        %1079 = vmatprep.mubr.f32.mxu0 0.0
        %1080 = vmatmul.mubr.f32.gmra.mrb[0].mxu0 %v887
        %v1081 = vpop.f32.mrb[0].mxu0
        %v1082 = vadd.f32 0.0, %v1081
        %v1083 = vpop.f32.mrb[0].mxu0
        %1084 = vmatprep.mubr.f32.mxu0 0.0
        %1085 = vmatmul.mubr.f32.gmra.mrb[0].mxu0 %v890
        %v1086 = vpop.f32.mrb[0].mxu0
        %v1087 = vadd.f32 0.0, %v1086
        %v1088 = vpop.f32.mrb[0].mxu0
        %1089 = vmatprep.mubr.f32.mxu0 0.0
        %1090 = vmatmul.mubr.f32.gmra.mrb[0].mxu0 %v893
        %v1091 = vpop.f32.mrb[0].mxu0
        %v1092 = vadd.f32 0.0, %v1091
        %v1093 = vpop.f32.mrb[0].mxu0
        %1094 = vmatprep.mubr.f32.mxu0 0.0
        %1095 = vmatmul.mubr.f32.gmra.mrb[0].mxu0 %v896
        %v1096 = vpop.f32.mrb[0].mxu0
        %v1097 = vadd.f32 0.0, %v1096
        %v1098 = vpop.f32.mrb[0].mxu0
        %1099 = vmatprep.mubr.f32.mxu0 0.0
        %1100 = vmatmul.mubr.f32.gmra.mrb[0].mxu0 %v899
        %v1101 = vpop.f32.mrb[0].mxu0
        %v1102 = vadd.f32 0.0, %v1101
        %v1103 = vpop.f32.mrb[0].mxu0
        %1104 = vmatprep.mubr.f32.mxu0 0.0
        %1105 = vmatmul.mubr.f32.gmra.mrb[0].mxu0 %v902
        %v1106 = vpop.f32.mrb[0].mxu0
        %v1107 = vadd.f32 0.0, %v1106
        %v1108 = vpop.f32.mrb[0].mxu0
        %1109 = vmatprep.mubr.f32.mxu0 0.0
        %1110 = vmatmul.mubr.f32.gmra.mrb[0].mxu0 %v905
        %v1111 = vpop.f32.mrb[0].mxu0
        %v1112 = vadd.f32 0.0, %v1111
        %v1113 = vpop.f32.mrb[0].mxu0
        %1114 = vmatprep.mubr.f32.mxu0 0.0
        %1115 = vmatmul.mubr.f32.gmra.mrb[0].mxu0 %v908
        %v1116 = vpop.f32.mrb[0].mxu0
        %v1117 = vadd.f32 0.0, %v1116
        %v1118 = vpop.f32.mrb[0].mxu0
        %1119 = vmatprep.mubr.f32.mxu0 0.0
        %1120 = vmatmul.mubr.f32.gmra.mrb[0].mxu0 %v911
        %v1121 = vpop.f32.mrb[0].mxu0
        %v1122 = vadd.f32 0.0, %v1121
        %v1123 = vpop.f32.mrb[0].mxu0
        %1124 = vmatprep.mubr.f32.mxu0 0.0
        %1125 = vmatmul.mubr.f32.gmra.mrb[0].mxu0 %v914
        %v1126 = vpop.f32.mrb[0].mxu0
        %v1127 = vadd.f32 0.0, %v1126
        %v1128 = vpop.f32.mrb[0].mxu0
        %1129 = vmatprep.mubr.f32.mxu0 0.0
        %1130 = vmatmul.mubr.f32.gmra.mrb[0].mxu0 %v917
        %v1131 = vpop.f32.mrb[0].mxu0
        %v1132 = vadd.f32 0.0, %v1131
        %v1133 = vpop.f32.mrb[0].mxu0
        %1134 = vmatprep.mubr.f32.mxu0 0.0
        %1135 = vmatmul.mubr.f32.gmra.mrb[0].mxu0 %v920
        %v1136 = vpop.f32.mrb[0].mxu0
        %v1137 = vadd.f32 0.0, %v1136
        %v1138 = vpop.f32.mrb[0].mxu0
        %1139 = vmatprep.mubr.f32.mxu0 0.0
        %1140 = vmatmul.mubr.f32.gmra.mrb[0].mxu0 %v923
        %v1141 = vpop.f32.mrb[0].mxu0
        %v1142 = vadd.f32 0.0, %v1141
        %v1143 = vpop.f32.mrb[0].mxu0
        %1144 = vmatprep.mubr.f32.mxu0 0.0
        %1145 = vmatmul.mubr.f32.gmra.mrb[0].mxu0 %v926
        %v1146 = vpop.f32.mrb[0].mxu0
        %v1147 = vadd.f32 0.0, %v1146
        %v1148 = vpop.f32.mrb[0].mxu0
        %1149 = vmatprep.mubr.f32.mxu0 0.0
        %1150 = vmatmul.mubr.f32.gmra.mrb[0].mxu0 %v929
        %v1151 = vpop.f32.mrb[0].mxu0
        %v1152 = vadd.f32 0.0, %v1151
        %v1153 = vpop.f32.mrb[0].mxu0
        %1154 = vmatprep.mubr.f32.mxu0 0.0
        %1155 = vmatmul.mubr.f32.gmra.mrb[0].mxu0 %v932
        %v1156 = vpop.f32.mrb[0].mxu0
        %v1157 = vadd.f32 0.0, %v1156
        %v1158 = vpop.f32.mrb[0].mxu0
        %1159 = vmatprep.mubr.f32.mxu0 0.0
        %1160 = vmatmul.mubr.f32.gmra.mrb[0].mxu0 %v935
        %v1161 = vpop.f32.mrb[0].mxu0
        %v1162 = vadd.f32 0.0, %v1161
        %v1163 = vpop.f32.mrb[0].mxu0
        %1164 = vdwg.mxu0
        %v1165 = vadd.f32 %v807, %v1007
        %v1166 = vadd.f32 %v808, %v1012
        %v1167 = vadd.f32 %v809, %v1017
        %v1168 = vadd.f32 %v810, %v1022
        %v1169 = vadd.f32 %v811, %v1027
        %v1170 = vadd.f32 %v812, %v1032
        %v1171 = vadd.f32 %v813, %v1037
        %v1172 = vadd.f32 %v814, %v1042
        %v1173 = vadd.f32 %v815, %v1047
        %v1174 = vadd.f32 %v816, %v1052
        %v1175 = vadd.f32 %v817, %v1057
        %v1176 = vadd.f32 %v818, %v1062
        %v1177 = vadd.f32 %v819, %v1067
        %v1178 = vadd.f32 %v820, %v1072
        %v1179 = vadd.f32 %v821, %v1077
        %v1180 = vadd.f32 %v822, %v1082
        %v1181 = vadd.f32 %v823, %v1087
        %v1182 = vadd.f32 %v824, %v1092
        %v1183 = vadd.f32 %v825, %v1097
        %v1184 = vadd.f32 %v826, %v1102
        %v1185 = vadd.f32 %v827, %v1107
        %v1186 = vadd.f32 %v828, %v1112
        %v1187 = vadd.f32 %v829, %v1117
        %v1188 = vadd.f32 %v830, %v1122
        %v1189 = vadd.f32 %v831, %v1127
        %v1190 = vadd.f32 %v832, %v1132
        %v1191 = vadd.f32 %v833, %v1137
        %v1192 = vadd.f32 %v834, %v1142
        %v1193 = vadd.f32 %v835, %v1147
        %v1194 = vadd.f32 %v836, %v1152
        %v1195 = vadd.f32 %v837, %v1157
        %v1196 = vadd.f32 %v838, %v1162
        %1197 = vst [vmem:[#allocation2] sm:$0xff] %v1165
        %1198 = vst [vmem:[#allocation2 + $0x8] sm:$0xff] %v1166
        %1199 = vst [vmem:[#allocation2 + $0x10] sm:$0xff] %v1167
        %1200 = vst [vmem:[#allocation2 + $0x18] sm:$0xff] %v1168
        %1201 = vst [vmem:[#allocation2 + $0x20] sm:$0xff] %v1169
        %1202 = vst [vmem:[#allocation2 + $0x28] sm:$0xff] %v1170
        %1203 = vst [vmem:[#allocation2 + $0x30] sm:$0xff] %v1171
        %1204 = vst [vmem:[#allocation2 + $0x38] sm:$0xff] %v1172
        %1205 = vst [vmem:[#allocation2 + $0x40] sm:$0xff] %v1173
        %1206 = vst [vmem:[#allocation2 + $0x48] sm:$0xff] %v1174
        %1207 = vst [vmem:[#allocation2 + $0x50] sm:$0xff] %v1175
        %1208 = vst [vmem:[#allocation2 + $0x58] sm:$0xff] %v1176
        %1209 = vst [vmem:[#allocation2 + $0x60] sm:$0xff] %v1177
        %1210 = vst [vmem:[#allocation2 + $0x68] sm:$0xff] %v1178
        %1211 = vst [vmem:[#allocation2 + $0x70] sm:$0xff] %v1179
        %1212 = vst [vmem:[#allocation2 + $0x78] sm:$0xff] %v1180
        %1213 = vst [vmem:[#allocation2 + $0x80] sm:$0xff] %v1181
        %1214 = vst [vmem:[#allocation2 + $0x88] sm:$0xff] %v1182
        %1215 = vst [vmem:[#allocation2 + $0x90] sm:$0xff] %v1183
        %1216 = vst [vmem:[#allocation2 + $0x98] sm:$0xff] %v1184
        %1217 = vst [vmem:[#allocation2 + $0xa0] sm:$0xff] %v1185
        %1218 = vst [vmem:[#allocation2 + $0xa8] sm:$0xff] %v1186
        %1219 = vst [vmem:[#allocation2 + $0xb0] sm:$0xff] %v1187
        %1220 = vst [vmem:[#allocation2 + $0xb8] sm:$0xff] %v1188
        %1221 = vst [vmem:[#allocation2 + $0xc0] sm:$0xff] %v1189
        %1222 = vst [vmem:[#allocation2 + $0xc8] sm:$0xff] %v1190
        %1223 = vst [vmem:[#allocation2 + $0xd0] sm:$0xff] %v1191
        %1224 = vst [vmem:[#allocation2 + $0xd8] sm:$0xff] %v1192
        %1225 = vst [vmem:[#allocation2 + $0xe0] sm:$0xff] %v1193
        %1226 = vst [vmem:[#allocation2 + $0xe8] sm:$0xff] %v1194
        %1227 = vst [vmem:[#allocation2 + $0xf0] sm:$0xff] %v1195
        %1228 = vst [vmem:[#allocation2 + $0xf8] sm:$0xff] %v1196
        %v1229 = vld [vmem:[%s270 + $0x2] sm:$0xff]
        %v1230 = vld [vmem:[%s270 + $0xa] sm:$0xff]
        %v1231 = vld [vmem:[%s270 + $0x1a] sm:$0xff]
        %v1232 = vld [vmem:[%s270 + $0x22] sm:$0xff]
        %v1233 = vld [vmem:[%s270 + $0x32] sm:$0xff]
        %v1234 = vld [vmem:[%s270 + $0x3a] sm:$0xff]
        %v1235 = vld [vmem:[%s270 + $0x4a] sm:$0xff]
        %v1236 = vld [vmem:[%s270 + $0x52] sm:$0xff]
        %v1237 = vld [vmem:[%s270 + $0x62] sm:$0xff]
        %v1238 = vld [vmem:[%s270 + $0x6a] sm:$0xff]
        %v1239 = vld [vmem:[%s270 + $0x7a] sm:$0xff]
        %v1240 = vld [vmem:[%s270 + $0x82] sm:$0xff]
        %v1241 = vld [vmem:[%s270 + $0x92] sm:$0xff]
        %v1242 = vld [vmem:[%s270 + $0x9a] sm:$0xff]
        %v1243 = vld [vmem:[%s270 + $0xaa] sm:$0xff]
        %v1244 = vld [vmem:[%s270 + $0xb2] sm:$0xff]
        %v1245 = vld [vmem:[%s270 + $0xc2] sm:$0xff]
        %v1246 = vld [vmem:[%s270 + $0xca] sm:$0xff]
        %v1247 = vld [vmem:[%s270 + $0xda] sm:$0xff]
        %v1248 = vld [vmem:[%s270 + $0xe2] sm:$0xff]
        %v1249 = vld [vmem:[%s270 + $0xf2] sm:$0xff]
        %v1250 = vld [vmem:[%s270 + $0xfa] sm:$0xff]
        %v1251 = vld [vmem:[%s270 + $0x10a] sm:$0xff]
        %v1252 = vld [vmem:[%s270 + $0x112] sm:$0xff]
        %v1253 = vld [vmem:[%s270 + $0x122] sm:$0xff]
        %v1254 = vld [vmem:[%s270 + $0x12a] sm:$0xff]
        %v1255 = vld [vmem:[%s270 + $0x13a] sm:$0xff]
        %v1256 = vld [vmem:[%s270 + $0x142] sm:$0xff]
        %v1257 = vld [vmem:[%s270 + $0x152] sm:$0xff]
        %v1258 = vld [vmem:[%s270 + $0x15a] sm:$0xff]
        %v1259 = vld [vmem:[%s270 + $0x16a] sm:$0xff]
        %v1260 = vld [vmem:[%s270 + $0x172] sm:$0xff]
        %v1261 = vld [vmem:[#allocation2] sm:$0xff]
        %v1262 = vld [vmem:[#allocation2 + $0x8] sm:$0xff]
        %v1263 = vld [vmem:[#allocation2 + $0x10] sm:$0xff]
        %v1264 = vld [vmem:[#allocation2 + $0x18] sm:$0xff]
        %v1265 = vld [vmem:[#allocation2 + $0x20] sm:$0xff]
        %v1266 = vld [vmem:[#allocation2 + $0x28] sm:$0xff]
        %v1267 = vld [vmem:[#allocation2 + $0x30] sm:$0xff]
        %v1268 = vld [vmem:[#allocation2 + $0x38] sm:$0xff]
        %v1269 = vld [vmem:[#allocation2 + $0x40] sm:$0xff]
        %v1270 = vld [vmem:[#allocation2 + $0x48] sm:$0xff]
        %v1271 = vld [vmem:[#allocation2 + $0x50] sm:$0xff]
        %v1272 = vld [vmem:[#allocation2 + $0x58] sm:$0xff]
        %v1273 = vld [vmem:[#allocation2 + $0x60] sm:$0xff]
        %v1274 = vld [vmem:[#allocation2 + $0x68] sm:$0xff]
        %v1275 = vld [vmem:[#allocation2 + $0x70] sm:$0xff]
        %v1276 = vld [vmem:[#allocation2 + $0x78] sm:$0xff]
        %v1277 = vld [vmem:[#allocation2 + $0x80] sm:$0xff]
        %v1278 = vld [vmem:[#allocation2 + $0x88] sm:$0xff]
        %v1279 = vld [vmem:[#allocation2 + $0x90] sm:$0xff]
        %v1280 = vld [vmem:[#allocation2 + $0x98] sm:$0xff]
        %v1281 = vld [vmem:[#allocation2 + $0xa0] sm:$0xff]
        %v1282 = vld [vmem:[#allocation2 + $0xa8] sm:$0xff]
        %v1283 = vld [vmem:[#allocation2 + $0xb0] sm:$0xff]
        %v1284 = vld [vmem:[#allocation2 + $0xb8] sm:$0xff]
        %v1285 = vld [vmem:[#allocation2 + $0xc0] sm:$0xff]
        %v1286 = vld [vmem:[#allocation2 + $0xc8] sm:$0xff]
        %v1287 = vld [vmem:[#allocation2 + $0xd0] sm:$0xff]
        %v1288 = vld [vmem:[#allocation2 + $0xd8] sm:$0xff]
        %v1289 = vld [vmem:[#allocation2 + $0xe0] sm:$0xff]
        %v1290 = vld [vmem:[#allocation2 + $0xe8] sm:$0xff]
        %v1291 = vld [vmem:[#allocation2 + $0xf0] sm:$0xff]
        %v1292 = vld [vmem:[#allocation2 + $0xf8] sm:$0xff]
        %s1293 = scalar_lea.vmem %s277, 8
        %v1294 = vld [vmem:[%s1293] sm:$0xf]
        %v1296 = vsel %vm385, %v1229, 0
        %v1299 = vsel %vm385, %v1230, 0
        %v1302 = vsel %vm385, %v1231, 0
        %v1305 = vsel %vm385, %v1232, 0
        %v1308 = vsel %vm385, %v1233, 0
        %v1311 = vsel %vm385, %v1234, 0
        %v1314 = vsel %vm385, %v1235, 0
        %v1317 = vsel %vm385, %v1236, 0
        %v1320 = vsel %vm385, %v1237, 0
        %v1323 = vsel %vm385, %v1238, 0
        %v1326 = vsel %vm385, %v1239, 0
        %v1329 = vsel %vm385, %v1240, 0
        %v1332 = vsel %vm385, %v1241, 0
        %v1335 = vsel %vm385, %v1242, 0
        %v1338 = vsel %vm385, %v1243, 0
        %v1341 = vsel %vm385, %v1244, 0
        %v1344 = vsel %vm385, %v1245, 0
        %v1347 = vsel %vm385, %v1246, 0
        %v1350 = vsel %vm385, %v1247, 0
        %v1353 = vsel %vm385, %v1248, 0
        %v1356 = vsel %vm385, %v1249, 0
        %v1359 = vsel %vm385, %v1250, 0
        %v1362 = vsel %vm385, %v1251, 0
        %v1365 = vsel %vm385, %v1252, 0
        %v1368 = vsel %vm385, %v1253, 0
        %v1371 = vsel %vm385, %v1254, 0
        %v1374 = vsel %vm385, %v1255, 0
        %v1377 = vsel %vm385, %v1256, 0
        %v1380 = vsel %vm385, %v1257, 0
        %v1383 = vsel %vm385, %v1258, 0
        %v1386 = vsel %vm385, %v1259, 0
        %v1389 = vsel %vm385, %v1260, 0
        %v1392 = vsel %vm482, %v1294, 0
        %1394 = vmatprep.subr.mxu0 0.0
        %1395 = vmatpush1.msra.mxu0 %v1392
        %1396 = vmatprep.subr.mxu0 0.0
        %1397 = vmatpush1.msra.mxu0 0.0
        %1398 = vmatprep.subr.mxu0 0.0
        %1399 = vmatpush1.msra.mxu0 0.0
        %1400 = vmatprep.subr.mxu0 0.0
        %1401 = vmatpush1.msra.mxu0 0.0
        %1402 = vmatprep.subr.mxu0 0.0
        %1403 = vmatpush1.msra.mxu0 0.0
        %1404 = vmatprep.subr.mxu0 0.0
        %1405 = vmatpush1.msra.mxu0 0.0
        %1406 = vmatprep.subr.mxu0 0.0
        %1407 = vmatpush1.msra.mxu0 0.0
        %1408 = vmatprep.subr.mxu0 0.0
        %1409 = vmatpush1.msra.mxu0 0.0
        %1410 = vmatprep.subr.mxu0 0.0
        %1411 = vmatpush1.msra.mxu0 0.0
        %1412 = vmatprep.subr.mxu0 0.0
        %1413 = vmatpush1.msra.mxu0 0.0
        %1414 = vmatprep.subr.mxu0 0.0
        %1415 = vmatpush1.msra.mxu0 0.0
        %1416 = vmatprep.subr.mxu0 0.0
        %1417 = vmatpush1.msra.mxu0 0.0
        %1418 = vmatprep.subr.mxu0 0.0
        %1419 = vmatpush1.msra.mxu0 0.0
        %1420 = vmatprep.subr.mxu0 0.0
        %1421 = vmatpush1.msra.mxu0 0.0
        %1422 = vmatprep.subr.mxu0 0.0
        %1423 = vmatpush1.msra.mxu0 0.0
        %1424 = vmatprep.subr.mxu0 0.0
        %1425 = vmatpush1.msra.mxu0 0.0
        %1426 = vmatprep.subr.mxu0 0.0
        %1427 = vmatpush1.msra.mxu0 0.0
        %1428 = vmatprep.subr.mxu0 0.0
        %1429 = vmatpush1.msra.mxu0 0.0
        %1430 = vmatprep.subr.mxu0 0.0
        %1431 = vmatpush1.msra.mxu0 0.0
        %1432 = vmatprep.subr.mxu0 0.0
        %1433 = vmatpush1.msra.mxu0 0.0
        %1434 = vmatprep.subr.mxu0 0.0
        %1435 = vmatpush1.msra.mxu0 0.0
        %1436 = vmatprep.subr.mxu0 0.0
        %1437 = vmatpush1.msra.mxu0 0.0
        %1438 = vmatprep.subr.mxu0 0.0
        %1439 = vmatpush1.msra.mxu0 0.0
        %1440 = vmatprep.subr.mxu0 0.0
        %1441 = vmatpush1.msra.mxu0 0.0
        %1442 = vmatprep.subr.mxu0 0.0
        %1443 = vmatpush1.msra.mxu0 0.0
        %1444 = vmatprep.subr.mxu0 0.0
        %1445 = vmatpush1.msra.mxu0 0.0
        %1446 = vmatprep.subr.mxu0 0.0
        %1447 = vmatpush1.msra.mxu0 0.0
        %1448 = vmatprep.subr.mxu0 0.0
        %1449 = vmatpush1.msra.mxu0 0.0
        %1450 = vmatprep.subr.mxu0 0.0
        %1451 = vmatpush1.msra.mxu0 0.0
        %1452 = vmatprep.subr.mxu0 0.0
        %1453 = vmatpush1.msra.mxu0 0.0
        %1454 = vmatprep.subr.mxu0 0.0
        %1455 = vmatpush1.msra.mxu0 0.0
        %1456 = vmatprep.subr.mxu0 0.0
        %1457 = vmatpush1.msra.mxu0 0.0
        %1458 = vmatprep.mubr.f32.mxu0 0.0
        %1459 = vmatmul.mubr.f32.gmra.mrb[0].mxu0 %v1296
        %v1460 = vpop.f32.mrb[0].mxu0
        %v1461 = vadd.f32 0.0, %v1460
        %v1462 = vpop.f32.mrb[0].mxu0
        %1463 = vmatprep.mubr.f32.mxu0 0.0
        %1464 = vmatmul.mubr.f32.gmra.mrb[0].mxu0 %v1299
        %v1465 = vpop.f32.mrb[0].mxu0
        %v1466 = vadd.f32 0.0, %v1465
        %v1467 = vpop.f32.mrb[0].mxu0
        %1468 = vmatprep.mubr.f32.mxu0 0.0
        %1469 = vmatmul.mubr.f32.gmra.mrb[0].mxu0 %v1302
        %v1470 = vpop.f32.mrb[0].mxu0
        %v1471 = vadd.f32 0.0, %v1470
        %v1472 = vpop.f32.mrb[0].mxu0
        %1473 = vmatprep.mubr.f32.mxu0 0.0
        %1474 = vmatmul.mubr.f32.gmra.mrb[0].mxu0 %v1305
        %v1475 = vpop.f32.mrb[0].mxu0
        %v1476 = vadd.f32 0.0, %v1475
        %v1477 = vpop.f32.mrb[0].mxu0
        %1478 = vmatprep.mubr.f32.mxu0 0.0
        %1479 = vmatmul.mubr.f32.gmra.mrb[0].mxu0 %v1308
        %v1480 = vpop.f32.mrb[0].mxu0
        %v1481 = vadd.f32 0.0, %v1480
        %v1482 = vpop.f32.mrb[0].mxu0
        %1483 = vmatprep.mubr.f32.mxu0 0.0
        %1484 = vmatmul.mubr.f32.gmra.mrb[0].mxu0 %v1311
        %v1485 = vpop.f32.mrb[0].mxu0
        %v1486 = vadd.f32 0.0, %v1485
        %v1487 = vpop.f32.mrb[0].mxu0
        %1488 = vmatprep.mubr.f32.mxu0 0.0
        %1489 = vmatmul.mubr.f32.gmra.mrb[0].mxu0 %v1314
        %v1490 = vpop.f32.mrb[0].mxu0
        %v1491 = vadd.f32 0.0, %v1490
        %v1492 = vpop.f32.mrb[0].mxu0
        %1493 = vmatprep.mubr.f32.mxu0 0.0
        %1494 = vmatmul.mubr.f32.gmra.mrb[0].mxu0 %v1317
        %v1495 = vpop.f32.mrb[0].mxu0
        %v1496 = vadd.f32 0.0, %v1495
        %v1497 = vpop.f32.mrb[0].mxu0
        %1498 = vmatprep.mubr.f32.mxu0 0.0
        %1499 = vmatmul.mubr.f32.gmra.mrb[0].mxu0 %v1320
        %v1500 = vpop.f32.mrb[0].mxu0
        %v1501 = vadd.f32 0.0, %v1500
        %v1502 = vpop.f32.mrb[0].mxu0
        %1503 = vmatprep.mubr.f32.mxu0 0.0
        %1504 = vmatmul.mubr.f32.gmra.mrb[0].mxu0 %v1323
        %v1505 = vpop.f32.mrb[0].mxu0
        %v1506 = vadd.f32 0.0, %v1505
        %v1507 = vpop.f32.mrb[0].mxu0
        %1508 = vmatprep.mubr.f32.mxu0 0.0
        %1509 = vmatmul.mubr.f32.gmra.mrb[0].mxu0 %v1326
        %v1510 = vpop.f32.mrb[0].mxu0
        %v1511 = vadd.f32 0.0, %v1510
        %v1512 = vpop.f32.mrb[0].mxu0
        %1513 = vmatprep.mubr.f32.mxu0 0.0
        %1514 = vmatmul.mubr.f32.gmra.mrb[0].mxu0 %v1329
        %v1515 = vpop.f32.mrb[0].mxu0
        %v1516 = vadd.f32 0.0, %v1515
        %v1517 = vpop.f32.mrb[0].mxu0
        %1518 = vmatprep.mubr.f32.mxu0 0.0
        %1519 = vmatmul.mubr.f32.gmra.mrb[0].mxu0 %v1332
        %v1520 = vpop.f32.mrb[0].mxu0
        %v1521 = vadd.f32 0.0, %v1520
        %v1522 = vpop.f32.mrb[0].mxu0
        %1523 = vmatprep.mubr.f32.mxu0 0.0
        %1524 = vmatmul.mubr.f32.gmra.mrb[0].mxu0 %v1335
        %v1525 = vpop.f32.mrb[0].mxu0
        %v1526 = vadd.f32 0.0, %v1525
        %v1527 = vpop.f32.mrb[0].mxu0
        %1528 = vmatprep.mubr.f32.mxu0 0.0
        %1529 = vmatmul.mubr.f32.gmra.mrb[0].mxu0 %v1338
        %v1530 = vpop.f32.mrb[0].mxu0
        %v1531 = vadd.f32 0.0, %v1530
        %v1532 = vpop.f32.mrb[0].mxu0
        %1533 = vmatprep.mubr.f32.mxu0 0.0
        %1534 = vmatmul.mubr.f32.gmra.mrb[0].mxu0 %v1341
        %v1535 = vpop.f32.mrb[0].mxu0
        %v1536 = vadd.f32 0.0, %v1535
        %v1537 = vpop.f32.mrb[0].mxu0
        %1538 = vmatprep.mubr.f32.mxu0 0.0
        %1539 = vmatmul.mubr.f32.gmra.mrb[0].mxu0 %v1344
        %v1540 = vpop.f32.mrb[0].mxu0
        %v1541 = vadd.f32 0.0, %v1540
        %v1542 = vpop.f32.mrb[0].mxu0
        %1543 = vmatprep.mubr.f32.mxu0 0.0
        %1544 = vmatmul.mubr.f32.gmra.mrb[0].mxu0 %v1347
        %v1545 = vpop.f32.mrb[0].mxu0
        %v1546 = vadd.f32 0.0, %v1545
        %v1547 = vpop.f32.mrb[0].mxu0
        %1548 = vmatprep.mubr.f32.mxu0 0.0
        %1549 = vmatmul.mubr.f32.gmra.mrb[0].mxu0 %v1350
        %v1550 = vpop.f32.mrb[0].mxu0
        %v1551 = vadd.f32 0.0, %v1550
        %v1552 = vpop.f32.mrb[0].mxu0
        %1553 = vmatprep.mubr.f32.mxu0 0.0
        %1554 = vmatmul.mubr.f32.gmra.mrb[0].mxu0 %v1353
        %v1555 = vpop.f32.mrb[0].mxu0
        %v1556 = vadd.f32 0.0, %v1555
        %v1557 = vpop.f32.mrb[0].mxu0
        %1558 = vmatprep.mubr.f32.mxu0 0.0
        %1559 = vmatmul.mubr.f32.gmra.mrb[0].mxu0 %v1356
        %v1560 = vpop.f32.mrb[0].mxu0
        %v1561 = vadd.f32 0.0, %v1560
        %v1562 = vpop.f32.mrb[0].mxu0
        %1563 = vmatprep.mubr.f32.mxu0 0.0
        %1564 = vmatmul.mubr.f32.gmra.mrb[0].mxu0 %v1359
        %v1565 = vpop.f32.mrb[0].mxu0
        %v1566 = vadd.f32 0.0, %v1565
        %v1567 = vpop.f32.mrb[0].mxu0
        %1568 = vmatprep.mubr.f32.mxu0 0.0
        %1569 = vmatmul.mubr.f32.gmra.mrb[0].mxu0 %v1362
        %v1570 = vpop.f32.mrb[0].mxu0
        %v1571 = vadd.f32 0.0, %v1570
        %v1572 = vpop.f32.mrb[0].mxu0
        %1573 = vmatprep.mubr.f32.mxu0 0.0
        %1574 = vmatmul.mubr.f32.gmra.mrb[0].mxu0 %v1365
        %v1575 = vpop.f32.mrb[0].mxu0
        %v1576 = vadd.f32 0.0, %v1575
        %v1577 = vpop.f32.mrb[0].mxu0
        %1578 = vmatprep.mubr.f32.mxu0 0.0
        %1579 = vmatmul.mubr.f32.gmra.mrb[0].mxu0 %v1368
        %v1580 = vpop.f32.mrb[0].mxu0
        %v1581 = vadd.f32 0.0, %v1580
        %v1582 = vpop.f32.mrb[0].mxu0
        %1583 = vmatprep.mubr.f32.mxu0 0.0
        %1584 = vmatmul.mubr.f32.gmra.mrb[0].mxu0 %v1371
        %v1585 = vpop.f32.mrb[0].mxu0
        %v1586 = vadd.f32 0.0, %v1585
        %v1587 = vpop.f32.mrb[0].mxu0
        %1588 = vmatprep.mubr.f32.mxu0 0.0
        %1589 = vmatmul.mubr.f32.gmra.mrb[0].mxu0 %v1374
        %v1590 = vpop.f32.mrb[0].mxu0
        %v1591 = vadd.f32 0.0, %v1590
        %v1592 = vpop.f32.mrb[0].mxu0
        %1593 = vmatprep.mubr.f32.mxu0 0.0
        %1594 = vmatmul.mubr.f32.gmra.mrb[0].mxu0 %v1377
        %v1595 = vpop.f32.mrb[0].mxu0
        %v1596 = vadd.f32 0.0, %v1595
        %v1597 = vpop.f32.mrb[0].mxu0
        %1598 = vmatprep.mubr.f32.mxu0 0.0
        %1599 = vmatmul.mubr.f32.gmra.mrb[0].mxu0 %v1380
        %v1600 = vpop.f32.mrb[0].mxu0
        %v1601 = vadd.f32 0.0, %v1600
        %v1602 = vpop.f32.mrb[0].mxu0
        %1603 = vmatprep.mubr.f32.mxu0 0.0
        %1604 = vmatmul.mubr.f32.gmra.mrb[0].mxu0 %v1383
        %v1605 = vpop.f32.mrb[0].mxu0
        %v1606 = vadd.f32 0.0, %v1605
        %v1607 = vpop.f32.mrb[0].mxu0
        %1608 = vmatprep.mubr.f32.mxu0 0.0
        %1609 = vmatmul.mubr.f32.gmra.mrb[0].mxu0 %v1386
        %v1610 = vpop.f32.mrb[0].mxu0
        %v1611 = vadd.f32 0.0, %v1610
        %v1612 = vpop.f32.mrb[0].mxu0
        %1613 = vmatprep.mubr.f32.mxu0 0.0
        %1614 = vmatmul.mubr.f32.gmra.mrb[0].mxu0 %v1389
        %v1615 = vpop.f32.mrb[0].mxu0
        %v1616 = vadd.f32 0.0, %v1615
        %v1617 = vpop.f32.mrb[0].mxu0
        %1618 = vdwg.mxu0
        %v1619 = vadd.f32 %v1261, %v1461
        %v1620 = vadd.f32 %v1262, %v1466
        %v1621 = vadd.f32 %v1263, %v1471
        %v1622 = vadd.f32 %v1264, %v1476
        %v1623 = vadd.f32 %v1265, %v1481
        %v1624 = vadd.f32 %v1266, %v1486
        %v1625 = vadd.f32 %v1267, %v1491
        %v1626 = vadd.f32 %v1268, %v1496
        %v1627 = vadd.f32 %v1269, %v1501
        %v1628 = vadd.f32 %v1270, %v1506
        %v1629 = vadd.f32 %v1271, %v1511
        %v1630 = vadd.f32 %v1272, %v1516
        %v1631 = vadd.f32 %v1273, %v1521
        %v1632 = vadd.f32 %v1274, %v1526
        %v1633 = vadd.f32 %v1275, %v1531
        %v1634 = vadd.f32 %v1276, %v1536
        %v1635 = vadd.f32 %v1277, %v1541
        %v1636 = vadd.f32 %v1278, %v1546
        %v1637 = vadd.f32 %v1279, %v1551
        %v1638 = vadd.f32 %v1280, %v1556
        %v1639 = vadd.f32 %v1281, %v1561
        %v1640 = vadd.f32 %v1282, %v1566
        %v1641 = vadd.f32 %v1283, %v1571
        %v1642 = vadd.f32 %v1284, %v1576
        %v1643 = vadd.f32 %v1285, %v1581
        %v1644 = vadd.f32 %v1286, %v1586
        %v1645 = vadd.f32 %v1287, %v1591
        %v1646 = vadd.f32 %v1288, %v1596
        %v1647 = vadd.f32 %v1289, %v1601
        %v1648 = vadd.f32 %v1290, %v1606
        %v1649 = vadd.f32 %v1291, %v1611
        %v1650 = vadd.f32 %v1292, %v1616
        %1651 = vst [vmem:[#allocation2] sm:$0xff] %v1619
        %1652 = vst [vmem:[#allocation2 + $0x8] sm:$0xff] %v1620
        %1653 = vst [vmem:[#allocation2 + $0x10] sm:$0xff] %v1621
        %1654 = vst [vmem:[#allocation2 + $0x18] sm:$0xff] %v1622
        %1655 = vst [vmem:[#allocation2 + $0x20] sm:$0xff] %v1623
        %1656 = vst [vmem:[#allocation2 + $0x28] sm:$0xff] %v1624
        %1657 = vst [vmem:[#allocation2 + $0x30] sm:$0xff] %v1625
        %1658 = vst [vmem:[#allocation2 + $0x38] sm:$0xff] %v1626
        %1659 = vst [vmem:[#allocation2 + $0x40] sm:$0xff] %v1627
        %1660 = vst [vmem:[#allocation2 + $0x48] sm:$0xff] %v1628
        %1661 = vst [vmem:[#allocation2 + $0x50] sm:$0xff] %v1629
        %1662 = vst [vmem:[#allocation2 + $0x58] sm:$0xff] %v1630
        %1663 = vst [vmem:[#allocation2 + $0x60] sm:$0xff] %v1631
        %1664 = vst [vmem:[#allocation2 + $0x68] sm:$0xff] %v1632
        %1665 = vst [vmem:[#allocation2 + $0x70] sm:$0xff] %v1633
        %1666 = vst [vmem:[#allocation2 + $0x78] sm:$0xff] %v1634
        %1667 = vst [vmem:[#allocation2 + $0x80] sm:$0xff] %v1635
        %1668 = vst [vmem:[#allocation2 + $0x88] sm:$0xff] %v1636
        %1669 = vst [vmem:[#allocation2 + $0x90] sm:$0xff] %v1637
        %1670 = vst [vmem:[#allocation2 + $0x98] sm:$0xff] %v1638
        %1671 = vst [vmem:[#allocation2 + $0xa0] sm:$0xff] %v1639
        %1672 = vst [vmem:[#allocation2 + $0xa8] sm:$0xff] %v1640
        %1673 = vst [vmem:[#allocation2 + $0xb0] sm:$0xff] %v1641
        %1674 = vst [vmem:[#allocation2 + $0xb8] sm:$0xff] %v1642
        %1675 = vst [vmem:[#allocation2 + $0xc0] sm:$0xff] %v1643
        %1676 = vst [vmem:[#allocation2 + $0xc8] sm:$0xff] %v1644
        %1677 = vst [vmem:[#allocation2 + $0xd0] sm:$0xff] %v1645
        %1678 = vst [vmem:[#allocation2 + $0xd8] sm:$0xff] %v1646
        %1679 = vst [vmem:[#allocation2 + $0xe0] sm:$0xff] %v1647
        %1680 = vst [vmem:[#allocation2 + $0xe8] sm:$0xff] %v1648
        %1681 = vst [vmem:[#allocation2 + $0xf0] sm:$0xff] %v1649
        %1682 = vst [vmem:[#allocation2 + $0xf8] sm:$0xff] %v1650
        %s1683 = scalar_lea.vmem %s270, 24
        %v1684 = vld [vmem:[%s1683] sm:$0xff]
        %v1685 = vld [vmem:[%s1683 + $0x8] sm:$0xff]
        %v1686 = vld [vmem:[%s1683 + $0x18] sm:$0xff]
        %v1687 = vld [vmem:[%s1683 + $0x20] sm:$0xff]
        %v1688 = vld [vmem:[%s1683 + $0x30] sm:$0xff]
        %v1689 = vld [vmem:[%s1683 + $0x38] sm:$0xff]
        %v1690 = vld [vmem:[%s1683 + $0x48] sm:$0xff]
        %v1691 = vld [vmem:[%s1683 + $0x50] sm:$0xff]
        %v1692 = vld [vmem:[%s1683 + $0x60] sm:$0xff]
        %v1693 = vld [vmem:[%s1683 + $0x68] sm:$0xff]
        %v1694 = vld [vmem:[%s1683 + $0x78] sm:$0xff]
        %v1695 = vld [vmem:[%s1683 + $0x80] sm:$0xff]
        %v1696 = vld [vmem:[%s1683 + $0x90] sm:$0xff]
        %v1697 = vld [vmem:[%s1683 + $0x98] sm:$0xff]
        %v1698 = vld [vmem:[%s1683 + $0xa8] sm:$0xff]
        %v1699 = vld [vmem:[%s1683 + $0xb0] sm:$0xff]
        %v1700 = vld [vmem:[%s1683 + $0xc0] sm:$0xff]
        %v1701 = vld [vmem:[%s1683 + $0xc8] sm:$0xff]
        %v1702 = vld [vmem:[%s1683 + $0xd8] sm:$0xff]
        %v1703 = vld [vmem:[%s1683 + $0xe0] sm:$0xff]
        %v1704 = vld [vmem:[%s1683 + $0xf0] sm:$0xff]
        %v1705 = vld [vmem:[%s1683 + $0xf8] sm:$0xff]
        %v1706 = vld [vmem:[%s1683 + $0x108] sm:$0xff]
        %v1707 = vld [vmem:[%s1683 + $0x110] sm:$0xff]
        %v1708 = vld [vmem:[%s1683 + $0x120] sm:$0xff]
        %v1709 = vld [vmem:[%s1683 + $0x128] sm:$0xff]
        %v1710 = vld [vmem:[%s1683 + $0x138] sm:$0xff]
        %v1711 = vld [vmem:[%s1683 + $0x140] sm:$0xff]
        %v1712 = vld [vmem:[%s1683 + $0x150] sm:$0xff]
        %v1713 = vld [vmem:[%s1683 + $0x158] sm:$0xff]
        %v1714 = vld [vmem:[%s1683 + $0x168] sm:$0xff]
        %v1715 = vld [vmem:[%s1683 + $0x170] sm:$0xff]
        %v1716 = vld [vmem:[#allocation2] sm:$0xff]
        %v1717 = vld [vmem:[#allocation2 + $0x8] sm:$0xff]
        %v1718 = vld [vmem:[#allocation2 + $0x10] sm:$0xff]
        %v1719 = vld [vmem:[#allocation2 + $0x18] sm:$0xff]
        %v1720 = vld [vmem:[#allocation2 + $0x20] sm:$0xff]
        %v1721 = vld [vmem:[#allocation2 + $0x28] sm:$0xff]
        %v1722 = vld [vmem:[#allocation2 + $0x30] sm:$0xff]
        %v1723 = vld [vmem:[#allocation2 + $0x38] sm:$0xff]
        %v1724 = vld [vmem:[#allocation2 + $0x40] sm:$0xff]
        %v1725 = vld [vmem:[#allocation2 + $0x48] sm:$0xff]
        %v1726 = vld [vmem:[#allocation2 + $0x50] sm:$0xff]
        %v1727 = vld [vmem:[#allocation2 + $0x58] sm:$0xff]
        %v1728 = vld [vmem:[#allocation2 + $0x60] sm:$0xff]
        %v1729 = vld [vmem:[#allocation2 + $0x68] sm:$0xff]
        %v1730 = vld [vmem:[#allocation2 + $0x70] sm:$0xff]
        %v1731 = vld [vmem:[#allocation2 + $0x78] sm:$0xff]
        %v1732 = vld [vmem:[#allocation2 + $0x80] sm:$0xff]
        %v1733 = vld [vmem:[#allocation2 + $0x88] sm:$0xff]
        %v1734 = vld [vmem:[#allocation2 + $0x90] sm:$0xff]
        %v1735 = vld [vmem:[#allocation2 + $0x98] sm:$0xff]
        %v1736 = vld [vmem:[#allocation2 + $0xa0] sm:$0xff]
        %v1737 = vld [vmem:[#allocation2 + $0xa8] sm:$0xff]
        %v1738 = vld [vmem:[#allocation2 + $0xb0] sm:$0xff]
        %v1739 = vld [vmem:[#allocation2 + $0xb8] sm:$0xff]
        %v1740 = vld [vmem:[#allocation2 + $0xc0] sm:$0xff]
        %v1741 = vld [vmem:[#allocation2 + $0xc8] sm:$0xff]
        %v1742 = vld [vmem:[#allocation2 + $0xd0] sm:$0xff]
        %v1743 = vld [vmem:[#allocation2 + $0xd8] sm:$0xff]
        %v1744 = vld [vmem:[#allocation2 + $0xe0] sm:$0xff]
        %v1745 = vld [vmem:[#allocation2 + $0xe8] sm:$0xff]
        %v1746 = vld [vmem:[#allocation2 + $0xf0] sm:$0xff]
        %v1747 = vld [vmem:[#allocation2 + $0xf8] sm:$0xff]
        %s1748 = scalar_lea.vmem %s277, 12
        %v1749 = vld [vmem:[%s1748] sm:$0xf]
        %v1751 = vsel %vm385, %v1684, 0
        %v1754 = vsel %vm385, %v1685, 0
        %v1757 = vsel %vm385, %v1686, 0
        %v1760 = vsel %vm385, %v1687, 0
        %v1763 = vsel %vm385, %v1688, 0
        %v1766 = vsel %vm385, %v1689, 0
        %v1769 = vsel %vm385, %v1690, 0
        %v1772 = vsel %vm385, %v1691, 0
        %v1775 = vsel %vm385, %v1692, 0
        %v1778 = vsel %vm385, %v1693, 0
        %v1781 = vsel %vm385, %v1694, 0
        %v1784 = vsel %vm385, %v1695, 0
        %v1787 = vsel %vm385, %v1696, 0
        %v1790 = vsel %vm385, %v1697, 0
        %v1793 = vsel %vm385, %v1698, 0
        %v1796 = vsel %vm385, %v1699, 0
        %v1799 = vsel %vm385, %v1700, 0
        %v1802 = vsel %vm385, %v1701, 0
        %v1805 = vsel %vm385, %v1702, 0
        %v1808 = vsel %vm385, %v1703, 0
        %v1811 = vsel %vm385, %v1704, 0
        %v1814 = vsel %vm385, %v1705, 0
        %v1817 = vsel %vm385, %v1706, 0
        %v1820 = vsel %vm385, %v1707, 0
        %v1823 = vsel %vm385, %v1708, 0
        %v1826 = vsel %vm385, %v1709, 0
        %v1829 = vsel %vm385, %v1710, 0
        %v1832 = vsel %vm385, %v1711, 0
        %v1835 = vsel %vm385, %v1712, 0
        %v1838 = vsel %vm385, %v1713, 0
        %v1841 = vsel %vm385, %v1714, 0
        %v1844 = vsel %vm385, %v1715, 0
        %v1847 = vsel %vm482, %v1749, 0
        %1849 = vmatprep.subr.mxu0 0.0
        %1850 = vmatpush1.msra.mxu0 %v1847
        %1851 = vmatprep.subr.mxu0 0.0
        %1852 = vmatpush1.msra.mxu0 0.0
        %1853 = vmatprep.subr.mxu0 0.0
        %1854 = vmatpush1.msra.mxu0 0.0
        %1855 = vmatprep.subr.mxu0 0.0
        %1856 = vmatpush1.msra.mxu0 0.0
        %1857 = vmatprep.subr.mxu0 0.0
        %1858 = vmatpush1.msra.mxu0 0.0
        %1859 = vmatprep.subr.mxu0 0.0
        %1860 = vmatpush1.msra.mxu0 0.0
        %1861 = vmatprep.subr.mxu0 0.0
        %1862 = vmatpush1.msra.mxu0 0.0
        %1863 = vmatprep.subr.mxu0 0.0
        %1864 = vmatpush1.msra.mxu0 0.0
        %1865 = vmatprep.subr.mxu0 0.0
        %1866 = vmatpush1.msra.mxu0 0.0
        %1867 = vmatprep.subr.mxu0 0.0
        %1868 = vmatpush1.msra.mxu0 0.0
        %1869 = vmatprep.subr.mxu0 0.0
        %1870 = vmatpush1.msra.mxu0 0.0
        %1871 = vmatprep.subr.mxu0 0.0
        %1872 = vmatpush1.msra.mxu0 0.0
        %1873 = vmatprep.subr.mxu0 0.0
        %1874 = vmatpush1.msra.mxu0 0.0
        %1875 = vmatprep.subr.mxu0 0.0
        %1876 = vmatpush1.msra.mxu0 0.0
        %1877 = vmatprep.subr.mxu0 0.0
        %1878 = vmatpush1.msra.mxu0 0.0
        %1879 = vmatprep.subr.mxu0 0.0
        %1880 = vmatpush1.msra.mxu0 0.0
        %1881 = vmatprep.subr.mxu0 0.0
        %1882 = vmatpush1.msra.mxu0 0.0
        %1883 = vmatprep.subr.mxu0 0.0
        %1884 = vmatpush1.msra.mxu0 0.0
        %1885 = vmatprep.subr.mxu0 0.0
        %1886 = vmatpush1.msra.mxu0 0.0
        %1887 = vmatprep.subr.mxu0 0.0
        %1888 = vmatpush1.msra.mxu0 0.0
        %1889 = vmatprep.subr.mxu0 0.0
        %1890 = vmatpush1.msra.mxu0 0.0
        %1891 = vmatprep.subr.mxu0 0.0
        %1892 = vmatpush1.msra.mxu0 0.0
        %1893 = vmatprep.subr.mxu0 0.0
        %1894 = vmatpush1.msra.mxu0 0.0
        %1895 = vmatprep.subr.mxu0 0.0
        %1896 = vmatpush1.msra.mxu0 0.0
        %1897 = vmatprep.subr.mxu0 0.0
        %1898 = vmatpush1.msra.mxu0 0.0
        %1899 = vmatprep.subr.mxu0 0.0
        %1900 = vmatpush1.msra.mxu0 0.0
        %1901 = vmatprep.subr.mxu0 0.0
        %1902 = vmatpush1.msra.mxu0 0.0
        %1903 = vmatprep.subr.mxu0 0.0
        %1904 = vmatpush1.msra.mxu0 0.0
        %1905 = vmatprep.subr.mxu0 0.0
        %1906 = vmatpush1.msra.mxu0 0.0
        %1907 = vmatprep.subr.mxu0 0.0
        %1908 = vmatpush1.msra.mxu0 0.0
        %1909 = vmatprep.subr.mxu0 0.0
        %1910 = vmatpush1.msra.mxu0 0.0
        %1911 = vmatprep.subr.mxu0 0.0
        %1912 = vmatpush1.msra.mxu0 0.0
        %1913 = vmatprep.mubr.f32.mxu0 0.0
        %1914 = vmatmul.mubr.f32.gmra.mrb[0].mxu0 %v1751
        %v1915 = vpop.f32.mrb[0].mxu0
        %v1916 = vadd.f32 0.0, %v1915
        %v1917 = vpop.f32.mrb[0].mxu0
        %1918 = vmatprep.mubr.f32.mxu0 0.0
        %1919 = vmatmul.mubr.f32.gmra.mrb[0].mxu0 %v1754
        %v1920 = vpop.f32.mrb[0].mxu0
        %v1921 = vadd.f32 0.0, %v1920
        %v1922 = vpop.f32.mrb[0].mxu0
        %1923 = vmatprep.mubr.f32.mxu0 0.0
        %1924 = vmatmul.mubr.f32.gmra.mrb[0].mxu0 %v1757
        %v1925 = vpop.f32.mrb[0].mxu0
        %v1926 = vadd.f32 0.0, %v1925
        %v1927 = vpop.f32.mrb[0].mxu0
        %1928 = vmatprep.mubr.f32.mxu0 0.0
        %1929 = vmatmul.mubr.f32.gmra.mrb[0].mxu0 %v1760
        %v1930 = vpop.f32.mrb[0].mxu0
        %v1931 = vadd.f32 0.0, %v1930
        %v1932 = vpop.f32.mrb[0].mxu0
        %1933 = vmatprep.mubr.f32.mxu0 0.0
        %1934 = vmatmul.mubr.f32.gmra.mrb[0].mxu0 %v1763
        %v1935 = vpop.f32.mrb[0].mxu0
        %v1936 = vadd.f32 0.0, %v1935
        %v1937 = vpop.f32.mrb[0].mxu0
        %1938 = vmatprep.mubr.f32.mxu0 0.0
        %1939 = vmatmul.mubr.f32.gmra.mrb[0].mxu0 %v1766
        %v1940 = vpop.f32.mrb[0].mxu0
        %v1941 = vadd.f32 0.0, %v1940
        %v1942 = vpop.f32.mrb[0].mxu0
        %1943 = vmatprep.mubr.f32.mxu0 0.0
        %1944 = vmatmul.mubr.f32.gmra.mrb[0].mxu0 %v1769
        %v1945 = vpop.f32.mrb[0].mxu0
        %v1946 = vadd.f32 0.0, %v1945
        %v1947 = vpop.f32.mrb[0].mxu0
        %1948 = vmatprep.mubr.f32.mxu0 0.0
        %1949 = vmatmul.mubr.f32.gmra.mrb[0].mxu0 %v1772
        %v1950 = vpop.f32.mrb[0].mxu0
        %v1951 = vadd.f32 0.0, %v1950
        %v1952 = vpop.f32.mrb[0].mxu0
        %1953 = vmatprep.mubr.f32.mxu0 0.0
        %1954 = vmatmul.mubr.f32.gmra.mrb[0].mxu0 %v1775
        %v1955 = vpop.f32.mrb[0].mxu0
        %v1956 = vadd.f32 0.0, %v1955
        %v1957 = vpop.f32.mrb[0].mxu0
        %1958 = vmatprep.mubr.f32.mxu0 0.0
        %1959 = vmatmul.mubr.f32.gmra.mrb[0].mxu0 %v1778
        %v1960 = vpop.f32.mrb[0].mxu0
        %v1961 = vadd.f32 0.0, %v1960
        %v1962 = vpop.f32.mrb[0].mxu0
        %1963 = vmatprep.mubr.f32.mxu0 0.0
        %1964 = vmatmul.mubr.f32.gmra.mrb[0].mxu0 %v1781
        %v1965 = vpop.f32.mrb[0].mxu0
        %v1966 = vadd.f32 0.0, %v1965
        %v1967 = vpop.f32.mrb[0].mxu0
        %1968 = vmatprep.mubr.f32.mxu0 0.0
        %1969 = vmatmul.mubr.f32.gmra.mrb[0].mxu0 %v1784
        %v1970 = vpop.f32.mrb[0].mxu0
        %v1971 = vadd.f32 0.0, %v1970
        %v1972 = vpop.f32.mrb[0].mxu0
        %1973 = vmatprep.mubr.f32.mxu0 0.0
        %1974 = vmatmul.mubr.f32.gmra.mrb[0].mxu0 %v1787
        %v1975 = vpop.f32.mrb[0].mxu0
        %v1976 = vadd.f32 0.0, %v1975
        %v1977 = vpop.f32.mrb[0].mxu0
        %1978 = vmatprep.mubr.f32.mxu0 0.0
        %1979 = vmatmul.mubr.f32.gmra.mrb[0].mxu0 %v1790
        %v1980 = vpop.f32.mrb[0].mxu0
        %v1981 = vadd.f32 0.0, %v1980
        %v1982 = vpop.f32.mrb[0].mxu0
        %1983 = vmatprep.mubr.f32.mxu0 0.0
        %1984 = vmatmul.mubr.f32.gmra.mrb[0].mxu0 %v1793
        %v1985 = vpop.f32.mrb[0].mxu0
        %v1986 = vadd.f32 0.0, %v1985
        %v1987 = vpop.f32.mrb[0].mxu0
        %1988 = vmatprep.mubr.f32.mxu0 0.0
        %1989 = vmatmul.mubr.f32.gmra.mrb[0].mxu0 %v1796
        %v1990 = vpop.f32.mrb[0].mxu0
        %v1991 = vadd.f32 0.0, %v1990
        %v1992 = vpop.f32.mrb[0].mxu0
        %1993 = vmatprep.mubr.f32.mxu0 0.0
        %1994 = vmatmul.mubr.f32.gmra.mrb[0].mxu0 %v1799
        %v1995 = vpop.f32.mrb[0].mxu0
        %v1996 = vadd.f32 0.0, %v1995
        %v1997 = vpop.f32.mrb[0].mxu0
        %1998 = vmatprep.mubr.f32.mxu0 0.0
        %1999 = vmatmul.mubr.f32.gmra.mrb[0].mxu0 %v1802
        %v2000 = vpop.f32.mrb[0].mxu0
        %v2001 = vadd.f32 0.0, %v2000
        %v2002 = vpop.f32.mrb[0].mxu0
        %2003 = vmatprep.mubr.f32.mxu0 0.0
        %2004 = vmatmul.mubr.f32.gmra.mrb[0].mxu0 %v1805
        %v2005 = vpop.f32.mrb[0].mxu0
        %v2006 = vadd.f32 0.0, %v2005
        %v2007 = vpop.f32.mrb[0].mxu0
        %2008 = vmatprep.mubr.f32.mxu0 0.0
        %2009 = vmatmul.mubr.f32.gmra.mrb[0].mxu0 %v1808
        %v2010 = vpop.f32.mrb[0].mxu0
        %v2011 = vadd.f32 0.0, %v2010
        %v2012 = vpop.f32.mrb[0].mxu0
        %2013 = vmatprep.mubr.f32.mxu0 0.0
        %2014 = vmatmul.mubr.f32.gmra.mrb[0].mxu0 %v1811
        %v2015 = vpop.f32.mrb[0].mxu0
        %v2016 = vadd.f32 0.0, %v2015
        %v2017 = vpop.f32.mrb[0].mxu0
        %2018 = vmatprep.mubr.f32.mxu0 0.0
        %2019 = vmatmul.mubr.f32.gmra.mrb[0].mxu0 %v1814
        %v2020 = vpop.f32.mrb[0].mxu0
        %v2021 = vadd.f32 0.0, %v2020
        %v2022 = vpop.f32.mrb[0].mxu0
        %2023 = vmatprep.mubr.f32.mxu0 0.0
        %2024 = vmatmul.mubr.f32.gmra.mrb[0].mxu0 %v1817
        %v2025 = vpop.f32.mrb[0].mxu0
        %v2026 = vadd.f32 0.0, %v2025
        %v2027 = vpop.f32.mrb[0].mxu0
        %2028 = vmatprep.mubr.f32.mxu0 0.0
        %2029 = vmatmul.mubr.f32.gmra.mrb[0].mxu0 %v1820
        %v2030 = vpop.f32.mrb[0].mxu0
        %v2031 = vadd.f32 0.0, %v2030
        %v2032 = vpop.f32.mrb[0].mxu0
        %2033 = vmatprep.mubr.f32.mxu0 0.0
        %2034 = vmatmul.mubr.f32.gmra.mrb[0].mxu0 %v1823
        %v2035 = vpop.f32.mrb[0].mxu0
        %v2036 = vadd.f32 0.0, %v2035
        %v2037 = vpop.f32.mrb[0].mxu0
        %2038 = vmatprep.mubr.f32.mxu0 0.0
        %2039 = vmatmul.mubr.f32.gmra.mrb[0].mxu0 %v1826
        %v2040 = vpop.f32.mrb[0].mxu0
        %v2041 = vadd.f32 0.0, %v2040
        %v2042 = vpop.f32.mrb[0].mxu0
        %2043 = vmatprep.mubr.f32.mxu0 0.0
        %2044 = vmatmul.mubr.f32.gmra.mrb[0].mxu0 %v1829
        %v2045 = vpop.f32.mrb[0].mxu0
        %v2046 = vadd.f32 0.0, %v2045
        %v2047 = vpop.f32.mrb[0].mxu0
        %2048 = vmatprep.mubr.f32.mxu0 0.0
        %2049 = vmatmul.mubr.f32.gmra.mrb[0].mxu0 %v1832
        %v2050 = vpop.f32.mrb[0].mxu0
        %v2051 = vadd.f32 0.0, %v2050
        %v2052 = vpop.f32.mrb[0].mxu0
        %2053 = vmatprep.mubr.f32.mxu0 0.0
        %2054 = vmatmul.mubr.f32.gmra.mrb[0].mxu0 %v1835
        %v2055 = vpop.f32.mrb[0].mxu0
        %v2056 = vadd.f32 0.0, %v2055
        %v2057 = vpop.f32.mrb[0].mxu0
        %2058 = vmatprep.mubr.f32.mxu0 0.0
        %2059 = vmatmul.mubr.f32.gmra.mrb[0].mxu0 %v1838
        %v2060 = vpop.f32.mrb[0].mxu0
        %v2061 = vadd.f32 0.0, %v2060
        %v2062 = vpop.f32.mrb[0].mxu0
        %2063 = vmatprep.mubr.f32.mxu0 0.0
        %2064 = vmatmul.mubr.f32.gmra.mrb[0].mxu0 %v1841
        %v2065 = vpop.f32.mrb[0].mxu0
        %v2066 = vadd.f32 0.0, %v2065
        %v2067 = vpop.f32.mrb[0].mxu0
        %2068 = vmatprep.mubr.f32.mxu0 0.0
        %2069 = vmatmul.mubr.f32.gmra.mrb[0].mxu0 %v1844
        %v2070 = vpop.f32.mrb[0].mxu0
        %v2071 = vadd.f32 0.0, %v2070
        %v2072 = vpop.f32.mrb[0].mxu0
        %2073 = vdwg.mxu0
        %v2074 = vadd.f32 %v1716, %v1916
        %v2075 = vadd.f32 %v1717, %v1921
        %v2076 = vadd.f32 %v1718, %v1926
        %v2077 = vadd.f32 %v1719, %v1931
        %v2078 = vadd.f32 %v1720, %v1936
        %v2079 = vadd.f32 %v1721, %v1941
        %v2080 = vadd.f32 %v1722, %v1946
        %v2081 = vadd.f32 %v1723, %v1951
        %v2082 = vadd.f32 %v1724, %v1956
        %v2083 = vadd.f32 %v1725, %v1961
        %v2084 = vadd.f32 %v1726, %v1966
        %v2085 = vadd.f32 %v1727, %v1971
        %v2086 = vadd.f32 %v1728, %v1976
        %v2087 = vadd.f32 %v1729, %v1981
        %v2088 = vadd.f32 %v1730, %v1986
        %v2089 = vadd.f32 %v1731, %v1991
        %v2090 = vadd.f32 %v1732, %v1996
        %v2091 = vadd.f32 %v1733, %v2001
        %v2092 = vadd.f32 %v1734, %v2006
        %v2093 = vadd.f32 %v1735, %v2011
        %v2094 = vadd.f32 %v1736, %v2016
        %v2095 = vadd.f32 %v1737, %v2021
        %v2096 = vadd.f32 %v1738, %v2026
        %v2097 = vadd.f32 %v1739, %v2031
        %v2098 = vadd.f32 %v1740, %v2036
        %v2099 = vadd.f32 %v1741, %v2041
        %v2100 = vadd.f32 %v1742, %v2046
        %v2101 = vadd.f32 %v1743, %v2051
        %v2102 = vadd.f32 %v1744, %v2056
        %v2103 = vadd.f32 %v1745, %v2061
        %v2104 = vadd.f32 %v1746, %v2066
        %v2105 = vadd.f32 %v1747, %v2071
        %2106 = vst [vmem:[#allocation2] sm:$0xff] %v2074
        %2107 = vst [vmem:[#allocation2 + $0x8] sm:$0xff] %v2075
        %2108 = vst [vmem:[#allocation2 + $0x10] sm:$0xff] %v2076
        %2109 = vst [vmem:[#allocation2 + $0x18] sm:$0xff] %v2077
        %2110 = vst [vmem:[#allocation2 + $0x20] sm:$0xff] %v2078
        %2111 = vst [vmem:[#allocation2 + $0x28] sm:$0xff] %v2079
        %2112 = vst [vmem:[#allocation2 + $0x30] sm:$0xff] %v2080
        %2113 = vst [vmem:[#allocation2 + $0x38] sm:$0xff] %v2081
        %2114 = vst [vmem:[#allocation2 + $0x40] sm:$0xff] %v2082
        %2115 = vst [vmem:[#allocation2 + $0x48] sm:$0xff] %v2083
        %2116 = vst [vmem:[#allocation2 + $0x50] sm:$0xff] %v2084
        %2117 = vst [vmem:[#allocation2 + $0x58] sm:$0xff] %v2085
        %2118 = vst [vmem:[#allocation2 + $0x60] sm:$0xff] %v2086
        %2119 = vst [vmem:[#allocation2 + $0x68] sm:$0xff] %v2087
        %2120 = vst [vmem:[#allocation2 + $0x70] sm:$0xff] %v2088
        %2121 = vst [vmem:[#allocation2 + $0x78] sm:$0xff] %v2089
        %2122 = vst [vmem:[#allocation2 + $0x80] sm:$0xff] %v2090
        %2123 = vst [vmem:[#allocation2 + $0x88] sm:$0xff] %v2091
        %2124 = vst [vmem:[#allocation2 + $0x90] sm:$0xff] %v2092
        %2125 = vst [vmem:[#allocation2 + $0x98] sm:$0xff] %v2093
        %2126 = vst [vmem:[#allocation2 + $0xa0] sm:$0xff] %v2094
        %2127 = vst [vmem:[#allocation2 + $0xa8] sm:$0xff] %v2095
        %2128 = vst [vmem:[#allocation2 + $0xb0] sm:$0xff] %v2096
        %2129 = vst [vmem:[#allocation2 + $0xb8] sm:$0xff] %v2097
        %2130 = vst [vmem:[#allocation2 + $0xc0] sm:$0xff] %v2098
        %2131 = vst [vmem:[#allocation2 + $0xc8] sm:$0xff] %v2099
        %2132 = vst [vmem:[#allocation2 + $0xd0] sm:$0xff] %v2100
        %2133 = vst [vmem:[#allocation2 + $0xd8] sm:$0xff] %v2101
        %2134 = vst [vmem:[#allocation2 + $0xe0] sm:$0xff] %v2102
        %2135 = vst [vmem:[#allocation2 + $0xe8] sm:$0xff] %v2103
        %2136 = vst [vmem:[#allocation2 + $0xf0] sm:$0xff] %v2104
        %2137 = vst [vmem:[#allocation2 + $0xf8] sm:$0xff] %v2105
        %v2138 = vld [vmem:[%s1683 + $0x1] sm:$0xff]
        %v2139 = vld [vmem:[%s1683 + $0x9] sm:$0xff]
        %v2140 = vld [vmem:[%s1683 + $0x19] sm:$0xff]
        %v2141 = vld [vmem:[%s1683 + $0x21] sm:$0xff]
        %v2142 = vld [vmem:[%s1683 + $0x31] sm:$0xff]
        %v2143 = vld [vmem:[%s1683 + $0x39] sm:$0xff]
        %v2144 = vld [vmem:[%s1683 + $0x49] sm:$0xff]
        %v2145 = vld [vmem:[%s1683 + $0x51] sm:$0xff]
        %v2146 = vld [vmem:[%s1683 + $0x61] sm:$0xff]
        %v2147 = vld [vmem:[%s1683 + $0x69] sm:$0xff]
        %v2148 = vld [vmem:[%s1683 + $0x79] sm:$0xff]
        %v2149 = vld [vmem:[%s1683 + $0x81] sm:$0xff]
        %v2150 = vld [vmem:[%s1683 + $0x91] sm:$0xff]
        %v2151 = vld [vmem:[%s1683 + $0x99] sm:$0xff]
        %v2152 = vld [vmem:[%s1683 + $0xa9] sm:$0xff]
        %v2153 = vld [vmem:[%s1683 + $0xb1] sm:$0xff]
        %v2154 = vld [vmem:[%s1683 + $0xc1] sm:$0xff]
        %v2155 = vld [vmem:[%s1683 + $0xc9] sm:$0xff]
        %v2156 = vld [vmem:[%s1683 + $0xd9] sm:$0xff]
        %v2157 = vld [vmem:[%s1683 + $0xe1] sm:$0xff]
        %v2158 = vld [vmem:[%s1683 + $0xf1] sm:$0xff]
        %v2159 = vld [vmem:[%s1683 + $0xf9] sm:$0xff]
        %v2160 = vld [vmem:[%s1683 + $0x109] sm:$0xff]
        %v2161 = vld [vmem:[%s1683 + $0x111] sm:$0xff]
        %v2162 = vld [vmem:[%s1683 + $0x121] sm:$0xff]
        %v2163 = vld [vmem:[%s1683 + $0x129] sm:$0xff]
        %v2164 = vld [vmem:[%s1683 + $0x139] sm:$0xff]
        %v2165 = vld [vmem:[%s1683 + $0x141] sm:$0xff]
        %v2166 = vld [vmem:[%s1683 + $0x151] sm:$0xff]
        %v2167 = vld [vmem:[%s1683 + $0x159] sm:$0xff]
        %v2168 = vld [vmem:[%s1683 + $0x169] sm:$0xff]
        %v2169 = vld [vmem:[%s1683 + $0x171] sm:$0xff]
        %v2170 = vld [vmem:[#allocation2] sm:$0xff]
        %v2171 = vld [vmem:[#allocation2 + $0x8] sm:$0xff]
        %v2172 = vld [vmem:[#allocation2 + $0x10] sm:$0xff]
        %v2173 = vld [vmem:[#allocation2 + $0x18] sm:$0xff]
        %v2174 = vld [vmem:[#allocation2 + $0x20] sm:$0xff]
        %v2175 = vld [vmem:[#allocation2 + $0x28] sm:$0xff]
        %v2176 = vld [vmem:[#allocation2 + $0x30] sm:$0xff]
        %v2177 = vld [vmem:[#allocation2 + $0x38] sm:$0xff]
        %v2178 = vld [vmem:[#allocation2 + $0x40] sm:$0xff]
        %v2179 = vld [vmem:[#allocation2 + $0x48] sm:$0xff]
        %v2180 = vld [vmem:[#allocation2 + $0x50] sm:$0xff]
        %v2181 = vld [vmem:[#allocation2 + $0x58] sm:$0xff]
        %v2182 = vld [vmem:[#allocation2 + $0x60] sm:$0xff]
        %v2183 = vld [vmem:[#allocation2 + $0x68] sm:$0xff]
        %v2184 = vld [vmem:[#allocation2 + $0x70] sm:$0xff]
        %v2185 = vld [vmem:[#allocation2 + $0x78] sm:$0xff]
        %v2186 = vld [vmem:[#allocation2 + $0x80] sm:$0xff]
        %v2187 = vld [vmem:[#allocation2 + $0x88] sm:$0xff]
        %v2188 = vld [vmem:[#allocation2 + $0x90] sm:$0xff]
        %v2189 = vld [vmem:[#allocation2 + $0x98] sm:$0xff]
        %v2190 = vld [vmem:[#allocation2 + $0xa0] sm:$0xff]
        %v2191 = vld [vmem:[#allocation2 + $0xa8] sm:$0xff]
        %v2192 = vld [vmem:[#allocation2 + $0xb0] sm:$0xff]
        %v2193 = vld [vmem:[#allocation2 + $0xb8] sm:$0xff]
        %v2194 = vld [vmem:[#allocation2 + $0xc0] sm:$0xff]
        %v2195 = vld [vmem:[#allocation2 + $0xc8] sm:$0xff]
        %v2196 = vld [vmem:[#allocation2 + $0xd0] sm:$0xff]
        %v2197 = vld [vmem:[#allocation2 + $0xd8] sm:$0xff]
        %v2198 = vld [vmem:[#allocation2 + $0xe0] sm:$0xff]
        %v2199 = vld [vmem:[#allocation2 + $0xe8] sm:$0xff]
        %v2200 = vld [vmem:[#allocation2 + $0xf0] sm:$0xff]
        %v2201 = vld [vmem:[#allocation2 + $0xf8] sm:$0xff]
        %s2202 = scalar_lea.vmem %s277, 16
        %v2203 = vld [vmem:[%s2202] sm:$0xf]
        %v2205 = vsel %vm385, %v2138, 0
        %v2208 = vsel %vm385, %v2139, 0
        %v2211 = vsel %vm385, %v2140, 0
        %v2214 = vsel %vm385, %v2141, 0
        %v2217 = vsel %vm385, %v2142, 0
        %v2220 = vsel %vm385, %v2143, 0
        %v2223 = vsel %vm385, %v2144, 0
        %v2226 = vsel %vm385, %v2145, 0
        %v2229 = vsel %vm385, %v2146, 0
        %v2232 = vsel %vm385, %v2147, 0
        %v2235 = vsel %vm385, %v2148, 0
        %v2238 = vsel %vm385, %v2149, 0
        %v2241 = vsel %vm385, %v2150, 0
        %v2244 = vsel %vm385, %v2151, 0
        %v2247 = vsel %vm385, %v2152, 0
        %v2250 = vsel %vm385, %v2153, 0
        %v2253 = vsel %vm385, %v2154, 0
        %v2256 = vsel %vm385, %v2155, 0
        %v2259 = vsel %vm385, %v2156, 0
        %v2262 = vsel %vm385, %v2157, 0
        %v2265 = vsel %vm385, %v2158, 0
        %v2268 = vsel %vm385, %v2159, 0
        %v2271 = vsel %vm385, %v2160, 0
        %v2274 = vsel %vm385, %v2161, 0
        %v2277 = vsel %vm385, %v2162, 0
        %v2280 = vsel %vm385, %v2163, 0
        %v2283 = vsel %vm385, %v2164, 0
        %v2286 = vsel %vm385, %v2165, 0
        %v2289 = vsel %vm385, %v2166, 0
        %v2292 = vsel %vm385, %v2167, 0
        %v2295 = vsel %vm385, %v2168, 0
        %v2298 = vsel %vm385, %v2169, 0
        %v2301 = vsel %vm482, %v2203, 0
        %2303 = vmatprep.subr.mxu0 0.0
        %2304 = vmatpush1.msra.mxu0 %v2301
        %2305 = vmatprep.subr.mxu0 0.0
        %2306 = vmatpush1.msra.mxu0 0.0
        %2307 = vmatprep.subr.mxu0 0.0
        %2308 = vmatpush1.msra.mxu0 0.0
        %2309 = vmatprep.subr.mxu0 0.0
        %2310 = vmatpush1.msra.mxu0 0.0
        %2311 = vmatprep.subr.mxu0 0.0
        %2312 = vmatpush1.msra.mxu0 0.0
        %2313 = vmatprep.subr.mxu0 0.0
        %2314 = vmatpush1.msra.mxu0 0.0
        %2315 = vmatprep.subr.mxu0 0.0
        %2316 = vmatpush1.msra.mxu0 0.0
        %2317 = vmatprep.subr.mxu0 0.0
        %2318 = vmatpush1.msra.mxu0 0.0
        %2319 = vmatprep.subr.mxu0 0.0
        %2320 = vmatpush1.msra.mxu0 0.0
        %2321 = vmatprep.subr.mxu0 0.0
        %2322 = vmatpush1.msra.mxu0 0.0
        %2323 = vmatprep.subr.mxu0 0.0
        %2324 = vmatpush1.msra.mxu0 0.0
        %2325 = vmatprep.subr.mxu0 0.0
        %2326 = vmatpush1.msra.mxu0 0.0
        %2327 = vmatprep.subr.mxu0 0.0
        %2328 = vmatpush1.msra.mxu0 0.0
        %2329 = vmatprep.subr.mxu0 0.0
        %2330 = vmatpush1.msra.mxu0 0.0
        %2331 = vmatprep.subr.mxu0 0.0
        %2332 = vmatpush1.msra.mxu0 0.0
        %2333 = vmatprep.subr.mxu0 0.0
        %2334 = vmatpush1.msra.mxu0 0.0
        %2335 = vmatprep.subr.mxu0 0.0
        %2336 = vmatpush1.msra.mxu0 0.0
        %2337 = vmatprep.subr.mxu0 0.0
        %2338 = vmatpush1.msra.mxu0 0.0
        %2339 = vmatprep.subr.mxu0 0.0
        %2340 = vmatpush1.msra.mxu0 0.0
        %2341 = vmatprep.subr.mxu0 0.0
        %2342 = vmatpush1.msra.mxu0 0.0
        %2343 = vmatprep.subr.mxu0 0.0
        %2344 = vmatpush1.msra.mxu0 0.0
        %2345 = vmatprep.subr.mxu0 0.0
        %2346 = vmatpush1.msra.mxu0 0.0
        %2347 = vmatprep.subr.mxu0 0.0
        %2348 = vmatpush1.msra.mxu0 0.0
        %2349 = vmatprep.subr.mxu0 0.0
        %2350 = vmatpush1.msra.mxu0 0.0
        %2351 = vmatprep.subr.mxu0 0.0
        %2352 = vmatpush1.msra.mxu0 0.0
        %2353 = vmatprep.subr.mxu0 0.0
        %2354 = vmatpush1.msra.mxu0 0.0
        %2355 = vmatprep.subr.mxu0 0.0
        %2356 = vmatpush1.msra.mxu0 0.0
        %2357 = vmatprep.subr.mxu0 0.0
        %2358 = vmatpush1.msra.mxu0 0.0
        %2359 = vmatprep.subr.mxu0 0.0
        %2360 = vmatpush1.msra.mxu0 0.0
        %2361 = vmatprep.subr.mxu0 0.0
        %2362 = vmatpush1.msra.mxu0 0.0
        %2363 = vmatprep.subr.mxu0 0.0
        %2364 = vmatpush1.msra.mxu0 0.0
        %2365 = vmatprep.subr.mxu0 0.0
        %2366 = vmatpush1.msra.mxu0 0.0
        %2367 = vmatprep.mubr.f32.mxu0 0.0
        %2368 = vmatmul.mubr.f32.gmra.mrb[0].mxu0 %v2205
        %v2369 = vpop.f32.mrb[0].mxu0
        %v2370 = vadd.f32 0.0, %v2369
        %v2371 = vpop.f32.mrb[0].mxu0
        %2372 = vmatprep.mubr.f32.mxu0 0.0
        %2373 = vmatmul.mubr.f32.gmra.mrb[0].mxu0 %v2208
        %v2374 = vpop.f32.mrb[0].mxu0
        %v2375 = vadd.f32 0.0, %v2374
        %v2376 = vpop.f32.mrb[0].mxu0
        %2377 = vmatprep.mubr.f32.mxu0 0.0
        %2378 = vmatmul.mubr.f32.gmra.mrb[0].mxu0 %v2211
        %v2379 = vpop.f32.mrb[0].mxu0
        %v2380 = vadd.f32 0.0, %v2379
        %v2381 = vpop.f32.mrb[0].mxu0
        %2382 = vmatprep.mubr.f32.mxu0 0.0
        %2383 = vmatmul.mubr.f32.gmra.mrb[0].mxu0 %v2214
        %v2384 = vpop.f32.mrb[0].mxu0
        %v2385 = vadd.f32 0.0, %v2384
        %v2386 = vpop.f32.mrb[0].mxu0
        %2387 = vmatprep.mubr.f32.mxu0 0.0
        %2388 = vmatmul.mubr.f32.gmra.mrb[0].mxu0 %v2217
        %v2389 = vpop.f32.mrb[0].mxu0
        %v2390 = vadd.f32 0.0, %v2389
        %v2391 = vpop.f32.mrb[0].mxu0
        %2392 = vmatprep.mubr.f32.mxu0 0.0
        %2393 = vmatmul.mubr.f32.gmra.mrb[0].mxu0 %v2220
        %v2394 = vpop.f32.mrb[0].mxu0
        %v2395 = vadd.f32 0.0, %v2394
        %v2396 = vpop.f32.mrb[0].mxu0
        %2397 = vmatprep.mubr.f32.mxu0 0.0
        %2398 = vmatmul.mubr.f32.gmra.mrb[0].mxu0 %v2223
        %v2399 = vpop.f32.mrb[0].mxu0
        %v2400 = vadd.f32 0.0, %v2399
        %v2401 = vpop.f32.mrb[0].mxu0
        %2402 = vmatprep.mubr.f32.mxu0 0.0
        %2403 = vmatmul.mubr.f32.gmra.mrb[0].mxu0 %v2226
        %v2404 = vpop.f32.mrb[0].mxu0
        %v2405 = vadd.f32 0.0, %v2404
        %v2406 = vpop.f32.mrb[0].mxu0
        %2407 = vmatprep.mubr.f32.mxu0 0.0
        %2408 = vmatmul.mubr.f32.gmra.mrb[0].mxu0 %v2229
        %v2409 = vpop.f32.mrb[0].mxu0
        %v2410 = vadd.f32 0.0, %v2409
        %v2411 = vpop.f32.mrb[0].mxu0
        %2412 = vmatprep.mubr.f32.mxu0 0.0
        %2413 = vmatmul.mubr.f32.gmra.mrb[0].mxu0 %v2232
        %v2414 = vpop.f32.mrb[0].mxu0
        %v2415 = vadd.f32 0.0, %v2414
        %v2416 = vpop.f32.mrb[0].mxu0
        %2417 = vmatprep.mubr.f32.mxu0 0.0
        %2418 = vmatmul.mubr.f32.gmra.mrb[0].mxu0 %v2235
        %v2419 = vpop.f32.mrb[0].mxu0
        %v2420 = vadd.f32 0.0, %v2419
        %v2421 = vpop.f32.mrb[0].mxu0
        %2422 = vmatprep.mubr.f32.mxu0 0.0
        %2423 = vmatmul.mubr.f32.gmra.mrb[0].mxu0 %v2238
        %v2424 = vpop.f32.mrb[0].mxu0
        %v2425 = vadd.f32 0.0, %v2424
        %v2426 = vpop.f32.mrb[0].mxu0
        %2427 = vmatprep.mubr.f32.mxu0 0.0
        %2428 = vmatmul.mubr.f32.gmra.mrb[0].mxu0 %v2241
        %v2429 = vpop.f32.mrb[0].mxu0
        %v2430 = vadd.f32 0.0, %v2429
        %v2431 = vpop.f32.mrb[0].mxu0
        %2432 = vmatprep.mubr.f32.mxu0 0.0
        %2433 = vmatmul.mubr.f32.gmra.mrb[0].mxu0 %v2244
        %v2434 = vpop.f32.mrb[0].mxu0
        %v2435 = vadd.f32 0.0, %v2434
        %v2436 = vpop.f32.mrb[0].mxu0
        %2437 = vmatprep.mubr.f32.mxu0 0.0
        %2438 = vmatmul.mubr.f32.gmra.mrb[0].mxu0 %v2247
        %v2439 = vpop.f32.mrb[0].mxu0
        %v2440 = vadd.f32 0.0, %v2439
        %v2441 = vpop.f32.mrb[0].mxu0
        %2442 = vmatprep.mubr.f32.mxu0 0.0
        %2443 = vmatmul.mubr.f32.gmra.mrb[0].mxu0 %v2250
        %v2444 = vpop.f32.mrb[0].mxu0
        %v2445 = vadd.f32 0.0, %v2444
        %v2446 = vpop.f32.mrb[0].mxu0
        %2447 = vmatprep.mubr.f32.mxu0 0.0
        %2448 = vmatmul.mubr.f32.gmra.mrb[0].mxu0 %v2253
        %v2449 = vpop.f32.mrb[0].mxu0
        %v2450 = vadd.f32 0.0, %v2449
        %v2451 = vpop.f32.mrb[0].mxu0
        %2452 = vmatprep.mubr.f32.mxu0 0.0
        %2453 = vmatmul.mubr.f32.gmra.mrb[0].mxu0 %v2256
        %v2454 = vpop.f32.mrb[0].mxu0
        %v2455 = vadd.f32 0.0, %v2454
        %v2456 = vpop.f32.mrb[0].mxu0
        %2457 = vmatprep.mubr.f32.mxu0 0.0
        %2458 = vmatmul.mubr.f32.gmra.mrb[0].mxu0 %v2259
        %v2459 = vpop.f32.mrb[0].mxu0
        %v2460 = vadd.f32 0.0, %v2459
        %v2461 = vpop.f32.mrb[0].mxu0
        %2462 = vmatprep.mubr.f32.mxu0 0.0
        %2463 = vmatmul.mubr.f32.gmra.mrb[0].mxu0 %v2262
        %v2464 = vpop.f32.mrb[0].mxu0
        %v2465 = vadd.f32 0.0, %v2464
        %v2466 = vpop.f32.mrb[0].mxu0
        %2467 = vmatprep.mubr.f32.mxu0 0.0
        %2468 = vmatmul.mubr.f32.gmra.mrb[0].mxu0 %v2265
        %v2469 = vpop.f32.mrb[0].mxu0
        %v2470 = vadd.f32 0.0, %v2469
        %v2471 = vpop.f32.mrb[0].mxu0
        %2472 = vmatprep.mubr.f32.mxu0 0.0
        %2473 = vmatmul.mubr.f32.gmra.mrb[0].mxu0 %v2268
        %v2474 = vpop.f32.mrb[0].mxu0
        %v2475 = vadd.f32 0.0, %v2474
        %v2476 = vpop.f32.mrb[0].mxu0
        %2477 = vmatprep.mubr.f32.mxu0 0.0
        %2478 = vmatmul.mubr.f32.gmra.mrb[0].mxu0 %v2271
        %v2479 = vpop.f32.mrb[0].mxu0
        %v2480 = vadd.f32 0.0, %v2479
        %v2481 = vpop.f32.mrb[0].mxu0
        %2482 = vmatprep.mubr.f32.mxu0 0.0
        %2483 = vmatmul.mubr.f32.gmra.mrb[0].mxu0 %v2274
        %v2484 = vpop.f32.mrb[0].mxu0
        %v2485 = vadd.f32 0.0, %v2484
        %v2486 = vpop.f32.mrb[0].mxu0
        %2487 = vmatprep.mubr.f32.mxu0 0.0
        %2488 = vmatmul.mubr.f32.gmra.mrb[0].mxu0 %v2277
        %v2489 = vpop.f32.mrb[0].mxu0
        %v2490 = vadd.f32 0.0, %v2489
        %v2491 = vpop.f32.mrb[0].mxu0
        %2492 = vmatprep.mubr.f32.mxu0 0.0
        %2493 = vmatmul.mubr.f32.gmra.mrb[0].mxu0 %v2280
        %v2494 = vpop.f32.mrb[0].mxu0
        %v2495 = vadd.f32 0.0, %v2494
        %v2496 = vpop.f32.mrb[0].mxu0
        %2497 = vmatprep.mubr.f32.mxu0 0.0
        %2498 = vmatmul.mubr.f32.gmra.mrb[0].mxu0 %v2283
        %v2499 = vpop.f32.mrb[0].mxu0
        %v2500 = vadd.f32 0.0, %v2499
        %v2501 = vpop.f32.mrb[0].mxu0
        %2502 = vmatprep.mubr.f32.mxu0 0.0
        %2503 = vmatmul.mubr.f32.gmra.mrb[0].mxu0 %v2286
        %v2504 = vpop.f32.mrb[0].mxu0
        %v2505 = vadd.f32 0.0, %v2504
        %v2506 = vpop.f32.mrb[0].mxu0
        %2507 = vmatprep.mubr.f32.mxu0 0.0
        %2508 = vmatmul.mubr.f32.gmra.mrb[0].mxu0 %v2289
        %v2509 = vpop.f32.mrb[0].mxu0
        %v2510 = vadd.f32 0.0, %v2509
        %v2511 = vpop.f32.mrb[0].mxu0
        %2512 = vmatprep.mubr.f32.mxu0 0.0
        %2513 = vmatmul.mubr.f32.gmra.mrb[0].mxu0 %v2292
        %v2514 = vpop.f32.mrb[0].mxu0
        %v2515 = vadd.f32 0.0, %v2514
        %v2516 = vpop.f32.mrb[0].mxu0
        %2517 = vmatprep.mubr.f32.mxu0 0.0
        %2518 = vmatmul.mubr.f32.gmra.mrb[0].mxu0 %v2295
        %v2519 = vpop.f32.mrb[0].mxu0
        %v2520 = vadd.f32 0.0, %v2519
        %v2521 = vpop.f32.mrb[0].mxu0
        %2522 = vmatprep.mubr.f32.mxu0 0.0
        %2523 = vmatmul.mubr.f32.gmra.mrb[0].mxu0 %v2298
        %v2524 = vpop.f32.mrb[0].mxu0
        %v2525 = vadd.f32 0.0, %v2524
        %v2526 = vpop.f32.mrb[0].mxu0
        %2527 = vdwg.mxu0
        %v2528 = vadd.f32 %v2170, %v2370
        %v2529 = vadd.f32 %v2171, %v2375
        %v2530 = vadd.f32 %v2172, %v2380
        %v2531 = vadd.f32 %v2173, %v2385
        %v2532 = vadd.f32 %v2174, %v2390
        %v2533 = vadd.f32 %v2175, %v2395
        %v2534 = vadd.f32 %v2176, %v2400
        %v2535 = vadd.f32 %v2177, %v2405
        %v2536 = vadd.f32 %v2178, %v2410
        %v2537 = vadd.f32 %v2179, %v2415
        %v2538 = vadd.f32 %v2180, %v2420
        %v2539 = vadd.f32 %v2181, %v2425
        %v2540 = vadd.f32 %v2182, %v2430
        %v2541 = vadd.f32 %v2183, %v2435
        %v2542 = vadd.f32 %v2184, %v2440
        %v2543 = vadd.f32 %v2185, %v2445
        %v2544 = vadd.f32 %v2186, %v2450
        %v2545 = vadd.f32 %v2187, %v2455
        %v2546 = vadd.f32 %v2188, %v2460
        %v2547 = vadd.f32 %v2189, %v2465
        %v2548 = vadd.f32 %v2190, %v2470
        %v2549 = vadd.f32 %v2191, %v2475
        %v2550 = vadd.f32 %v2192, %v2480
        %v2551 = vadd.f32 %v2193, %v2485
        %v2552 = vadd.f32 %v2194, %v2490
        %v2553 = vadd.f32 %v2195, %v2495
        %v2554 = vadd.f32 %v2196, %v2500
        %v2555 = vadd.f32 %v2197, %v2505
        %v2556 = vadd.f32 %v2198, %v2510
        %v2557 = vadd.f32 %v2199, %v2515
        %v2558 = vadd.f32 %v2200, %v2520
        %v2559 = vadd.f32 %v2201, %v2525
        %2560 = vst [vmem:[#allocation2] sm:$0xff] %v2528
        %2561 = vst [vmem:[#allocation2 + $0x8] sm:$0xff] %v2529
        %2562 = vst [vmem:[#allocation2 + $0x10] sm:$0xff] %v2530
        %2563 = vst [vmem:[#allocation2 + $0x18] sm:$0xff] %v2531
        %2564 = vst [vmem:[#allocation2 + $0x20] sm:$0xff] %v2532
        %2565 = vst [vmem:[#allocation2 + $0x28] sm:$0xff] %v2533
        %2566 = vst [vmem:[#allocation2 + $0x30] sm:$0xff] %v2534
        %2567 = vst [vmem:[#allocation2 + $0x38] sm:$0xff] %v2535
        %2568 = vst [vmem:[#allocation2 + $0x40] sm:$0xff] %v2536
        %2569 = vst [vmem:[#allocation2 + $0x48] sm:$0xff] %v2537
        %2570 = vst [vmem:[#allocation2 + $0x50] sm:$0xff] %v2538
        %2571 = vst [vmem:[#allocation2 + $0x58] sm:$0xff] %v2539
        %2572 = vst [vmem:[#allocation2 + $0x60] sm:$0xff] %v2540
        %2573 = vst [vmem:[#allocation2 + $0x68] sm:$0xff] %v2541
        %2574 = vst [vmem:[#allocation2 + $0x70] sm:$0xff] %v2542
        %2575 = vst [vmem:[#allocation2 + $0x78] sm:$0xff] %v2543
        %2576 = vst [vmem:[#allocation2 + $0x80] sm:$0xff] %v2544
        %2577 = vst [vmem:[#allocation2 + $0x88] sm:$0xff] %v2545
        %2578 = vst [vmem:[#allocation2 + $0x90] sm:$0xff] %v2546
        %2579 = vst [vmem:[#allocation2 + $0x98] sm:$0xff] %v2547
        %2580 = vst [vmem:[#allocation2 + $0xa0] sm:$0xff] %v2548
        %2581 = vst [vmem:[#allocation2 + $0xa8] sm:$0xff] %v2549
        %2582 = vst [vmem:[#allocation2 + $0xb0] sm:$0xff] %v2550
        %2583 = vst [vmem:[#allocation2 + $0xb8] sm:$0xff] %v2551
        %2584 = vst [vmem:[#allocation2 + $0xc0] sm:$0xff] %v2552
        %2585 = vst [vmem:[#allocation2 + $0xc8] sm:$0xff] %v2553
        %2586 = vst [vmem:[#allocation2 + $0xd0] sm:$0xff] %v2554
        %2587 = vst [vmem:[#allocation2 + $0xd8] sm:$0xff] %v2555
        %2588 = vst [vmem:[#allocation2 + $0xe0] sm:$0xff] %v2556
        %2589 = vst [vmem:[#allocation2 + $0xe8] sm:$0xff] %v2557
        %2590 = vst [vmem:[#allocation2 + $0xf0] sm:$0xff] %v2558
        %2591 = vst [vmem:[#allocation2 + $0xf8] sm:$0xff] %v2559
        %v2592 = vld [vmem:[%s1683 + $0x2] sm:$0xff]
        %v2593 = vld [vmem:[%s1683 + $0xa] sm:$0xff]
        %v2594 = vld [vmem:[%s1683 + $0x1a] sm:$0xff]
        %v2595 = vld [vmem:[%s1683 + $0x22] sm:$0xff]
        %v2596 = vld [vmem:[%s1683 + $0x32] sm:$0xff]
        %v2597 = vld [vmem:[%s1683 + $0x3a] sm:$0xff]
        %v2598 = vld [vmem:[%s1683 + $0x4a] sm:$0xff]
        %v2599 = vld [vmem:[%s1683 + $0x52] sm:$0xff]
        %v2600 = vld [vmem:[%s1683 + $0x62] sm:$0xff]
        %v2601 = vld [vmem:[%s1683 + $0x6a] sm:$0xff]
        %v2602 = vld [vmem:[%s1683 + $0x7a] sm:$0xff]
        %v2603 = vld [vmem:[%s1683 + $0x82] sm:$0xff]
        %v2604 = vld [vmem:[%s1683 + $0x92] sm:$0xff]
        %v2605 = vld [vmem:[%s1683 + $0x9a] sm:$0xff]
        %v2606 = vld [vmem:[%s1683 + $0xaa] sm:$0xff]
        %v2607 = vld [vmem:[%s1683 + $0xb2] sm:$0xff]
        %v2608 = vld [vmem:[%s1683 + $0xc2] sm:$0xff]
        %v2609 = vld [vmem:[%s1683 + $0xca] sm:$0xff]
        %v2610 = vld [vmem:[%s1683 + $0xda] sm:$0xff]
        %v2611 = vld [vmem:[%s1683 + $0xe2] sm:$0xff]
        %v2612 = vld [vmem:[%s1683 + $0xf2] sm:$0xff]
        %v2613 = vld [vmem:[%s1683 + $0xfa] sm:$0xff]
        %v2614 = vld [vmem:[%s1683 + $0x10a] sm:$0xff]
        %v2615 = vld [vmem:[%s1683 + $0x112] sm:$0xff]
        %v2616 = vld [vmem:[%s1683 + $0x122] sm:$0xff]
        %v2617 = vld [vmem:[%s1683 + $0x12a] sm:$0xff]
        %v2618 = vld [vmem:[%s1683 + $0x13a] sm:$0xff]
        %v2619 = vld [vmem:[%s1683 + $0x142] sm:$0xff]
        %v2620 = vld [vmem:[%s1683 + $0x152] sm:$0xff]
        %v2621 = vld [vmem:[%s1683 + $0x15a] sm:$0xff]
        %v2622 = vld [vmem:[%s1683 + $0x16a] sm:$0xff]
        %v2623 = vld [vmem:[%s1683 + $0x172] sm:$0xff]
        %v2624 = vld [vmem:[#allocation2] sm:$0xff]
        %v2625 = vld [vmem:[#allocation2 + $0x8] sm:$0xff]
        %v2626 = vld [vmem:[#allocation2 + $0x10] sm:$0xff]
        %v2627 = vld [vmem:[#allocation2 + $0x18] sm:$0xff]
        %v2628 = vld [vmem:[#allocation2 + $0x20] sm:$0xff]
        %v2629 = vld [vmem:[#allocation2 + $0x28] sm:$0xff]
        %v2630 = vld [vmem:[#allocation2 + $0x30] sm:$0xff]
        %v2631 = vld [vmem:[#allocation2 + $0x38] sm:$0xff]
        %v2632 = vld [vmem:[#allocation2 + $0x40] sm:$0xff]
        %v2633 = vld [vmem:[#allocation2 + $0x48] sm:$0xff]
        %v2634 = vld [vmem:[#allocation2 + $0x50] sm:$0xff]
        %v2635 = vld [vmem:[#allocation2 + $0x58] sm:$0xff]
        %v2636 = vld [vmem:[#allocation2 + $0x60] sm:$0xff]
        %v2637 = vld [vmem:[#allocation2 + $0x68] sm:$0xff]
        %v2638 = vld [vmem:[#allocation2 + $0x70] sm:$0xff]
        %v2639 = vld [vmem:[#allocation2 + $0x78] sm:$0xff]
        %v2640 = vld [vmem:[#allocation2 + $0x80] sm:$0xff]
        %v2641 = vld [vmem:[#allocation2 + $0x88] sm:$0xff]
        %v2642 = vld [vmem:[#allocation2 + $0x90] sm:$0xff]
        %v2643 = vld [vmem:[#allocation2 + $0x98] sm:$0xff]
        %v2644 = vld [vmem:[#allocation2 + $0xa0] sm:$0xff]
        %v2645 = vld [vmem:[#allocation2 + $0xa8] sm:$0xff]
        %v2646 = vld [vmem:[#allocation2 + $0xb0] sm:$0xff]
        %v2647 = vld [vmem:[#allocation2 + $0xb8] sm:$0xff]
        %v2648 = vld [vmem:[#allocation2 + $0xc0] sm:$0xff]
        %v2649 = vld [vmem:[#allocation2 + $0xc8] sm:$0xff]
        %v2650 = vld [vmem:[#allocation2 + $0xd0] sm:$0xff]
        %v2651 = vld [vmem:[#allocation2 + $0xd8] sm:$0xff]
        %v2652 = vld [vmem:[#allocation2 + $0xe0] sm:$0xff]
        %v2653 = vld [vmem:[#allocation2 + $0xe8] sm:$0xff]
        %v2654 = vld [vmem:[#allocation2 + $0xf0] sm:$0xff]
        %v2655 = vld [vmem:[#allocation2 + $0xf8] sm:$0xff]
        %s2656 = scalar_lea.vmem %s277, 20
        %v2657 = vld [vmem:[%s2656] sm:$0xf]
        %v2659 = vsel %vm385, %v2592, 0
        %v2662 = vsel %vm385, %v2593, 0
        %v2665 = vsel %vm385, %v2594, 0
        %v2668 = vsel %vm385, %v2595, 0
        %v2671 = vsel %vm385, %v2596, 0
        %v2674 = vsel %vm385, %v2597, 0
        %v2677 = vsel %vm385, %v2598, 0
        %v2680 = vsel %vm385, %v2599, 0
        %v2683 = vsel %vm385, %v2600, 0
        %v2686 = vsel %vm385, %v2601, 0
        %v2689 = vsel %vm385, %v2602, 0
        %v2692 = vsel %vm385, %v2603, 0
        %v2695 = vsel %vm385, %v2604, 0
        %v2698 = vsel %vm385, %v2605, 0
        %v2701 = vsel %vm385, %v2606, 0
        %v2704 = vsel %vm385, %v2607, 0
        %v2707 = vsel %vm385, %v2608, 0
        %v2710 = vsel %vm385, %v2609, 0
        %v2713 = vsel %vm385, %v2610, 0
        %v2716 = vsel %vm385, %v2611, 0
        %v2719 = vsel %vm385, %v2612, 0
        %v2722 = vsel %vm385, %v2613, 0
        %v2725 = vsel %vm385, %v2614, 0
        %v2728 = vsel %vm385, %v2615, 0
        %v2731 = vsel %vm385, %v2616, 0
        %v2734 = vsel %vm385, %v2617, 0
        %v2737 = vsel %vm385, %v2618, 0
        %v2740 = vsel %vm385, %v2619, 0
        %v2743 = vsel %vm385, %v2620, 0
        %v2746 = vsel %vm385, %v2621, 0
        %v2749 = vsel %vm385, %v2622, 0
        %v2752 = vsel %vm385, %v2623, 0
        %v2755 = vsel %vm482, %v2657, 0
        %2757 = vmatprep.subr.mxu0 0.0
        %2758 = vmatpush1.msra.mxu0 %v2755
        %2759 = vmatprep.subr.mxu0 0.0
        %2760 = vmatpush1.msra.mxu0 0.0
        %2761 = vmatprep.subr.mxu0 0.0
        %2762 = vmatpush1.msra.mxu0 0.0
        %2763 = vmatprep.subr.mxu0 0.0
        %2764 = vmatpush1.msra.mxu0 0.0
        %2765 = vmatprep.subr.mxu0 0.0
        %2766 = vmatpush1.msra.mxu0 0.0
        %2767 = vmatprep.subr.mxu0 0.0
        %2768 = vmatpush1.msra.mxu0 0.0
        %2769 = vmatprep.subr.mxu0 0.0
        %2770 = vmatpush1.msra.mxu0 0.0
        %2771 = vmatprep.subr.mxu0 0.0
        %2772 = vmatpush1.msra.mxu0 0.0
        %2773 = vmatprep.subr.mxu0 0.0
        %2774 = vmatpush1.msra.mxu0 0.0
        %2775 = vmatprep.subr.mxu0 0.0
        %2776 = vmatpush1.msra.mxu0 0.0
        %2777 = vmatprep.subr.mxu0 0.0
        %2778 = vmatpush1.msra.mxu0 0.0
        %2779 = vmatprep.subr.mxu0 0.0
        %2780 = vmatpush1.msra.mxu0 0.0
        %2781 = vmatprep.subr.mxu0 0.0
        %2782 = vmatpush1.msra.mxu0 0.0
        %2783 = vmatprep.subr.mxu0 0.0
        %2784 = vmatpush1.msra.mxu0 0.0
        %2785 = vmatprep.subr.mxu0 0.0
        %2786 = vmatpush1.msra.mxu0 0.0
        %2787 = vmatprep.subr.mxu0 0.0
        %2788 = vmatpush1.msra.mxu0 0.0
        %2789 = vmatprep.subr.mxu0 0.0
        %2790 = vmatpush1.msra.mxu0 0.0
        %2791 = vmatprep.subr.mxu0 0.0
        %2792 = vmatpush1.msra.mxu0 0.0
        %2793 = vmatprep.subr.mxu0 0.0
        %2794 = vmatpush1.msra.mxu0 0.0
        %2795 = vmatprep.subr.mxu0 0.0
        %2796 = vmatpush1.msra.mxu0 0.0
        %2797 = vmatprep.subr.mxu0 0.0
        %2798 = vmatpush1.msra.mxu0 0.0
        %2799 = vmatprep.subr.mxu0 0.0
        %2800 = vmatpush1.msra.mxu0 0.0
        %2801 = vmatprep.subr.mxu0 0.0
        %2802 = vmatpush1.msra.mxu0 0.0
        %2803 = vmatprep.subr.mxu0 0.0
        %2804 = vmatpush1.msra.mxu0 0.0
        %2805 = vmatprep.subr.mxu0 0.0
        %2806 = vmatpush1.msra.mxu0 0.0
        %2807 = vmatprep.subr.mxu0 0.0
        %2808 = vmatpush1.msra.mxu0 0.0
        %2809 = vmatprep.subr.mxu0 0.0
        %2810 = vmatpush1.msra.mxu0 0.0
        %2811 = vmatprep.subr.mxu0 0.0
        %2812 = vmatpush1.msra.mxu0 0.0
        %2813 = vmatprep.subr.mxu0 0.0
        %2814 = vmatpush1.msra.mxu0 0.0
        %2815 = vmatprep.subr.mxu0 0.0
        %2816 = vmatpush1.msra.mxu0 0.0
        %2817 = vmatprep.subr.mxu0 0.0
        %2818 = vmatpush1.msra.mxu0 0.0
        %2819 = vmatprep.subr.mxu0 0.0
        %2820 = vmatpush1.msra.mxu0 0.0
        %2821 = vmatprep.mubr.f32.mxu0 0.0
        %2822 = vmatmul.mubr.f32.gmra.mrb[0].mxu0 %v2659
        %v2823 = vpop.f32.mrb[0].mxu0
        %v2824 = vadd.f32 0.0, %v2823
        %v2825 = vpop.f32.mrb[0].mxu0
        %2826 = vmatprep.mubr.f32.mxu0 0.0
        %2827 = vmatmul.mubr.f32.gmra.mrb[0].mxu0 %v2662
        %v2828 = vpop.f32.mrb[0].mxu0
        %v2829 = vadd.f32 0.0, %v2828
        %v2830 = vpop.f32.mrb[0].mxu0
        %2831 = vmatprep.mubr.f32.mxu0 0.0
        %2832 = vmatmul.mubr.f32.gmra.mrb[0].mxu0 %v2665
        %v2833 = vpop.f32.mrb[0].mxu0
        %v2834 = vadd.f32 0.0, %v2833
        %v2835 = vpop.f32.mrb[0].mxu0
        %2836 = vmatprep.mubr.f32.mxu0 0.0
        %2837 = vmatmul.mubr.f32.gmra.mrb[0].mxu0 %v2668
        %v2838 = vpop.f32.mrb[0].mxu0
        %v2839 = vadd.f32 0.0, %v2838
        %v2840 = vpop.f32.mrb[0].mxu0
        %2841 = vmatprep.mubr.f32.mxu0 0.0
        %2842 = vmatmul.mubr.f32.gmra.mrb[0].mxu0 %v2671
        %v2843 = vpop.f32.mrb[0].mxu0
        %v2844 = vadd.f32 0.0, %v2843
        %v2845 = vpop.f32.mrb[0].mxu0
        %2846 = vmatprep.mubr.f32.mxu0 0.0
        %2847 = vmatmul.mubr.f32.gmra.mrb[0].mxu0 %v2674
        %v2848 = vpop.f32.mrb[0].mxu0
        %v2849 = vadd.f32 0.0, %v2848
        %v2850 = vpop.f32.mrb[0].mxu0
        %2851 = vmatprep.mubr.f32.mxu0 0.0
        %2852 = vmatmul.mubr.f32.gmra.mrb[0].mxu0 %v2677
        %v2853 = vpop.f32.mrb[0].mxu0
        %v2854 = vadd.f32 0.0, %v2853
        %v2855 = vpop.f32.mrb[0].mxu0
        %2856 = vmatprep.mubr.f32.mxu0 0.0
        %2857 = vmatmul.mubr.f32.gmra.mrb[0].mxu0 %v2680
        %v2858 = vpop.f32.mrb[0].mxu0
        %v2859 = vadd.f32 0.0, %v2858
        %v2860 = vpop.f32.mrb[0].mxu0
        %2861 = vmatprep.mubr.f32.mxu0 0.0
        %2862 = vmatmul.mubr.f32.gmra.mrb[0].mxu0 %v2683
        %v2863 = vpop.f32.mrb[0].mxu0
        %v2864 = vadd.f32 0.0, %v2863
        %v2865 = vpop.f32.mrb[0].mxu0
        %2866 = vmatprep.mubr.f32.mxu0 0.0
        %2867 = vmatmul.mubr.f32.gmra.mrb[0].mxu0 %v2686
        %v2868 = vpop.f32.mrb[0].mxu0
        %v2869 = vadd.f32 0.0, %v2868
        %v2870 = vpop.f32.mrb[0].mxu0
        %2871 = vmatprep.mubr.f32.mxu0 0.0
        %2872 = vmatmul.mubr.f32.gmra.mrb[0].mxu0 %v2689
        %v2873 = vpop.f32.mrb[0].mxu0
        %v2874 = vadd.f32 0.0, %v2873
        %v2875 = vpop.f32.mrb[0].mxu0
        %2876 = vmatprep.mubr.f32.mxu0 0.0
        %2877 = vmatmul.mubr.f32.gmra.mrb[0].mxu0 %v2692
        %v2878 = vpop.f32.mrb[0].mxu0
        %v2879 = vadd.f32 0.0, %v2878
        %v2880 = vpop.f32.mrb[0].mxu0
        %2881 = vmatprep.mubr.f32.mxu0 0.0
        %2882 = vmatmul.mubr.f32.gmra.mrb[0].mxu0 %v2695
        %v2883 = vpop.f32.mrb[0].mxu0
        %v2884 = vadd.f32 0.0, %v2883
        %v2885 = vpop.f32.mrb[0].mxu0
        %2886 = vmatprep.mubr.f32.mxu0 0.0
        %2887 = vmatmul.mubr.f32.gmra.mrb[0].mxu0 %v2698
        %v2888 = vpop.f32.mrb[0].mxu0
        %v2889 = vadd.f32 0.0, %v2888
        %v2890 = vpop.f32.mrb[0].mxu0
        %2891 = vmatprep.mubr.f32.mxu0 0.0
        %2892 = vmatmul.mubr.f32.gmra.mrb[0].mxu0 %v2701
        %v2893 = vpop.f32.mrb[0].mxu0
        %v2894 = vadd.f32 0.0, %v2893
        %v2895 = vpop.f32.mrb[0].mxu0
        %2896 = vmatprep.mubr.f32.mxu0 0.0
        %2897 = vmatmul.mubr.f32.gmra.mrb[0].mxu0 %v2704
        %v2898 = vpop.f32.mrb[0].mxu0
        %v2899 = vadd.f32 0.0, %v2898
        %v2900 = vpop.f32.mrb[0].mxu0
        %2901 = vmatprep.mubr.f32.mxu0 0.0
        %2902 = vmatmul.mubr.f32.gmra.mrb[0].mxu0 %v2707
        %v2903 = vpop.f32.mrb[0].mxu0
        %v2904 = vadd.f32 0.0, %v2903
        %v2905 = vpop.f32.mrb[0].mxu0
        %2906 = vmatprep.mubr.f32.mxu0 0.0
        %2907 = vmatmul.mubr.f32.gmra.mrb[0].mxu0 %v2710
        %v2908 = vpop.f32.mrb[0].mxu0
        %v2909 = vadd.f32 0.0, %v2908
        %v2910 = vpop.f32.mrb[0].mxu0
        %2911 = vmatprep.mubr.f32.mxu0 0.0
        %2912 = vmatmul.mubr.f32.gmra.mrb[0].mxu0 %v2713
        %v2913 = vpop.f32.mrb[0].mxu0
        %v2914 = vadd.f32 0.0, %v2913
        %v2915 = vpop.f32.mrb[0].mxu0
        %2916 = vmatprep.mubr.f32.mxu0 0.0
        %2917 = vmatmul.mubr.f32.gmra.mrb[0].mxu0 %v2716
        %v2918 = vpop.f32.mrb[0].mxu0
        %v2919 = vadd.f32 0.0, %v2918
        %v2920 = vpop.f32.mrb[0].mxu0
        %2921 = vmatprep.mubr.f32.mxu0 0.0
        %2922 = vmatmul.mubr.f32.gmra.mrb[0].mxu0 %v2719
        %v2923 = vpop.f32.mrb[0].mxu0
        %v2924 = vadd.f32 0.0, %v2923
        %v2925 = vpop.f32.mrb[0].mxu0
        %2926 = vmatprep.mubr.f32.mxu0 0.0
        %2927 = vmatmul.mubr.f32.gmra.mrb[0].mxu0 %v2722
        %v2928 = vpop.f32.mrb[0].mxu0
        %v2929 = vadd.f32 0.0, %v2928
        %v2930 = vpop.f32.mrb[0].mxu0
        %2931 = vmatprep.mubr.f32.mxu0 0.0
        %2932 = vmatmul.mubr.f32.gmra.mrb[0].mxu0 %v2725
        %v2933 = vpop.f32.mrb[0].mxu0
        %v2934 = vadd.f32 0.0, %v2933
        %v2935 = vpop.f32.mrb[0].mxu0
        %2936 = vmatprep.mubr.f32.mxu0 0.0
        %2937 = vmatmul.mubr.f32.gmra.mrb[0].mxu0 %v2728
        %v2938 = vpop.f32.mrb[0].mxu0
        %v2939 = vadd.f32 0.0, %v2938
        %v2940 = vpop.f32.mrb[0].mxu0
        %2941 = vmatprep.mubr.f32.mxu0 0.0
        %2942 = vmatmul.mubr.f32.gmra.mrb[0].mxu0 %v2731
        %v2943 = vpop.f32.mrb[0].mxu0
        %v2944 = vadd.f32 0.0, %v2943
        %v2945 = vpop.f32.mrb[0].mxu0
        %2946 = vmatprep.mubr.f32.mxu0 0.0
        %2947 = vmatmul.mubr.f32.gmra.mrb[0].mxu0 %v2734
        %v2948 = vpop.f32.mrb[0].mxu0
        %v2949 = vadd.f32 0.0, %v2948
        %v2950 = vpop.f32.mrb[0].mxu0
        %2951 = vmatprep.mubr.f32.mxu0 0.0
        %2952 = vmatmul.mubr.f32.gmra.mrb[0].mxu0 %v2737
        %v2953 = vpop.f32.mrb[0].mxu0
        %v2954 = vadd.f32 0.0, %v2953
        %v2955 = vpop.f32.mrb[0].mxu0
        %2956 = vmatprep.mubr.f32.mxu0 0.0
        %2957 = vmatmul.mubr.f32.gmra.mrb[0].mxu0 %v2740
        %v2958 = vpop.f32.mrb[0].mxu0
        %v2959 = vadd.f32 0.0, %v2958
        %v2960 = vpop.f32.mrb[0].mxu0
        %2961 = vmatprep.mubr.f32.mxu0 0.0
        %2962 = vmatmul.mubr.f32.gmra.mrb[0].mxu0 %v2743
        %v2963 = vpop.f32.mrb[0].mxu0
        %v2964 = vadd.f32 0.0, %v2963
        %v2965 = vpop.f32.mrb[0].mxu0
        %2966 = vmatprep.mubr.f32.mxu0 0.0
        %2967 = vmatmul.mubr.f32.gmra.mrb[0].mxu0 %v2746
        %v2968 = vpop.f32.mrb[0].mxu0
        %v2969 = vadd.f32 0.0, %v2968
        %v2970 = vpop.f32.mrb[0].mxu0
        %2971 = vmatprep.mubr.f32.mxu0 0.0
        %2972 = vmatmul.mubr.f32.gmra.mrb[0].mxu0 %v2749
        %v2973 = vpop.f32.mrb[0].mxu0
        %v2974 = vadd.f32 0.0, %v2973
        %v2975 = vpop.f32.mrb[0].mxu0
        %2976 = vmatprep.mubr.f32.mxu0 0.0
        %2977 = vmatmul.mubr.f32.gmra.mrb[0].mxu0 %v2752
        %v2978 = vpop.f32.mrb[0].mxu0
        %v2979 = vadd.f32 0.0, %v2978
        %v2980 = vpop.f32.mrb[0].mxu0
        %2981 = vdwg.mxu0
        %v2982 = vadd.f32 %v2624, %v2824
        %v2983 = vadd.f32 %v2625, %v2829
        %v2984 = vadd.f32 %v2626, %v2834
        %v2985 = vadd.f32 %v2627, %v2839
        %v2986 = vadd.f32 %v2628, %v2844
        %v2987 = vadd.f32 %v2629, %v2849
        %v2988 = vadd.f32 %v2630, %v2854
        %v2989 = vadd.f32 %v2631, %v2859
        %v2990 = vadd.f32 %v2632, %v2864
        %v2991 = vadd.f32 %v2633, %v2869
        %v2992 = vadd.f32 %v2634, %v2874
        %v2993 = vadd.f32 %v2635, %v2879
        %v2994 = vadd.f32 %v2636, %v2884
        %v2995 = vadd.f32 %v2637, %v2889
        %v2996 = vadd.f32 %v2638, %v2894
        %v2997 = vadd.f32 %v2639, %v2899
        %v2998 = vadd.f32 %v2640, %v2904
        %v2999 = vadd.f32 %v2641, %v2909
        %v3000 = vadd.f32 %v2642, %v2914
        %v3001 = vadd.f32 %v2643, %v2919
        %v3002 = vadd.f32 %v2644, %v2924
        %v3003 = vadd.f32 %v2645, %v2929
        %v3004 = vadd.f32 %v2646, %v2934
        %v3005 = vadd.f32 %v2647, %v2939
        %v3006 = vadd.f32 %v2648, %v2944
        %v3007 = vadd.f32 %v2649, %v2949
        %v3008 = vadd.f32 %v2650, %v2954
        %v3009 = vadd.f32 %v2651, %v2959
        %v3010 = vadd.f32 %v2652, %v2964
        %v3011 = vadd.f32 %v2653, %v2969
        %v3012 = vadd.f32 %v2654, %v2974
        %v3013 = vadd.f32 %v2655, %v2979
        %3014 = vst [vmem:[#allocation2] sm:$0xff] %v2982
        %3015 = vst [vmem:[#allocation2 + $0x8] sm:$0xff] %v2983
        %3016 = vst [vmem:[#allocation2 + $0x10] sm:$0xff] %v2984
        %3017 = vst [vmem:[#allocation2 + $0x18] sm:$0xff] %v2985
        %3018 = vst [vmem:[#allocation2 + $0x20] sm:$0xff] %v2986
        %3019 = vst [vmem:[#allocation2 + $0x28] sm:$0xff] %v2987
        %3020 = vst [vmem:[#allocation2 + $0x30] sm:$0xff] %v2988
        %3021 = vst [vmem:[#allocation2 + $0x38] sm:$0xff] %v2989
        %3022 = vst [vmem:[#allocation2 + $0x40] sm:$0xff] %v2990
        %3023 = vst [vmem:[#allocation2 + $0x48] sm:$0xff] %v2991
        %3024 = vst [vmem:[#allocation2 + $0x50] sm:$0xff] %v2992
        %3025 = vst [vmem:[#allocation2 + $0x58] sm:$0xff] %v2993
        %3026 = vst [vmem:[#allocation2 + $0x60] sm:$0xff] %v2994
        %3027 = vst [vmem:[#allocation2 + $0x68] sm:$0xff] %v2995
        %3028 = vst [vmem:[#allocation2 + $0x70] sm:$0xff] %v2996
        %3029 = vst [vmem:[#allocation2 + $0x78] sm:$0xff] %v2997
        %3030 = vst [vmem:[#allocation2 + $0x80] sm:$0xff] %v2998
        %3031 = vst [vmem:[#allocation2 + $0x88] sm:$0xff] %v2999
        %3032 = vst [vmem:[#allocation2 + $0x90] sm:$0xff] %v3000
        %3033 = vst [vmem:[#allocation2 + $0x98] sm:$0xff] %v3001
        %3034 = vst [vmem:[#allocation2 + $0xa0] sm:$0xff] %v3002
        %3035 = vst [vmem:[#allocation2 + $0xa8] sm:$0xff] %v3003
        %3036 = vst [vmem:[#allocation2 + $0xb0] sm:$0xff] %v3004
        %3037 = vst [vmem:[#allocation2 + $0xb8] sm:$0xff] %v3005
        %3038 = vst [vmem:[#allocation2 + $0xc0] sm:$0xff] %v3006
        %3039 = vst [vmem:[#allocation2 + $0xc8] sm:$0xff] %v3007
        %3040 = vst [vmem:[#allocation2 + $0xd0] sm:$0xff] %v3008
        %3041 = vst [vmem:[#allocation2 + $0xd8] sm:$0xff] %v3009
        %3042 = vst [vmem:[#allocation2 + $0xe0] sm:$0xff] %v3010
        %3043 = vst [vmem:[#allocation2 + $0xe8] sm:$0xff] %v3011
        %3044 = vst [vmem:[#allocation2 + $0xf0] sm:$0xff] %v3012
        %3045 = vst [vmem:[#allocation2 + $0xf8] sm:$0xff] %v3013
        %s3046 = scalar_lea.vmem %s270, 48
        %v3047 = vld [vmem:[%s3046] sm:$0xff]
        %v3048 = vld [vmem:[%s3046 + $0x8] sm:$0xff]
        %v3049 = vld [vmem:[%s3046 + $0x18] sm:$0xff]
        %v3050 = vld [vmem:[%s3046 + $0x20] sm:$0xff]
        %v3051 = vld [vmem:[%s3046 + $0x30] sm:$0xff]
        %v3052 = vld [vmem:[%s3046 + $0x38] sm:$0xff]
        %v3053 = vld [vmem:[%s3046 + $0x48] sm:$0xff]
        %v3054 = vld [vmem:[%s3046 + $0x50] sm:$0xff]
        %v3055 = vld [vmem:[%s3046 + $0x60] sm:$0xff]
        %v3056 = vld [vmem:[%s3046 + $0x68] sm:$0xff]
        %v3057 = vld [vmem:[%s3046 + $0x78] sm:$0xff]
        %v3058 = vld [vmem:[%s3046 + $0x80] sm:$0xff]
        %v3059 = vld [vmem:[%s3046 + $0x90] sm:$0xff]
        %v3060 = vld [vmem:[%s3046 + $0x98] sm:$0xff]
        %v3061 = vld [vmem:[%s3046 + $0xa8] sm:$0xff]
        %v3062 = vld [vmem:[%s3046 + $0xb0] sm:$0xff]
        %v3063 = vld [vmem:[%s3046 + $0xc0] sm:$0xff]
        %v3064 = vld [vmem:[%s3046 + $0xc8] sm:$0xff]
        %v3065 = vld [vmem:[%s3046 + $0xd8] sm:$0xff]
        %v3066 = vld [vmem:[%s3046 + $0xe0] sm:$0xff]
        %v3067 = vld [vmem:[%s3046 + $0xf0] sm:$0xff]
        %v3068 = vld [vmem:[%s3046 + $0xf8] sm:$0xff]
        %v3069 = vld [vmem:[%s3046 + $0x108] sm:$0xff]
        %v3070 = vld [vmem:[%s3046 + $0x110] sm:$0xff]
        %v3071 = vld [vmem:[%s3046 + $0x120] sm:$0xff]
        %v3072 = vld [vmem:[%s3046 + $0x128] sm:$0xff]
        %v3073 = vld [vmem:[%s3046 + $0x138] sm:$0xff]
        %v3074 = vld [vmem:[%s3046 + $0x140] sm:$0xff]
        %v3075 = vld [vmem:[%s3046 + $0x150] sm:$0xff]
        %v3076 = vld [vmem:[%s3046 + $0x158] sm:$0xff]
        %v3077 = vld [vmem:[%s3046 + $0x168] sm:$0xff]
        %v3078 = vld [vmem:[%s3046 + $0x170] sm:$0xff]
        %v3079 = vld [vmem:[#allocation2] sm:$0xff]
        %v3080 = vld [vmem:[#allocation2 + $0x8] sm:$0xff]
        %v3081 = vld [vmem:[#allocation2 + $0x10] sm:$0xff]
        %v3082 = vld [vmem:[#allocation2 + $0x18] sm:$0xff]
        %v3083 = vld [vmem:[#allocation2 + $0x20] sm:$0xff]
        %v3084 = vld [vmem:[#allocation2 + $0x28] sm:$0xff]
        %v3085 = vld [vmem:[#allocation2 + $0x30] sm:$0xff]
        %v3086 = vld [vmem:[#allocation2 + $0x38] sm:$0xff]
        %v3087 = vld [vmem:[#allocation2 + $0x40] sm:$0xff]
        %v3088 = vld [vmem:[#allocation2 + $0x48] sm:$0xff]
        %v3089 = vld [vmem:[#allocation2 + $0x50] sm:$0xff]
        %v3090 = vld [vmem:[#allocation2 + $0x58] sm:$0xff]
        %v3091 = vld [vmem:[#allocation2 + $0x60] sm:$0xff]
        %v3092 = vld [vmem:[#allocation2 + $0x68] sm:$0xff]
        %v3093 = vld [vmem:[#allocation2 + $0x70] sm:$0xff]
        %v3094 = vld [vmem:[#allocation2 + $0x78] sm:$0xff]
        %v3095 = vld [vmem:[#allocation2 + $0x80] sm:$0xff]
        %v3096 = vld [vmem:[#allocation2 + $0x88] sm:$0xff]
        %v3097 = vld [vmem:[#allocation2 + $0x90] sm:$0xff]
        %v3098 = vld [vmem:[#allocation2 + $0x98] sm:$0xff]
        %v3099 = vld [vmem:[#allocation2 + $0xa0] sm:$0xff]
        %v3100 = vld [vmem:[#allocation2 + $0xa8] sm:$0xff]
        %v3101 = vld [vmem:[#allocation2 + $0xb0] sm:$0xff]
        %v3102 = vld [vmem:[#allocation2 + $0xb8] sm:$0xff]
        %v3103 = vld [vmem:[#allocation2 + $0xc0] sm:$0xff]
        %v3104 = vld [vmem:[#allocation2 + $0xc8] sm:$0xff]
        %v3105 = vld [vmem:[#allocation2 + $0xd0] sm:$0xff]
        %v3106 = vld [vmem:[#allocation2 + $0xd8] sm:$0xff]
        %v3107 = vld [vmem:[#allocation2 + $0xe0] sm:$0xff]
        %v3108 = vld [vmem:[#allocation2 + $0xe8] sm:$0xff]
        %v3109 = vld [vmem:[#allocation2 + $0xf0] sm:$0xff]
        %v3110 = vld [vmem:[#allocation2 + $0xf8] sm:$0xff]
        %s3111 = scalar_lea.vmem %s277, 24
        %v3112 = vld [vmem:[%s3111] sm:$0xf]
        %v3114 = vsel %vm385, %v3047, 0
        %v3117 = vsel %vm385, %v3048, 0
        %v3120 = vsel %vm385, %v3049, 0
        %v3123 = vsel %vm385, %v3050, 0
        %v3126 = vsel %vm385, %v3051, 0
        %v3129 = vsel %vm385, %v3052, 0
        %v3132 = vsel %vm385, %v3053, 0
        %v3135 = vsel %vm385, %v3054, 0
        %v3138 = vsel %vm385, %v3055, 0
        %v3141 = vsel %vm385, %v3056, 0
        %v3144 = vsel %vm385, %v3057, 0
        %v3147 = vsel %vm385, %v3058, 0
        %v3150 = vsel %vm385, %v3059, 0
        %v3153 = vsel %vm385, %v3060, 0
        %v3156 = vsel %vm385, %v3061, 0
        %v3159 = vsel %vm385, %v3062, 0
        %v3162 = vsel %vm385, %v3063, 0
        %v3165 = vsel %vm385, %v3064, 0
        %v3168 = vsel %vm385, %v3065, 0
        %v3171 = vsel %vm385, %v3066, 0
        %v3174 = vsel %vm385, %v3067, 0
        %v3177 = vsel %vm385, %v3068, 0
        %v3180 = vsel %vm385, %v3069, 0
        %v3183 = vsel %vm385, %v3070, 0
        %v3186 = vsel %vm385, %v3071, 0
        %v3189 = vsel %vm385, %v3072, 0
        %v3192 = vsel %vm385, %v3073, 0
        %v3195 = vsel %vm385, %v3074, 0
        %v3198 = vsel %vm385, %v3075, 0
        %v3201 = vsel %vm385, %v3076, 0
        %v3204 = vsel %vm385, %v3077, 0
        %v3207 = vsel %vm385, %v3078, 0
        %v3210 = vsel %vm482, %v3112, 0
        %3212 = vmatprep.subr.mxu0 0.0
        %3213 = vmatpush1.msra.mxu0 %v3210
        %3214 = vmatprep.subr.mxu0 0.0
        %3215 = vmatpush1.msra.mxu0 0.0
        %3216 = vmatprep.subr.mxu0 0.0
        %3217 = vmatpush1.msra.mxu0 0.0
        %3218 = vmatprep.subr.mxu0 0.0
        %3219 = vmatpush1.msra.mxu0 0.0
        %3220 = vmatprep.subr.mxu0 0.0
        %3221 = vmatpush1.msra.mxu0 0.0
        %3222 = vmatprep.subr.mxu0 0.0
        %3223 = vmatpush1.msra.mxu0 0.0
        %3224 = vmatprep.subr.mxu0 0.0
        %3225 = vmatpush1.msra.mxu0 0.0
        %3226 = vmatprep.subr.mxu0 0.0
        %3227 = vmatpush1.msra.mxu0 0.0
        %3228 = vmatprep.subr.mxu0 0.0
        %3229 = vmatpush1.msra.mxu0 0.0
        %3230 = vmatprep.subr.mxu0 0.0
        %3231 = vmatpush1.msra.mxu0 0.0
        %3232 = vmatprep.subr.mxu0 0.0
        %3233 = vmatpush1.msra.mxu0 0.0
        %3234 = vmatprep.subr.mxu0 0.0
        %3235 = vmatpush1.msra.mxu0 0.0
        %3236 = vmatprep.subr.mxu0 0.0
        %3237 = vmatpush1.msra.mxu0 0.0
        %3238 = vmatprep.subr.mxu0 0.0
        %3239 = vmatpush1.msra.mxu0 0.0
        %3240 = vmatprep.subr.mxu0 0.0
        %3241 = vmatpush1.msra.mxu0 0.0
        %3242 = vmatprep.subr.mxu0 0.0
        %3243 = vmatpush1.msra.mxu0 0.0
        %3244 = vmatprep.subr.mxu0 0.0
        %3245 = vmatpush1.msra.mxu0 0.0
        %3246 = vmatprep.subr.mxu0 0.0
        %3247 = vmatpush1.msra.mxu0 0.0
        %3248 = vmatprep.subr.mxu0 0.0
        %3249 = vmatpush1.msra.mxu0 0.0
        %3250 = vmatprep.subr.mxu0 0.0
        %3251 = vmatpush1.msra.mxu0 0.0
        %3252 = vmatprep.subr.mxu0 0.0
        %3253 = vmatpush1.msra.mxu0 0.0
        %3254 = vmatprep.subr.mxu0 0.0
        %3255 = vmatpush1.msra.mxu0 0.0
        %3256 = vmatprep.subr.mxu0 0.0
        %3257 = vmatpush1.msra.mxu0 0.0
        %3258 = vmatprep.subr.mxu0 0.0
        %3259 = vmatpush1.msra.mxu0 0.0
        %3260 = vmatprep.subr.mxu0 0.0
        %3261 = vmatpush1.msra.mxu0 0.0
        %3262 = vmatprep.subr.mxu0 0.0
        %3263 = vmatpush1.msra.mxu0 0.0
        %3264 = vmatprep.subr.mxu0 0.0
        %3265 = vmatpush1.msra.mxu0 0.0
        %3266 = vmatprep.subr.mxu0 0.0
        %3267 = vmatpush1.msra.mxu0 0.0
        %3268 = vmatprep.subr.mxu0 0.0
        %3269 = vmatpush1.msra.mxu0 0.0
        %3270 = vmatprep.subr.mxu0 0.0
        %3271 = vmatpush1.msra.mxu0 0.0
        %3272 = vmatprep.subr.mxu0 0.0
        %3273 = vmatpush1.msra.mxu0 0.0
        %3274 = vmatprep.subr.mxu0 0.0
        %3275 = vmatpush1.msra.mxu0 0.0
        %3276 = vmatprep.mubr.f32.mxu0 0.0
        %3277 = vmatmul.mubr.f32.gmra.mrb[0].mxu0 %v3114
        %v3278 = vpop.f32.mrb[0].mxu0
        %v3279 = vadd.f32 0.0, %v3278
        %v3280 = vpop.f32.mrb[0].mxu0
        %3281 = vmatprep.mubr.f32.mxu0 0.0
        %3282 = vmatmul.mubr.f32.gmra.mrb[0].mxu0 %v3117
        %v3283 = vpop.f32.mrb[0].mxu0
        %v3284 = vadd.f32 0.0, %v3283
        %v3285 = vpop.f32.mrb[0].mxu0
        %3286 = vmatprep.mubr.f32.mxu0 0.0
        %3287 = vmatmul.mubr.f32.gmra.mrb[0].mxu0 %v3120
        %v3288 = vpop.f32.mrb[0].mxu0
        %v3289 = vadd.f32 0.0, %v3288
        %v3290 = vpop.f32.mrb[0].mxu0
        %3291 = vmatprep.mubr.f32.mxu0 0.0
        %3292 = vmatmul.mubr.f32.gmra.mrb[0].mxu0 %v3123
        %v3293 = vpop.f32.mrb[0].mxu0
        %v3294 = vadd.f32 0.0, %v3293
        %v3295 = vpop.f32.mrb[0].mxu0
        %3296 = vmatprep.mubr.f32.mxu0 0.0
        %3297 = vmatmul.mubr.f32.gmra.mrb[0].mxu0 %v3126
        %v3298 = vpop.f32.mrb[0].mxu0
        %v3299 = vadd.f32 0.0, %v3298
        %v3300 = vpop.f32.mrb[0].mxu0
        %3301 = vmatprep.mubr.f32.mxu0 0.0
        %3302 = vmatmul.mubr.f32.gmra.mrb[0].mxu0 %v3129
        %v3303 = vpop.f32.mrb[0].mxu0
        %v3304 = vadd.f32 0.0, %v3303
        %v3305 = vpop.f32.mrb[0].mxu0
        %3306 = vmatprep.mubr.f32.mxu0 0.0
        %3307 = vmatmul.mubr.f32.gmra.mrb[0].mxu0 %v3132
        %v3308 = vpop.f32.mrb[0].mxu0
        %v3309 = vadd.f32 0.0, %v3308
        %v3310 = vpop.f32.mrb[0].mxu0
        %3311 = vmatprep.mubr.f32.mxu0 0.0
        %3312 = vmatmul.mubr.f32.gmra.mrb[0].mxu0 %v3135
        %v3313 = vpop.f32.mrb[0].mxu0
        %v3314 = vadd.f32 0.0, %v3313
        %v3315 = vpop.f32.mrb[0].mxu0
        %3316 = vmatprep.mubr.f32.mxu0 0.0
        %3317 = vmatmul.mubr.f32.gmra.mrb[0].mxu0 %v3138
        %v3318 = vpop.f32.mrb[0].mxu0
        %v3319 = vadd.f32 0.0, %v3318
        %v3320 = vpop.f32.mrb[0].mxu0
        %3321 = vmatprep.mubr.f32.mxu0 0.0
        %3322 = vmatmul.mubr.f32.gmra.mrb[0].mxu0 %v3141
        %v3323 = vpop.f32.mrb[0].mxu0
        %v3324 = vadd.f32 0.0, %v3323
        %v3325 = vpop.f32.mrb[0].mxu0
        %3326 = vmatprep.mubr.f32.mxu0 0.0
        %3327 = vmatmul.mubr.f32.gmra.mrb[0].mxu0 %v3144
        %v3328 = vpop.f32.mrb[0].mxu0
        %v3329 = vadd.f32 0.0, %v3328
        %v3330 = vpop.f32.mrb[0].mxu0
        %3331 = vmatprep.mubr.f32.mxu0 0.0
        %3332 = vmatmul.mubr.f32.gmra.mrb[0].mxu0 %v3147
        %v3333 = vpop.f32.mrb[0].mxu0
        %v3334 = vadd.f32 0.0, %v3333
        %v3335 = vpop.f32.mrb[0].mxu0
        %3336 = vmatprep.mubr.f32.mxu0 0.0
        %3337 = vmatmul.mubr.f32.gmra.mrb[0].mxu0 %v3150
        %v3338 = vpop.f32.mrb[0].mxu0
        %v3339 = vadd.f32 0.0, %v3338
        %v3340 = vpop.f32.mrb[0].mxu0
        %3341 = vmatprep.mubr.f32.mxu0 0.0
        %3342 = vmatmul.mubr.f32.gmra.mrb[0].mxu0 %v3153
        %v3343 = vpop.f32.mrb[0].mxu0
        %v3344 = vadd.f32 0.0, %v3343
        %v3345 = vpop.f32.mrb[0].mxu0
        %3346 = vmatprep.mubr.f32.mxu0 0.0
        %3347 = vmatmul.mubr.f32.gmra.mrb[0].mxu0 %v3156
        %v3348 = vpop.f32.mrb[0].mxu0
        %v3349 = vadd.f32 0.0, %v3348
        %v3350 = vpop.f32.mrb[0].mxu0
        %3351 = vmatprep.mubr.f32.mxu0 0.0
        %3352 = vmatmul.mubr.f32.gmra.mrb[0].mxu0 %v3159
        %v3353 = vpop.f32.mrb[0].mxu0
        %v3354 = vadd.f32 0.0, %v3353
        %v3355 = vpop.f32.mrb[0].mxu0
        %3356 = vmatprep.mubr.f32.mxu0 0.0
        %3357 = vmatmul.mubr.f32.gmra.mrb[0].mxu0 %v3162
        %v3358 = vpop.f32.mrb[0].mxu0
        %v3359 = vadd.f32 0.0, %v3358
        %v3360 = vpop.f32.mrb[0].mxu0
        %3361 = vmatprep.mubr.f32.mxu0 0.0
        %3362 = vmatmul.mubr.f32.gmra.mrb[0].mxu0 %v3165
        %v3363 = vpop.f32.mrb[0].mxu0
        %v3364 = vadd.f32 0.0, %v3363
        %v3365 = vpop.f32.mrb[0].mxu0
        %3366 = vmatprep.mubr.f32.mxu0 0.0
        %3367 = vmatmul.mubr.f32.gmra.mrb[0].mxu0 %v3168
        %v3368 = vpop.f32.mrb[0].mxu0
        %v3369 = vadd.f32 0.0, %v3368
        %v3370 = vpop.f32.mrb[0].mxu0
        %3371 = vmatprep.mubr.f32.mxu0 0.0
        %3372 = vmatmul.mubr.f32.gmra.mrb[0].mxu0 %v3171
        %v3373 = vpop.f32.mrb[0].mxu0
        %v3374 = vadd.f32 0.0, %v3373
        %v3375 = vpop.f32.mrb[0].mxu0
        %3376 = vmatprep.mubr.f32.mxu0 0.0
        %3377 = vmatmul.mubr.f32.gmra.mrb[0].mxu0 %v3174
        %v3378 = vpop.f32.mrb[0].mxu0
        %v3379 = vadd.f32 0.0, %v3378
        %v3380 = vpop.f32.mrb[0].mxu0
        %3381 = vmatprep.mubr.f32.mxu0 0.0
        %3382 = vmatmul.mubr.f32.gmra.mrb[0].mxu0 %v3177
        %v3383 = vpop.f32.mrb[0].mxu0
        %v3384 = vadd.f32 0.0, %v3383
        %v3385 = vpop.f32.mrb[0].mxu0
        %3386 = vmatprep.mubr.f32.mxu0 0.0
        %3387 = vmatmul.mubr.f32.gmra.mrb[0].mxu0 %v3180
        %v3388 = vpop.f32.mrb[0].mxu0
        %v3389 = vadd.f32 0.0, %v3388
        %v3390 = vpop.f32.mrb[0].mxu0
        %3391 = vmatprep.mubr.f32.mxu0 0.0
        %3392 = vmatmul.mubr.f32.gmra.mrb[0].mxu0 %v3183
        %v3393 = vpop.f32.mrb[0].mxu0
        %v3394 = vadd.f32 0.0, %v3393
        %v3395 = vpop.f32.mrb[0].mxu0
        %3396 = vmatprep.mubr.f32.mxu0 0.0
        %3397 = vmatmul.mubr.f32.gmra.mrb[0].mxu0 %v3186
        %v3398 = vpop.f32.mrb[0].mxu0
        %v3399 = vadd.f32 0.0, %v3398
        %v3400 = vpop.f32.mrb[0].mxu0
        %3401 = vmatprep.mubr.f32.mxu0 0.0
        %3402 = vmatmul.mubr.f32.gmra.mrb[0].mxu0 %v3189
        %v3403 = vpop.f32.mrb[0].mxu0
        %v3404 = vadd.f32 0.0, %v3403
        %v3405 = vpop.f32.mrb[0].mxu0
        %3406 = vmatprep.mubr.f32.mxu0 0.0
        %3407 = vmatmul.mubr.f32.gmra.mrb[0].mxu0 %v3192
        %v3408 = vpop.f32.mrb[0].mxu0
        %v3409 = vadd.f32 0.0, %v3408
        %v3410 = vpop.f32.mrb[0].mxu0
        %3411 = vmatprep.mubr.f32.mxu0 0.0
        %3412 = vmatmul.mubr.f32.gmra.mrb[0].mxu0 %v3195
        %v3413 = vpop.f32.mrb[0].mxu0
        %v3414 = vadd.f32 0.0, %v3413
        %v3415 = vpop.f32.mrb[0].mxu0
        %3416 = vmatprep.mubr.f32.mxu0 0.0
        %3417 = vmatmul.mubr.f32.gmra.mrb[0].mxu0 %v3198
        %v3418 = vpop.f32.mrb[0].mxu0
        %v3419 = vadd.f32 0.0, %v3418
        %v3420 = vpop.f32.mrb[0].mxu0
        %3421 = vmatprep.mubr.f32.mxu0 0.0
        %3422 = vmatmul.mubr.f32.gmra.mrb[0].mxu0 %v3201
        %v3423 = vpop.f32.mrb[0].mxu0
        %v3424 = vadd.f32 0.0, %v3423
        %v3425 = vpop.f32.mrb[0].mxu0
        %3426 = vmatprep.mubr.f32.mxu0 0.0
        %3427 = vmatmul.mubr.f32.gmra.mrb[0].mxu0 %v3204
        %v3428 = vpop.f32.mrb[0].mxu0
        %v3429 = vadd.f32 0.0, %v3428
        %v3430 = vpop.f32.mrb[0].mxu0
        %3431 = vmatprep.mubr.f32.mxu0 0.0
        %3432 = vmatmul.mubr.f32.gmra.mrb[0].mxu0 %v3207
        %v3433 = vpop.f32.mrb[0].mxu0
        %v3434 = vadd.f32 0.0, %v3433
        %v3435 = vpop.f32.mrb[0].mxu0
        %3436 = vdwg.mxu0
        %v3437 = vadd.f32 %v3079, %v3279
        %v3438 = vadd.f32 %v3080, %v3284
        %v3439 = vadd.f32 %v3081, %v3289
        %v3440 = vadd.f32 %v3082, %v3294
        %v3441 = vadd.f32 %v3083, %v3299
        %v3442 = vadd.f32 %v3084, %v3304
        %v3443 = vadd.f32 %v3085, %v3309
        %v3444 = vadd.f32 %v3086, %v3314
        %v3445 = vadd.f32 %v3087, %v3319
        %v3446 = vadd.f32 %v3088, %v3324
        %v3447 = vadd.f32 %v3089, %v3329
        %v3448 = vadd.f32 %v3090, %v3334
        %v3449 = vadd.f32 %v3091, %v3339
        %v3450 = vadd.f32 %v3092, %v3344
        %v3451 = vadd.f32 %v3093, %v3349
        %v3452 = vadd.f32 %v3094, %v3354
        %v3453 = vadd.f32 %v3095, %v3359
        %v3454 = vadd.f32 %v3096, %v3364
        %v3455 = vadd.f32 %v3097, %v3369
        %v3456 = vadd.f32 %v3098, %v3374
        %v3457 = vadd.f32 %v3099, %v3379
        %v3458 = vadd.f32 %v3100, %v3384
        %v3459 = vadd.f32 %v3101, %v3389
        %v3460 = vadd.f32 %v3102, %v3394
        %v3461 = vadd.f32 %v3103, %v3399
        %v3462 = vadd.f32 %v3104, %v3404
        %v3463 = vadd.f32 %v3105, %v3409
        %v3464 = vadd.f32 %v3106, %v3414
        %v3465 = vadd.f32 %v3107, %v3419
        %v3466 = vadd.f32 %v3108, %v3424
        %v3467 = vadd.f32 %v3109, %v3429
        %v3468 = vadd.f32 %v3110, %v3434
        %3469 = vst [vmem:[#allocation2] sm:$0xff] %v3437
        %3470 = vst [vmem:[#allocation2 + $0x8] sm:$0xff] %v3438
        %3471 = vst [vmem:[#allocation2 + $0x10] sm:$0xff] %v3439
        %3472 = vst [vmem:[#allocation2 + $0x18] sm:$0xff] %v3440
        %3473 = vst [vmem:[#allocation2 + $0x20] sm:$0xff] %v3441
        %3474 = vst [vmem:[#allocation2 + $0x28] sm:$0xff] %v3442
        %3475 = vst [vmem:[#allocation2 + $0x30] sm:$0xff] %v3443
        %3476 = vst [vmem:[#allocation2 + $0x38] sm:$0xff] %v3444
        %3477 = vst [vmem:[#allocation2 + $0x40] sm:$0xff] %v3445
        %3478 = vst [vmem:[#allocation2 + $0x48] sm:$0xff] %v3446
        %3479 = vst [vmem:[#allocation2 + $0x50] sm:$0xff] %v3447
        %3480 = vst [vmem:[#allocation2 + $0x58] sm:$0xff] %v3448
        %3481 = vst [vmem:[#allocation2 + $0x60] sm:$0xff] %v3449
        %3482 = vst [vmem:[#allocation2 + $0x68] sm:$0xff] %v3450
        %3483 = vst [vmem:[#allocation2 + $0x70] sm:$0xff] %v3451
        %3484 = vst [vmem:[#allocation2 + $0x78] sm:$0xff] %v3452
        %3485 = vst [vmem:[#allocation2 + $0x80] sm:$0xff] %v3453
        %3486 = vst [vmem:[#allocation2 + $0x88] sm:$0xff] %v3454
        %3487 = vst [vmem:[#allocation2 + $0x90] sm:$0xff] %v3455
        %3488 = vst [vmem:[#allocation2 + $0x98] sm:$0xff] %v3456
        %3489 = vst [vmem:[#allocation2 + $0xa0] sm:$0xff] %v3457
        %3490 = vst [vmem:[#allocation2 + $0xa8] sm:$0xff] %v3458
        %3491 = vst [vmem:[#allocation2 + $0xb0] sm:$0xff] %v3459
        %3492 = vst [vmem:[#allocation2 + $0xb8] sm:$0xff] %v3460
        %3493 = vst [vmem:[#allocation2 + $0xc0] sm:$0xff] %v3461
        %3494 = vst [vmem:[#allocation2 + $0xc8] sm:$0xff] %v3462
        %3495 = vst [vmem:[#allocation2 + $0xd0] sm:$0xff] %v3463
        %3496 = vst [vmem:[#allocation2 + $0xd8] sm:$0xff] %v3464
        %3497 = vst [vmem:[#allocation2 + $0xe0] sm:$0xff] %v3465
        %3498 = vst [vmem:[#allocation2 + $0xe8] sm:$0xff] %v3466
        %3499 = vst [vmem:[#allocation2 + $0xf0] sm:$0xff] %v3467
        %3500 = vst [vmem:[#allocation2 + $0xf8] sm:$0xff] %v3468
        %v3501 = vld [vmem:[%s3046 + $0x1] sm:$0xff]
        %v3502 = vld [vmem:[%s3046 + $0x9] sm:$0xff]
        %v3503 = vld [vmem:[%s3046 + $0x19] sm:$0xff]
        %v3504 = vld [vmem:[%s3046 + $0x21] sm:$0xff]
        %v3505 = vld [vmem:[%s3046 + $0x31] sm:$0xff]
        %v3506 = vld [vmem:[%s3046 + $0x39] sm:$0xff]
        %v3507 = vld [vmem:[%s3046 + $0x49] sm:$0xff]
        %v3508 = vld [vmem:[%s3046 + $0x51] sm:$0xff]
        %v3509 = vld [vmem:[%s3046 + $0x61] sm:$0xff]
        %v3510 = vld [vmem:[%s3046 + $0x69] sm:$0xff]
        %v3511 = vld [vmem:[%s3046 + $0x79] sm:$0xff]
        %v3512 = vld [vmem:[%s3046 + $0x81] sm:$0xff]
        %v3513 = vld [vmem:[%s3046 + $0x91] sm:$0xff]
        %v3514 = vld [vmem:[%s3046 + $0x99] sm:$0xff]
        %v3515 = vld [vmem:[%s3046 + $0xa9] sm:$0xff]
        %v3516 = vld [vmem:[%s3046 + $0xb1] sm:$0xff]
        %v3517 = vld [vmem:[%s3046 + $0xc1] sm:$0xff]
        %v3518 = vld [vmem:[%s3046 + $0xc9] sm:$0xff]
        %v3519 = vld [vmem:[%s3046 + $0xd9] sm:$0xff]
        %v3520 = vld [vmem:[%s3046 + $0xe1] sm:$0xff]
        %v3521 = vld [vmem:[%s3046 + $0xf1] sm:$0xff]
        %v3522 = vld [vmem:[%s3046 + $0xf9] sm:$0xff]
        %v3523 = vld [vmem:[%s3046 + $0x109] sm:$0xff]
        %v3524 = vld [vmem:[%s3046 + $0x111] sm:$0xff]
        %v3525 = vld [vmem:[%s3046 + $0x121] sm:$0xff]
        %v3526 = vld [vmem:[%s3046 + $0x129] sm:$0xff]
        %v3527 = vld [vmem:[%s3046 + $0x139] sm:$0xff]
        %v3528 = vld [vmem:[%s3046 + $0x141] sm:$0xff]
        %v3529 = vld [vmem:[%s3046 + $0x151] sm:$0xff]
        %v3530 = vld [vmem:[%s3046 + $0x159] sm:$0xff]
        %v3531 = vld [vmem:[%s3046 + $0x169] sm:$0xff]
        %v3532 = vld [vmem:[%s3046 + $0x171] sm:$0xff]
        %v3533 = vld [vmem:[#allocation2] sm:$0xff]
        %v3534 = vld [vmem:[#allocation2 + $0x8] sm:$0xff]
        %v3535 = vld [vmem:[#allocation2 + $0x10] sm:$0xff]
        %v3536 = vld [vmem:[#allocation2 + $0x18] sm:$0xff]
        %v3537 = vld [vmem:[#allocation2 + $0x20] sm:$0xff]
        %v3538 = vld [vmem:[#allocation2 + $0x28] sm:$0xff]
        %v3539 = vld [vmem:[#allocation2 + $0x30] sm:$0xff]
        %v3540 = vld [vmem:[#allocation2 + $0x38] sm:$0xff]
        %v3541 = vld [vmem:[#allocation2 + $0x40] sm:$0xff]
        %v3542 = vld [vmem:[#allocation2 + $0x48] sm:$0xff]
        %v3543 = vld [vmem:[#allocation2 + $0x50] sm:$0xff]
        %v3544 = vld [vmem:[#allocation2 + $0x58] sm:$0xff]
        %v3545 = vld [vmem:[#allocation2 + $0x60] sm:$0xff]
        %v3546 = vld [vmem:[#allocation2 + $0x68] sm:$0xff]
        %v3547 = vld [vmem:[#allocation2 + $0x70] sm:$0xff]
        %v3548 = vld [vmem:[#allocation2 + $0x78] sm:$0xff]
        %v3549 = vld [vmem:[#allocation2 + $0x80] sm:$0xff]
        %v3550 = vld [vmem:[#allocation2 + $0x88] sm:$0xff]
        %v3551 = vld [vmem:[#allocation2 + $0x90] sm:$0xff]
        %v3552 = vld [vmem:[#allocation2 + $0x98] sm:$0xff]
        %v3553 = vld [vmem:[#allocation2 + $0xa0] sm:$0xff]
        %v3554 = vld [vmem:[#allocation2 + $0xa8] sm:$0xff]
        %v3555 = vld [vmem:[#allocation2 + $0xb0] sm:$0xff]
        %v3556 = vld [vmem:[#allocation2 + $0xb8] sm:$0xff]
        %v3557 = vld [vmem:[#allocation2 + $0xc0] sm:$0xff]
        %v3558 = vld [vmem:[#allocation2 + $0xc8] sm:$0xff]
        %v3559 = vld [vmem:[#allocation2 + $0xd0] sm:$0xff]
        %v3560 = vld [vmem:[#allocation2 + $0xd8] sm:$0xff]
        %v3561 = vld [vmem:[#allocation2 + $0xe0] sm:$0xff]
        %v3562 = vld [vmem:[#allocation2 + $0xe8] sm:$0xff]
        %v3563 = vld [vmem:[#allocation2 + $0xf0] sm:$0xff]
        %v3564 = vld [vmem:[#allocation2 + $0xf8] sm:$0xff]
        %s3565 = scalar_lea.vmem %s277, 28
        %v3566 = vld [vmem:[%s3565] sm:$0xf]
        %v3568 = vsel %vm385, %v3501, 0
        %v3571 = vsel %vm385, %v3502, 0
        %v3574 = vsel %vm385, %v3503, 0
        %v3577 = vsel %vm385, %v3504, 0
        %v3580 = vsel %vm385, %v3505, 0
        %v3583 = vsel %vm385, %v3506, 0
        %v3586 = vsel %vm385, %v3507, 0
        %v3589 = vsel %vm385, %v3508, 0
        %v3592 = vsel %vm385, %v3509, 0
        %v3595 = vsel %vm385, %v3510, 0
        %v3598 = vsel %vm385, %v3511, 0
        %v3601 = vsel %vm385, %v3512, 0
        %v3604 = vsel %vm385, %v3513, 0
        %v3607 = vsel %vm385, %v3514, 0
        %v3610 = vsel %vm385, %v3515, 0
        %v3613 = vsel %vm385, %v3516, 0
        %v3616 = vsel %vm385, %v3517, 0
        %v3619 = vsel %vm385, %v3518, 0
        %v3622 = vsel %vm385, %v3519, 0
        %v3625 = vsel %vm385, %v3520, 0
        %v3628 = vsel %vm385, %v3521, 0
        %v3631 = vsel %vm385, %v3522, 0
        %v3634 = vsel %vm385, %v3523, 0
        %v3637 = vsel %vm385, %v3524, 0
        %v3640 = vsel %vm385, %v3525, 0
        %v3643 = vsel %vm385, %v3526, 0
        %v3646 = vsel %vm385, %v3527, 0
        %v3649 = vsel %vm385, %v3528, 0
        %v3652 = vsel %vm385, %v3529, 0
        %v3655 = vsel %vm385, %v3530, 0
        %v3658 = vsel %vm385, %v3531, 0
        %v3661 = vsel %vm385, %v3532, 0
        %v3664 = vsel %vm482, %v3566, 0
        %3666 = vmatprep.subr.mxu0 0.0
        %3667 = vmatpush1.msra.mxu0 %v3664
        %3668 = vmatprep.subr.mxu0 0.0
        %3669 = vmatpush1.msra.mxu0 0.0
        %3670 = vmatprep.subr.mxu0 0.0
        %3671 = vmatpush1.msra.mxu0 0.0
        %3672 = vmatprep.subr.mxu0 0.0
        %3673 = vmatpush1.msra.mxu0 0.0
        %3674 = vmatprep.subr.mxu0 0.0
        %3675 = vmatpush1.msra.mxu0 0.0
        %3676 = vmatprep.subr.mxu0 0.0
        %3677 = vmatpush1.msra.mxu0 0.0
        %3678 = vmatprep.subr.mxu0 0.0
        %3679 = vmatpush1.msra.mxu0 0.0
        %3680 = vmatprep.subr.mxu0 0.0
        %3681 = vmatpush1.msra.mxu0 0.0
        %3682 = vmatprep.subr.mxu0 0.0
        %3683 = vmatpush1.msra.mxu0 0.0
        %3684 = vmatprep.subr.mxu0 0.0
        %3685 = vmatpush1.msra.mxu0 0.0
        %3686 = vmatprep.subr.mxu0 0.0
        %3687 = vmatpush1.msra.mxu0 0.0
        %3688 = vmatprep.subr.mxu0 0.0
        %3689 = vmatpush1.msra.mxu0 0.0
        %3690 = vmatprep.subr.mxu0 0.0
        %3691 = vmatpush1.msra.mxu0 0.0
        %3692 = vmatprep.subr.mxu0 0.0
        %3693 = vmatpush1.msra.mxu0 0.0
        %3694 = vmatprep.subr.mxu0 0.0
        %3695 = vmatpush1.msra.mxu0 0.0
        %3696 = vmatprep.subr.mxu0 0.0
        %3697 = vmatpush1.msra.mxu0 0.0
        %3698 = vmatprep.subr.mxu0 0.0
        %3699 = vmatpush1.msra.mxu0 0.0
        %3700 = vmatprep.subr.mxu0 0.0
        %3701 = vmatpush1.msra.mxu0 0.0
        %3702 = vmatprep.subr.mxu0 0.0
        %3703 = vmatpush1.msra.mxu0 0.0
        %3704 = vmatprep.subr.mxu0 0.0
        %3705 = vmatpush1.msra.mxu0 0.0
        %3706 = vmatprep.subr.mxu0 0.0
        %3707 = vmatpush1.msra.mxu0 0.0
        %3708 = vmatprep.subr.mxu0 0.0
        %3709 = vmatpush1.msra.mxu0 0.0
        %3710 = vmatprep.subr.mxu0 0.0
        %3711 = vmatpush1.msra.mxu0 0.0
        %3712 = vmatprep.subr.mxu0 0.0
        %3713 = vmatpush1.msra.mxu0 0.0
        %3714 = vmatprep.subr.mxu0 0.0
        %3715 = vmatpush1.msra.mxu0 0.0
        %3716 = vmatprep.subr.mxu0 0.0
        %3717 = vmatpush1.msra.mxu0 0.0
        %3718 = vmatprep.subr.mxu0 0.0
        %3719 = vmatpush1.msra.mxu0 0.0
        %3720 = vmatprep.subr.mxu0 0.0
        %3721 = vmatpush1.msra.mxu0 0.0
        %3722 = vmatprep.subr.mxu0 0.0
        %3723 = vmatpush1.msra.mxu0 0.0
        %3724 = vmatprep.subr.mxu0 0.0
        %3725 = vmatpush1.msra.mxu0 0.0
        %3726 = vmatprep.subr.mxu0 0.0
        %3727 = vmatpush1.msra.mxu0 0.0
        %3728 = vmatprep.subr.mxu0 0.0
        %3729 = vmatpush1.msra.mxu0 0.0
        %3730 = vmatprep.mubr.f32.mxu0 0.0
        %3731 = vmatmul.mubr.f32.gmra.mrb[0].mxu0 %v3568
        %v3732 = vpop.f32.mrb[0].mxu0
        %v3733 = vadd.f32 0.0, %v3732
        %v3734 = vpop.f32.mrb[0].mxu0
        %3735 = vmatprep.mubr.f32.mxu0 0.0
        %3736 = vmatmul.mubr.f32.gmra.mrb[0].mxu0 %v3571
        %v3737 = vpop.f32.mrb[0].mxu0
        %v3738 = vadd.f32 0.0, %v3737
        %v3739 = vpop.f32.mrb[0].mxu0
        %3740 = vmatprep.mubr.f32.mxu0 0.0
        %3741 = vmatmul.mubr.f32.gmra.mrb[0].mxu0 %v3574
        %v3742 = vpop.f32.mrb[0].mxu0
        %v3743 = vadd.f32 0.0, %v3742
        %v3744 = vpop.f32.mrb[0].mxu0
        %3745 = vmatprep.mubr.f32.mxu0 0.0
        %3746 = vmatmul.mubr.f32.gmra.mrb[0].mxu0 %v3577
        %v3747 = vpop.f32.mrb[0].mxu0
        %v3748 = vadd.f32 0.0, %v3747
        %v3749 = vpop.f32.mrb[0].mxu0
        %3750 = vmatprep.mubr.f32.mxu0 0.0
        %3751 = vmatmul.mubr.f32.gmra.mrb[0].mxu0 %v3580
        %v3752 = vpop.f32.mrb[0].mxu0
        %v3753 = vadd.f32 0.0, %v3752
        %v3754 = vpop.f32.mrb[0].mxu0
        %3755 = vmatprep.mubr.f32.mxu0 0.0
        %3756 = vmatmul.mubr.f32.gmra.mrb[0].mxu0 %v3583
        %v3757 = vpop.f32.mrb[0].mxu0
        %v3758 = vadd.f32 0.0, %v3757
        %v3759 = vpop.f32.mrb[0].mxu0
        %3760 = vmatprep.mubr.f32.mxu0 0.0
        %3761 = vmatmul.mubr.f32.gmra.mrb[0].mxu0 %v3586
        %v3762 = vpop.f32.mrb[0].mxu0
        %v3763 = vadd.f32 0.0, %v3762
        %v3764 = vpop.f32.mrb[0].mxu0
        %3765 = vmatprep.mubr.f32.mxu0 0.0
        %3766 = vmatmul.mubr.f32.gmra.mrb[0].mxu0 %v3589
        %v3767 = vpop.f32.mrb[0].mxu0
        %v3768 = vadd.f32 0.0, %v3767
        %v3769 = vpop.f32.mrb[0].mxu0
        %3770 = vmatprep.mubr.f32.mxu0 0.0
        %3771 = vmatmul.mubr.f32.gmra.mrb[0].mxu0 %v3592
        %v3772 = vpop.f32.mrb[0].mxu0
        %v3773 = vadd.f32 0.0, %v3772
        %v3774 = vpop.f32.mrb[0].mxu0
        %3775 = vmatprep.mubr.f32.mxu0 0.0
        %3776 = vmatmul.mubr.f32.gmra.mrb[0].mxu0 %v3595
        %v3777 = vpop.f32.mrb[0].mxu0
        %v3778 = vadd.f32 0.0, %v3777
        %v3779 = vpop.f32.mrb[0].mxu0
        %3780 = vmatprep.mubr.f32.mxu0 0.0
        %3781 = vmatmul.mubr.f32.gmra.mrb[0].mxu0 %v3598
        %v3782 = vpop.f32.mrb[0].mxu0
        %v3783 = vadd.f32 0.0, %v3782
        %v3784 = vpop.f32.mrb[0].mxu0
        %3785 = vmatprep.mubr.f32.mxu0 0.0
        %3786 = vmatmul.mubr.f32.gmra.mrb[0].mxu0 %v3601
        %v3787 = vpop.f32.mrb[0].mxu0
        %v3788 = vadd.f32 0.0, %v3787
        %v3789 = vpop.f32.mrb[0].mxu0
        %3790 = vmatprep.mubr.f32.mxu0 0.0
        %3791 = vmatmul.mubr.f32.gmra.mrb[0].mxu0 %v3604
        %v3792 = vpop.f32.mrb[0].mxu0
        %v3793 = vadd.f32 0.0, %v3792
        %v3794 = vpop.f32.mrb[0].mxu0
        %3795 = vmatprep.mubr.f32.mxu0 0.0
        %3796 = vmatmul.mubr.f32.gmra.mrb[0].mxu0 %v3607
        %v3797 = vpop.f32.mrb[0].mxu0
        %v3798 = vadd.f32 0.0, %v3797
        %v3799 = vpop.f32.mrb[0].mxu0
        %3800 = vmatprep.mubr.f32.mxu0 0.0
        %3801 = vmatmul.mubr.f32.gmra.mrb[0].mxu0 %v3610
        %v3802 = vpop.f32.mrb[0].mxu0
        %v3803 = vadd.f32 0.0, %v3802
        %v3804 = vpop.f32.mrb[0].mxu0
        %3805 = vmatprep.mubr.f32.mxu0 0.0
        %3806 = vmatmul.mubr.f32.gmra.mrb[0].mxu0 %v3613
        %v3807 = vpop.f32.mrb[0].mxu0
        %v3808 = vadd.f32 0.0, %v3807
        %v3809 = vpop.f32.mrb[0].mxu0
        %3810 = vmatprep.mubr.f32.mxu0 0.0
        %3811 = vmatmul.mubr.f32.gmra.mrb[0].mxu0 %v3616
        %v3812 = vpop.f32.mrb[0].mxu0
        %v3813 = vadd.f32 0.0, %v3812
        %v3814 = vpop.f32.mrb[0].mxu0
        %3815 = vmatprep.mubr.f32.mxu0 0.0
        %3816 = vmatmul.mubr.f32.gmra.mrb[0].mxu0 %v3619
        %v3817 = vpop.f32.mrb[0].mxu0
        %v3818 = vadd.f32 0.0, %v3817
        %v3819 = vpop.f32.mrb[0].mxu0
        %3820 = vmatprep.mubr.f32.mxu0 0.0
        %3821 = vmatmul.mubr.f32.gmra.mrb[0].mxu0 %v3622
        %v3822 = vpop.f32.mrb[0].mxu0
        %v3823 = vadd.f32 0.0, %v3822
        %v3824 = vpop.f32.mrb[0].mxu0
        %3825 = vmatprep.mubr.f32.mxu0 0.0
        %3826 = vmatmul.mubr.f32.gmra.mrb[0].mxu0 %v3625
        %v3827 = vpop.f32.mrb[0].mxu0
        %v3828 = vadd.f32 0.0, %v3827
        %v3829 = vpop.f32.mrb[0].mxu0
        %3830 = vmatprep.mubr.f32.mxu0 0.0
        %3831 = vmatmul.mubr.f32.gmra.mrb[0].mxu0 %v3628
        %v3832 = vpop.f32.mrb[0].mxu0
        %v3833 = vadd.f32 0.0, %v3832
        %v3834 = vpop.f32.mrb[0].mxu0
        %3835 = vmatprep.mubr.f32.mxu0 0.0
        %3836 = vmatmul.mubr.f32.gmra.mrb[0].mxu0 %v3631
        %v3837 = vpop.f32.mrb[0].mxu0
        %v3838 = vadd.f32 0.0, %v3837
        %v3839 = vpop.f32.mrb[0].mxu0
        %3840 = vmatprep.mubr.f32.mxu0 0.0
        %3841 = vmatmul.mubr.f32.gmra.mrb[0].mxu0 %v3634
        %v3842 = vpop.f32.mrb[0].mxu0
        %v3843 = vadd.f32 0.0, %v3842
        %v3844 = vpop.f32.mrb[0].mxu0
        %3845 = vmatprep.mubr.f32.mxu0 0.0
        %3846 = vmatmul.mubr.f32.gmra.mrb[0].mxu0 %v3637
        %v3847 = vpop.f32.mrb[0].mxu0
        %v3848 = vadd.f32 0.0, %v3847
        %v3849 = vpop.f32.mrb[0].mxu0
        %3850 = vmatprep.mubr.f32.mxu0 0.0
        %3851 = vmatmul.mubr.f32.gmra.mrb[0].mxu0 %v3640
        %v3852 = vpop.f32.mrb[0].mxu0
        %v3853 = vadd.f32 0.0, %v3852
        %v3854 = vpop.f32.mrb[0].mxu0
        %3855 = vmatprep.mubr.f32.mxu0 0.0
        %3856 = vmatmul.mubr.f32.gmra.mrb[0].mxu0 %v3643
        %v3857 = vpop.f32.mrb[0].mxu0
        %v3858 = vadd.f32 0.0, %v3857
        %v3859 = vpop.f32.mrb[0].mxu0
        %3860 = vmatprep.mubr.f32.mxu0 0.0
        %3861 = vmatmul.mubr.f32.gmra.mrb[0].mxu0 %v3646
        %v3862 = vpop.f32.mrb[0].mxu0
        %v3863 = vadd.f32 0.0, %v3862
        %v3864 = vpop.f32.mrb[0].mxu0
        %3865 = vmatprep.mubr.f32.mxu0 0.0
        %3866 = vmatmul.mubr.f32.gmra.mrb[0].mxu0 %v3649
        %v3867 = vpop.f32.mrb[0].mxu0
        %v3868 = vadd.f32 0.0, %v3867
        %v3869 = vpop.f32.mrb[0].mxu0
        %3870 = vmatprep.mubr.f32.mxu0 0.0
        %3871 = vmatmul.mubr.f32.gmra.mrb[0].mxu0 %v3652
        %v3872 = vpop.f32.mrb[0].mxu0
        %v3873 = vadd.f32 0.0, %v3872
        %v3874 = vpop.f32.mrb[0].mxu0
        %3875 = vmatprep.mubr.f32.mxu0 0.0
        %3876 = vmatmul.mubr.f32.gmra.mrb[0].mxu0 %v3655
        %v3877 = vpop.f32.mrb[0].mxu0
        %v3878 = vadd.f32 0.0, %v3877
        %v3879 = vpop.f32.mrb[0].mxu0
        %3880 = vmatprep.mubr.f32.mxu0 0.0
        %3881 = vmatmul.mubr.f32.gmra.mrb[0].mxu0 %v3658
        %v3882 = vpop.f32.mrb[0].mxu0
        %v3883 = vadd.f32 0.0, %v3882
        %v3884 = vpop.f32.mrb[0].mxu0
        %3885 = vmatprep.mubr.f32.mxu0 0.0
        %3886 = vmatmul.mubr.f32.gmra.mrb[0].mxu0 %v3661
        %v3887 = vpop.f32.mrb[0].mxu0
        %v3888 = vadd.f32 0.0, %v3887
        %v3889 = vpop.f32.mrb[0].mxu0
        %3890 = vdwg.mxu0
        %v3891 = vadd.f32 %v3533, %v3733
        %v3892 = vadd.f32 %v3534, %v3738
        %v3893 = vadd.f32 %v3535, %v3743
        %v3894 = vadd.f32 %v3536, %v3748
        %v3895 = vadd.f32 %v3537, %v3753
        %v3896 = vadd.f32 %v3538, %v3758
        %v3897 = vadd.f32 %v3539, %v3763
        %v3898 = vadd.f32 %v3540, %v3768
        %v3899 = vadd.f32 %v3541, %v3773
        %v3900 = vadd.f32 %v3542, %v3778
        %v3901 = vadd.f32 %v3543, %v3783
        %v3902 = vadd.f32 %v3544, %v3788
        %v3903 = vadd.f32 %v3545, %v3793
        %v3904 = vadd.f32 %v3546, %v3798
        %v3905 = vadd.f32 %v3547, %v3803
        %v3906 = vadd.f32 %v3548, %v3808
        %v3907 = vadd.f32 %v3549, %v3813
        %v3908 = vadd.f32 %v3550, %v3818
        %v3909 = vadd.f32 %v3551, %v3823
        %v3910 = vadd.f32 %v3552, %v3828
        %v3911 = vadd.f32 %v3553, %v3833
        %v3912 = vadd.f32 %v3554, %v3838
        %v3913 = vadd.f32 %v3555, %v3843
        %v3914 = vadd.f32 %v3556, %v3848
        %v3915 = vadd.f32 %v3557, %v3853
        %v3916 = vadd.f32 %v3558, %v3858
        %v3917 = vadd.f32 %v3559, %v3863
        %v3918 = vadd.f32 %v3560, %v3868
        %v3919 = vadd.f32 %v3561, %v3873
        %v3920 = vadd.f32 %v3562, %v3878
        %v3921 = vadd.f32 %v3563, %v3883
        %v3922 = vadd.f32 %v3564, %v3888
        %3923 = vst [vmem:[#allocation2] sm:$0xff] %v3891
        %3924 = vst [vmem:[#allocation2 + $0x8] sm:$0xff] %v3892
        %3925 = vst [vmem:[#allocation2 + $0x10] sm:$0xff] %v3893
        %3926 = vst [vmem:[#allocation2 + $0x18] sm:$0xff] %v3894
        %3927 = vst [vmem:[#allocation2 + $0x20] sm:$0xff] %v3895
        %3928 = vst [vmem:[#allocation2 + $0x28] sm:$0xff] %v3896
        %3929 = vst [vmem:[#allocation2 + $0x30] sm:$0xff] %v3897
        %3930 = vst [vmem:[#allocation2 + $0x38] sm:$0xff] %v3898
        %3931 = vst [vmem:[#allocation2 + $0x40] sm:$0xff] %v3899
        %3932 = vst [vmem:[#allocation2 + $0x48] sm:$0xff] %v3900
        %3933 = vst [vmem:[#allocation2 + $0x50] sm:$0xff] %v3901
        %3934 = vst [vmem:[#allocation2 + $0x58] sm:$0xff] %v3902
        %3935 = vst [vmem:[#allocation2 + $0x60] sm:$0xff] %v3903
        %3936 = vst [vmem:[#allocation2 + $0x68] sm:$0xff] %v3904
        %3937 = vst [vmem:[#allocation2 + $0x70] sm:$0xff] %v3905
        %3938 = vst [vmem:[#allocation2 + $0x78] sm:$0xff] %v3906
        %3939 = vst [vmem:[#allocation2 + $0x80] sm:$0xff] %v3907
        %3940 = vst [vmem:[#allocation2 + $0x88] sm:$0xff] %v3908
        %3941 = vst [vmem:[#allocation2 + $0x90] sm:$0xff] %v3909
        %3942 = vst [vmem:[#allocation2 + $0x98] sm:$0xff] %v3910
        %3943 = vst [vmem:[#allocation2 + $0xa0] sm:$0xff] %v3911
        %3944 = vst [vmem:[#allocation2 + $0xa8] sm:$0xff] %v3912
        %3945 = vst [vmem:[#allocation2 + $0xb0] sm:$0xff] %v3913
        %3946 = vst [vmem:[#allocation2 + $0xb8] sm:$0xff] %v3914
        %3947 = vst [vmem:[#allocation2 + $0xc0] sm:$0xff] %v3915
        %3948 = vst [vmem:[#allocation2 + $0xc8] sm:$0xff] %v3916
        %3949 = vst [vmem:[#allocation2 + $0xd0] sm:$0xff] %v3917
        %3950 = vst [vmem:[#allocation2 + $0xd8] sm:$0xff] %v3918
        %3951 = vst [vmem:[#allocation2 + $0xe0] sm:$0xff] %v3919
        %3952 = vst [vmem:[#allocation2 + $0xe8] sm:$0xff] %v3920
        %3953 = vst [vmem:[#allocation2 + $0xf0] sm:$0xff] %v3921
        %3954 = vst [vmem:[#allocation2 + $0xf8] sm:$0xff] %v3922
        %v3955 = vld [vmem:[%s3046 + $0x2] sm:$0xff]
        %v3956 = vld [vmem:[%s3046 + $0xa] sm:$0xff]
        %v3957 = vld [vmem:[%s3046 + $0x1a] sm:$0xff]
        %v3958 = vld [vmem:[%s3046 + $0x22] sm:$0xff]
        %v3959 = vld [vmem:[%s3046 + $0x32] sm:$0xff]
        %v3960 = vld [vmem:[%s3046 + $0x3a] sm:$0xff]
        %v3961 = vld [vmem:[%s3046 + $0x4a] sm:$0xff]
        %v3962 = vld [vmem:[%s3046 + $0x52] sm:$0xff]
        %v3963 = vld [vmem:[%s3046 + $0x62] sm:$0xff]
        %v3964 = vld [vmem:[%s3046 + $0x6a] sm:$0xff]
        %v3965 = vld [vmem:[%s3046 + $0x7a] sm:$0xff]
        %v3966 = vld [vmem:[%s3046 + $0x82] sm:$0xff]
        %v3967 = vld [vmem:[%s3046 + $0x92] sm:$0xff]
        %v3968 = vld [vmem:[%s3046 + $0x9a] sm:$0xff]
        %v3969 = vld [vmem:[%s3046 + $0xaa] sm:$0xff]
        %v3970 = vld [vmem:[%s3046 + $0xb2] sm:$0xff]
        %v3971 = vld [vmem:[%s3046 + $0xc2] sm:$0xff]
        %v3972 = vld [vmem:[%s3046 + $0xca] sm:$0xff]
        %v3973 = vld [vmem:[%s3046 + $0xda] sm:$0xff]
        %v3974 = vld [vmem:[%s3046 + $0xe2] sm:$0xff]
        %v3975 = vld [vmem:[%s3046 + $0xf2] sm:$0xff]
        %v3976 = vld [vmem:[%s3046 + $0xfa] sm:$0xff]
        %v3977 = vld [vmem:[%s3046 + $0x10a] sm:$0xff]
        %v3978 = vld [vmem:[%s3046 + $0x112] sm:$0xff]
        %v3979 = vld [vmem:[%s3046 + $0x122] sm:$0xff]
        %v3980 = vld [vmem:[%s3046 + $0x12a] sm:$0xff]
        %v3981 = vld [vmem:[%s3046 + $0x13a] sm:$0xff]
        %v3982 = vld [vmem:[%s3046 + $0x142] sm:$0xff]
        %v3983 = vld [vmem:[%s3046 + $0x152] sm:$0xff]
        %v3984 = vld [vmem:[%s3046 + $0x15a] sm:$0xff]
        %v3985 = vld [vmem:[%s3046 + $0x16a] sm:$0xff]
        %v3986 = vld [vmem:[%s3046 + $0x172] sm:$0xff]
        %v3987 = vld [vmem:[#allocation2] sm:$0xff]
        %v3988 = vld [vmem:[#allocation2 + $0x8] sm:$0xff]
        %v3989 = vld [vmem:[#allocation2 + $0x10] sm:$0xff]
        %v3990 = vld [vmem:[#allocation2 + $0x18] sm:$0xff]
        %v3991 = vld [vmem:[#allocation2 + $0x20] sm:$0xff]
        %v3992 = vld [vmem:[#allocation2 + $0x28] sm:$0xff]
        %v3993 = vld [vmem:[#allocation2 + $0x30] sm:$0xff]
        %v3994 = vld [vmem:[#allocation2 + $0x38] sm:$0xff]
        %v3995 = vld [vmem:[#allocation2 + $0x40] sm:$0xff]
        %v3996 = vld [vmem:[#allocation2 + $0x48] sm:$0xff]
        %v3997 = vld [vmem:[#allocation2 + $0x50] sm:$0xff]
        %v3998 = vld [vmem:[#allocation2 + $0x58] sm:$0xff]
        %v3999 = vld [vmem:[#allocation2 + $0x60] sm:$0xff]
        %v4000 = vld [vmem:[#allocation2 + $0x68] sm:$0xff]
        %v4001 = vld [vmem:[#allocation2 + $0x70] sm:$0xff]
        %v4002 = vld [vmem:[#allocation2 + $0x78] sm:$0xff]
        %v4003 = vld [vmem:[#allocation2 + $0x80] sm:$0xff]
        %v4004 = vld [vmem:[#allocation2 + $0x88] sm:$0xff]
        %v4005 = vld [vmem:[#allocation2 + $0x90] sm:$0xff]
        %v4006 = vld [vmem:[#allocation2 + $0x98] sm:$0xff]
        %v4007 = vld [vmem:[#allocation2 + $0xa0] sm:$0xff]
        %v4008 = vld [vmem:[#allocation2 + $0xa8] sm:$0xff]
        %v4009 = vld [vmem:[#allocation2 + $0xb0] sm:$0xff]
        %v4010 = vld [vmem:[#allocation2 + $0xb8] sm:$0xff]
        %v4011 = vld [vmem:[#allocation2 + $0xc0] sm:$0xff]
        %v4012 = vld [vmem:[#allocation2 + $0xc8] sm:$0xff]
        %v4013 = vld [vmem:[#allocation2 + $0xd0] sm:$0xff]
        %v4014 = vld [vmem:[#allocation2 + $0xd8] sm:$0xff]
        %v4015 = vld [vmem:[#allocation2 + $0xe0] sm:$0xff]
        %v4016 = vld [vmem:[#allocation2 + $0xe8] sm:$0xff]
        %v4017 = vld [vmem:[#allocation2 + $0xf0] sm:$0xff]
        %v4018 = vld [vmem:[#allocation2 + $0xf8] sm:$0xff]
        %s4019 = scalar_lea.vmem %s277, 32
        %v4020 = vld [vmem:[%s4019] sm:$0xf]
        %v4022 = vsel %vm385, %v3955, 0
        %v4025 = vsel %vm385, %v3956, 0
        %v4028 = vsel %vm385, %v3957, 0
        %v4031 = vsel %vm385, %v3958, 0
        %v4034 = vsel %vm385, %v3959, 0
        %v4037 = vsel %vm385, %v3960, 0
        %v4040 = vsel %vm385, %v3961, 0
        %v4043 = vsel %vm385, %v3962, 0
        %v4046 = vsel %vm385, %v3963, 0
        %v4049 = vsel %vm385, %v3964, 0
        %v4052 = vsel %vm385, %v3965, 0
        %v4055 = vsel %vm385, %v3966, 0
        %v4058 = vsel %vm385, %v3967, 0
        %v4061 = vsel %vm385, %v3968, 0
        %v4064 = vsel %vm385, %v3969, 0
        %v4067 = vsel %vm385, %v3970, 0
        %v4070 = vsel %vm385, %v3971, 0
        %v4073 = vsel %vm385, %v3972, 0
        %v4076 = vsel %vm385, %v3973, 0
        %v4079 = vsel %vm385, %v3974, 0
        %v4082 = vsel %vm385, %v3975, 0
        %v4085 = vsel %vm385, %v3976, 0
        %v4088 = vsel %vm385, %v3977, 0
        %v4091 = vsel %vm385, %v3978, 0
        %v4094 = vsel %vm385, %v3979, 0
        %v4097 = vsel %vm385, %v3980, 0
        %v4100 = vsel %vm385, %v3981, 0
        %v4103 = vsel %vm385, %v3982, 0
        %v4106 = vsel %vm385, %v3983, 0
        %v4109 = vsel %vm385, %v3984, 0
        %v4112 = vsel %vm385, %v3985, 0
        %v4115 = vsel %vm385, %v3986, 0
        %v4118 = vsel %vm482, %v4020, 0
        %4120 = vmatprep.subr.mxu0 0.0
        %4121 = vmatpush1.msra.mxu0 %v4118
        %4122 = vmatprep.subr.mxu0 0.0
        %4123 = vmatpush1.msra.mxu0 0.0
        %4124 = vmatprep.subr.mxu0 0.0
        %4125 = vmatpush1.msra.mxu0 0.0
        %4126 = vmatprep.subr.mxu0 0.0
        %4127 = vmatpush1.msra.mxu0 0.0
        %4128 = vmatprep.subr.mxu0 0.0
        %4129 = vmatpush1.msra.mxu0 0.0
        %4130 = vmatprep.subr.mxu0 0.0
        %4131 = vmatpush1.msra.mxu0 0.0
        %4132 = vmatprep.subr.mxu0 0.0
        %4133 = vmatpush1.msra.mxu0 0.0
        %4134 = vmatprep.subr.mxu0 0.0
        %4135 = vmatpush1.msra.mxu0 0.0
        %4136 = vmatprep.subr.mxu0 0.0
        %4137 = vmatpush1.msra.mxu0 0.0
        %4138 = vmatprep.subr.mxu0 0.0
        %4139 = vmatpush1.msra.mxu0 0.0
        %4140 = vmatprep.subr.mxu0 0.0
        %4141 = vmatpush1.msra.mxu0 0.0
        %4142 = vmatprep.subr.mxu0 0.0
        %4143 = vmatpush1.msra.mxu0 0.0
        %4144 = vmatprep.subr.mxu0 0.0
        %4145 = vmatpush1.msra.mxu0 0.0
        %4146 = vmatprep.subr.mxu0 0.0
        %4147 = vmatpush1.msra.mxu0 0.0
        %4148 = vmatprep.subr.mxu0 0.0
        %4149 = vmatpush1.msra.mxu0 0.0
        %4150 = vmatprep.subr.mxu0 0.0
        %4151 = vmatpush1.msra.mxu0 0.0
        %4152 = vmatprep.subr.mxu0 0.0
        %4153 = vmatpush1.msra.mxu0 0.0
        %4154 = vmatprep.subr.mxu0 0.0
        %4155 = vmatpush1.msra.mxu0 0.0
        %4156 = vmatprep.subr.mxu0 0.0
        %4157 = vmatpush1.msra.mxu0 0.0
        %4158 = vmatprep.subr.mxu0 0.0
        %4159 = vmatpush1.msra.mxu0 0.0
        %4160 = vmatprep.subr.mxu0 0.0
        %4161 = vmatpush1.msra.mxu0 0.0
        %4162 = vmatprep.subr.mxu0 0.0
        %4163 = vmatpush1.msra.mxu0 0.0
        %4164 = vmatprep.subr.mxu0 0.0
        %4165 = vmatpush1.msra.mxu0 0.0
        %4166 = vmatprep.subr.mxu0 0.0
        %4167 = vmatpush1.msra.mxu0 0.0
        %4168 = vmatprep.subr.mxu0 0.0
        %4169 = vmatpush1.msra.mxu0 0.0
        %4170 = vmatprep.subr.mxu0 0.0
        %4171 = vmatpush1.msra.mxu0 0.0
        %4172 = vmatprep.subr.mxu0 0.0
        %4173 = vmatpush1.msra.mxu0 0.0
        %4174 = vmatprep.subr.mxu0 0.0
        %4175 = vmatpush1.msra.mxu0 0.0
        %4176 = vmatprep.subr.mxu0 0.0
        %4177 = vmatpush1.msra.mxu0 0.0
        %4178 = vmatprep.subr.mxu0 0.0
        %4179 = vmatpush1.msra.mxu0 0.0
        %4180 = vmatprep.subr.mxu0 0.0
        %4181 = vmatpush1.msra.mxu0 0.0
        %4182 = vmatprep.subr.mxu0 0.0
        %4183 = vmatpush1.msra.mxu0 0.0
        %4184 = vmatprep.mubr.f32.mxu0 0.0
        %4185 = vmatmul.mubr.f32.gmra.mrb[0].mxu0 %v4022
        %v4186 = vpop.f32.mrb[0].mxu0
        %v4187 = vadd.f32 0.0, %v4186
        %v4188 = vpop.f32.mrb[0].mxu0
        %4189 = vmatprep.mubr.f32.mxu0 0.0
        %4190 = vmatmul.mubr.f32.gmra.mrb[0].mxu0 %v4025
        %v4191 = vpop.f32.mrb[0].mxu0
        %v4192 = vadd.f32 0.0, %v4191
        %v4193 = vpop.f32.mrb[0].mxu0
        %4194 = vmatprep.mubr.f32.mxu0 0.0
        %4195 = vmatmul.mubr.f32.gmra.mrb[0].mxu0 %v4028
        %v4196 = vpop.f32.mrb[0].mxu0
        %v4197 = vadd.f32 0.0, %v4196
        %v4198 = vpop.f32.mrb[0].mxu0
        %4199 = vmatprep.mubr.f32.mxu0 0.0
        %4200 = vmatmul.mubr.f32.gmra.mrb[0].mxu0 %v4031
        %v4201 = vpop.f32.mrb[0].mxu0
        %v4202 = vadd.f32 0.0, %v4201
        %v4203 = vpop.f32.mrb[0].mxu0
        %4204 = vmatprep.mubr.f32.mxu0 0.0
        %4205 = vmatmul.mubr.f32.gmra.mrb[0].mxu0 %v4034
        %v4206 = vpop.f32.mrb[0].mxu0
        %v4207 = vadd.f32 0.0, %v4206
        %v4208 = vpop.f32.mrb[0].mxu0
        %4209 = vmatprep.mubr.f32.mxu0 0.0
        %4210 = vmatmul.mubr.f32.gmra.mrb[0].mxu0 %v4037
        %v4211 = vpop.f32.mrb[0].mxu0
        %v4212 = vadd.f32 0.0, %v4211
        %v4213 = vpop.f32.mrb[0].mxu0
        %4214 = vmatprep.mubr.f32.mxu0 0.0
        %4215 = vmatmul.mubr.f32.gmra.mrb[0].mxu0 %v4040
        %v4216 = vpop.f32.mrb[0].mxu0
        %v4217 = vadd.f32 0.0, %v4216
        %v4218 = vpop.f32.mrb[0].mxu0
        %4219 = vmatprep.mubr.f32.mxu0 0.0
        %4220 = vmatmul.mubr.f32.gmra.mrb[0].mxu0 %v4043
        %v4221 = vpop.f32.mrb[0].mxu0
        %v4222 = vadd.f32 0.0, %v4221
        %v4223 = vpop.f32.mrb[0].mxu0
        %4224 = vmatprep.mubr.f32.mxu0 0.0
        %4225 = vmatmul.mubr.f32.gmra.mrb[0].mxu0 %v4046
        %v4226 = vpop.f32.mrb[0].mxu0
        %v4227 = vadd.f32 0.0, %v4226
        %v4228 = vpop.f32.mrb[0].mxu0
        %4229 = vmatprep.mubr.f32.mxu0 0.0
        %4230 = vmatmul.mubr.f32.gmra.mrb[0].mxu0 %v4049
        %v4231 = vpop.f32.mrb[0].mxu0
        %v4232 = vadd.f32 0.0, %v4231
        %v4233 = vpop.f32.mrb[0].mxu0
        %4234 = vmatprep.mubr.f32.mxu0 0.0
        %4235 = vmatmul.mubr.f32.gmra.mrb[0].mxu0 %v4052
        %v4236 = vpop.f32.mrb[0].mxu0
        %v4237 = vadd.f32 0.0, %v4236
        %v4238 = vpop.f32.mrb[0].mxu0
        %4239 = vmatprep.mubr.f32.mxu0 0.0
        %4240 = vmatmul.mubr.f32.gmra.mrb[0].mxu0 %v4055
        %v4241 = vpop.f32.mrb[0].mxu0
        %v4242 = vadd.f32 0.0, %v4241
        %v4243 = vpop.f32.mrb[0].mxu0
        %4244 = vmatprep.mubr.f32.mxu0 0.0
        %4245 = vmatmul.mubr.f32.gmra.mrb[0].mxu0 %v4058
        %v4246 = vpop.f32.mrb[0].mxu0
        %v4247 = vadd.f32 0.0, %v4246
        %v4248 = vpop.f32.mrb[0].mxu0
        %4249 = vmatprep.mubr.f32.mxu0 0.0
        %4250 = vmatmul.mubr.f32.gmra.mrb[0].mxu0 %v4061
        %v4251 = vpop.f32.mrb[0].mxu0
        %v4252 = vadd.f32 0.0, %v4251
        %v4253 = vpop.f32.mrb[0].mxu0
        %4254 = vmatprep.mubr.f32.mxu0 0.0
        %4255 = vmatmul.mubr.f32.gmra.mrb[0].mxu0 %v4064
        %v4256 = vpop.f32.mrb[0].mxu0
        %v4257 = vadd.f32 0.0, %v4256
        %v4258 = vpop.f32.mrb[0].mxu0
        %4259 = vmatprep.mubr.f32.mxu0 0.0
        %4260 = vmatmul.mubr.f32.gmra.mrb[0].mxu0 %v4067
        %v4261 = vpop.f32.mrb[0].mxu0
        %v4262 = vadd.f32 0.0, %v4261
        %v4263 = vpop.f32.mrb[0].mxu0
        %4264 = vmatprep.mubr.f32.mxu0 0.0
        %4265 = vmatmul.mubr.f32.gmra.mrb[0].mxu0 %v4070
        %v4266 = vpop.f32.mrb[0].mxu0
        %v4267 = vadd.f32 0.0, %v4266
        %v4268 = vpop.f32.mrb[0].mxu0
        %4269 = vmatprep.mubr.f32.mxu0 0.0
        %4270 = vmatmul.mubr.f32.gmra.mrb[0].mxu0 %v4073
        %v4271 = vpop.f32.mrb[0].mxu0
        %v4272 = vadd.f32 0.0, %v4271
        %v4273 = vpop.f32.mrb[0].mxu0
        %4274 = vmatprep.mubr.f32.mxu0 0.0
        %4275 = vmatmul.mubr.f32.gmra.mrb[0].mxu0 %v4076
        %v4276 = vpop.f32.mrb[0].mxu0
        %v4277 = vadd.f32 0.0, %v4276
        %v4278 = vpop.f32.mrb[0].mxu0
        %4279 = vmatprep.mubr.f32.mxu0 0.0
        %4280 = vmatmul.mubr.f32.gmra.mrb[0].mxu0 %v4079
        %v4281 = vpop.f32.mrb[0].mxu0
        %v4282 = vadd.f32 0.0, %v4281
        %v4283 = vpop.f32.mrb[0].mxu0
        %4284 = vmatprep.mubr.f32.mxu0 0.0
        %4285 = vmatmul.mubr.f32.gmra.mrb[0].mxu0 %v4082
        %v4286 = vpop.f32.mrb[0].mxu0
        %v4287 = vadd.f32 0.0, %v4286
        %v4288 = vpop.f32.mrb[0].mxu0
        %4289 = vmatprep.mubr.f32.mxu0 0.0
        %4290 = vmatmul.mubr.f32.gmra.mrb[0].mxu0 %v4085
        %v4291 = vpop.f32.mrb[0].mxu0
        %v4292 = vadd.f32 0.0, %v4291
        %v4293 = vpop.f32.mrb[0].mxu0
        %4294 = vmatprep.mubr.f32.mxu0 0.0
        %4295 = vmatmul.mubr.f32.gmra.mrb[0].mxu0 %v4088
        %v4296 = vpop.f32.mrb[0].mxu0
        %v4297 = vadd.f32 0.0, %v4296
        %v4298 = vpop.f32.mrb[0].mxu0
        %4299 = vmatprep.mubr.f32.mxu0 0.0
        %4300 = vmatmul.mubr.f32.gmra.mrb[0].mxu0 %v4091
        %v4301 = vpop.f32.mrb[0].mxu0
        %v4302 = vadd.f32 0.0, %v4301
        %v4303 = vpop.f32.mrb[0].mxu0
        %4304 = vmatprep.mubr.f32.mxu0 0.0
        %4305 = vmatmul.mubr.f32.gmra.mrb[0].mxu0 %v4094
        %v4306 = vpop.f32.mrb[0].mxu0
        %v4307 = vadd.f32 0.0, %v4306
        %v4308 = vpop.f32.mrb[0].mxu0
        %4309 = vmatprep.mubr.f32.mxu0 0.0
        %4310 = vmatmul.mubr.f32.gmra.mrb[0].mxu0 %v4097
        %v4311 = vpop.f32.mrb[0].mxu0
        %v4312 = vadd.f32 0.0, %v4311
        %v4313 = vpop.f32.mrb[0].mxu0
        %4314 = vmatprep.mubr.f32.mxu0 0.0
        %4315 = vmatmul.mubr.f32.gmra.mrb[0].mxu0 %v4100
        %v4316 = vpop.f32.mrb[0].mxu0
        %v4317 = vadd.f32 0.0, %v4316
        %v4318 = vpop.f32.mrb[0].mxu0
        %4319 = vmatprep.mubr.f32.mxu0 0.0
        %4320 = vmatmul.mubr.f32.gmra.mrb[0].mxu0 %v4103
        %v4321 = vpop.f32.mrb[0].mxu0
        %v4322 = vadd.f32 0.0, %v4321
        %v4323 = vpop.f32.mrb[0].mxu0
        %4324 = vmatprep.mubr.f32.mxu0 0.0
        %4325 = vmatmul.mubr.f32.gmra.mrb[0].mxu0 %v4106
        %v4326 = vpop.f32.mrb[0].mxu0
        %v4327 = vadd.f32 0.0, %v4326
        %v4328 = vpop.f32.mrb[0].mxu0
        %4329 = vmatprep.mubr.f32.mxu0 0.0
        %4330 = vmatmul.mubr.f32.gmra.mrb[0].mxu0 %v4109
        %v4331 = vpop.f32.mrb[0].mxu0
        %v4332 = vadd.f32 0.0, %v4331
        %v4333 = vpop.f32.mrb[0].mxu0
        %4334 = vmatprep.mubr.f32.mxu0 0.0
        %4335 = vmatmul.mubr.f32.gmra.mrb[0].mxu0 %v4112
        %v4336 = vpop.f32.mrb[0].mxu0
        %v4337 = vadd.f32 0.0, %v4336
        %v4338 = vpop.f32.mrb[0].mxu0
        %4339 = vmatprep.mubr.f32.mxu0 0.0
        %4340 = vmatmul.mubr.f32.gmra.mrb[0].mxu0 %v4115
        %v4341 = vpop.f32.mrb[0].mxu0
        %v4342 = vadd.f32 0.0, %v4341
        %v4343 = vpop.f32.mrb[0].mxu0
        %4344 = vdwg.mxu0
        %v4345 = vadd.f32 %v3987, %v4187
        %v4346 = vadd.f32 %v3988, %v4192
        %v4347 = vadd.f32 %v3989, %v4197
        %v4348 = vadd.f32 %v3990, %v4202
        %v4349 = vadd.f32 %v3991, %v4207
        %v4350 = vadd.f32 %v3992, %v4212
        %v4351 = vadd.f32 %v3993, %v4217
        %v4352 = vadd.f32 %v3994, %v4222
        %v4353 = vadd.f32 %v3995, %v4227
        %v4354 = vadd.f32 %v3996, %v4232
        %v4355 = vadd.f32 %v3997, %v4237
        %v4356 = vadd.f32 %v3998, %v4242
        %v4357 = vadd.f32 %v3999, %v4247
        %v4358 = vadd.f32 %v4000, %v4252
        %v4359 = vadd.f32 %v4001, %v4257
        %v4360 = vadd.f32 %v4002, %v4262
        %v4361 = vadd.f32 %v4003, %v4267
        %v4362 = vadd.f32 %v4004, %v4272
        %v4363 = vadd.f32 %v4005, %v4277
        %v4364 = vadd.f32 %v4006, %v4282
        %v4365 = vadd.f32 %v4007, %v4287
        %v4366 = vadd.f32 %v4008, %v4292
        %v4367 = vadd.f32 %v4009, %v4297
        %v4368 = vadd.f32 %v4010, %v4302
        %v4369 = vadd.f32 %v4011, %v4307
        %v4370 = vadd.f32 %v4012, %v4312
        %v4371 = vadd.f32 %v4013, %v4317
        %v4372 = vadd.f32 %v4014, %v4322
        %v4373 = vadd.f32 %v4015, %v4327
        %v4374 = vadd.f32 %v4016, %v4332
        %v4375 = vadd.f32 %v4017, %v4337
        %v4376 = vadd.f32 %v4018, %v4342
        %4377 = vst [vmem:[#allocation2] sm:$0xff] %v4345
        %4378 = vst [vmem:[#allocation2 + $0x8] sm:$0xff] %v4346
        %4379 = vst [vmem:[#allocation2 + $0x10] sm:$0xff] %v4347
        %4380 = vst [vmem:[#allocation2 + $0x18] sm:$0xff] %v4348
        %4381 = vst [vmem:[#allocation2 + $0x20] sm:$0xff] %v4349
        %4382 = vst [vmem:[#allocation2 + $0x28] sm:$0xff] %v4350
        %4383 = vst [vmem:[#allocation2 + $0x30] sm:$0xff] %v4351
        %4384 = vst [vmem:[#allocation2 + $0x38] sm:$0xff] %v4352
        %4385 = vst [vmem:[#allocation2 + $0x40] sm:$0xff] %v4353
        %4386 = vst [vmem:[#allocation2 + $0x48] sm:$0xff] %v4354
        %4387 = vst [vmem:[#allocation2 + $0x50] sm:$0xff] %v4355
        %4388 = vst [vmem:[#allocation2 + $0x58] sm:$0xff] %v4356
        %4389 = vst [vmem:[#allocation2 + $0x60] sm:$0xff] %v4357
        %4390 = vst [vmem:[#allocation2 + $0x68] sm:$0xff] %v4358
        %4391 = vst [vmem:[#allocation2 + $0x70] sm:$0xff] %v4359
        %4392 = vst [vmem:[#allocation2 + $0x78] sm:$0xff] %v4360
        %4393 = vst [vmem:[#allocation2 + $0x80] sm:$0xff] %v4361
        %4394 = vst [vmem:[#allocation2 + $0x88] sm:$0xff] %v4362
        %4395 = vst [vmem:[#allocation2 + $0x90] sm:$0xff] %v4363
        %4396 = vst [vmem:[#allocation2 + $0x98] sm:$0xff] %v4364
        %4397 = vst [vmem:[#allocation2 + $0xa0] sm:$0xff] %v4365
        %4398 = vst [vmem:[#allocation2 + $0xa8] sm:$0xff] %v4366
        %4399 = vst [vmem:[#allocation2 + $0xb0] sm:$0xff] %v4367
        %4400 = vst [vmem:[#allocation2 + $0xb8] sm:$0xff] %v4368
        %4401 = vst [vmem:[#allocation2 + $0xc0] sm:$0xff] %v4369
        %4402 = vst [vmem:[#allocation2 + $0xc8] sm:$0xff] %v4370
        %4403 = vst [vmem:[#allocation2 + $0xd0] sm:$0xff] %v4371
        %4404 = vst [vmem:[#allocation2 + $0xd8] sm:$0xff] %v4372
        %4405 = vst [vmem:[#allocation2 + $0xe0] sm:$0xff] %v4373
        %4406 = vst [vmem:[#allocation2 + $0xe8] sm:$0xff] %v4374
        %4407 = vst [vmem:[#allocation2 + $0xf0] sm:$0xff] %v4375
        %4408 = vst [vmem:[#allocation2 + $0xf8] sm:$0xff] %v4376
        // Predicated region
        $region41: #{tpu_custom_call.1} parent=35 // pred_check
          %p4409 = pneg %p284
        $region42: #{tpu_custom_call.1} parent=35 // pred_check_branch
          %4411 = sbr.rel (%p4409) target = $region44
        $region43: #{tpu_custom_call.1} parent=35 // pred_region
          %v4412 = vld [vmem:[#allocation2] sm:$0xff]
          %v4413 = vld [vmem:[#allocation2 + $0x8] sm:$0xff]
          %v4414 = vld [vmem:[#allocation2 + $0x10] sm:$0xff]
          %v4415 = vld [vmem:[#allocation2 + $0x18] sm:$0xff]
          %v4416 = vld [vmem:[#allocation2 + $0x20] sm:$0xff]
          %v4417 = vld [vmem:[#allocation2 + $0x28] sm:$0xff]
          %v4418 = vld [vmem:[#allocation2 + $0x30] sm:$0xff]
          %v4419 = vld [vmem:[#allocation2 + $0x38] sm:$0xff]
          %v4420 = vld [vmem:[#allocation2 + $0x40] sm:$0xff]
          %v4421 = vld [vmem:[#allocation2 + $0x48] sm:$0xff]
          %v4422 = vld [vmem:[#allocation2 + $0x50] sm:$0xff]
          %v4423 = vld [vmem:[#allocation2 + $0x58] sm:$0xff]
          %v4424 = vld [vmem:[#allocation2 + $0x60] sm:$0xff]
          %v4425 = vld [vmem:[#allocation2 + $0x68] sm:$0xff]
          %v4426 = vld [vmem:[#allocation2 + $0x70] sm:$0xff]
          %v4427 = vld [vmem:[#allocation2 + $0x78] sm:$0xff]
          %v4428 = vld [vmem:[#allocation2 + $0x80] sm:$0xff]
          %v4429 = vld [vmem:[#allocation2 + $0x88] sm:$0xff]
          %v4430 = vld [vmem:[#allocation2 + $0x90] sm:$0xff]
          %v4431 = vld [vmem:[#allocation2 + $0x98] sm:$0xff]
          %v4432 = vld [vmem:[#allocation2 + $0xa0] sm:$0xff]
          %v4433 = vld [vmem:[#allocation2 + $0xa8] sm:$0xff]
          %v4434 = vld [vmem:[#allocation2 + $0xb0] sm:$0xff]
          %v4435 = vld [vmem:[#allocation2 + $0xb8] sm:$0xff]
          %v4436 = vld [vmem:[#allocation2 + $0xc0] sm:$0xff]
          %v4437 = vld [vmem:[#allocation2 + $0xc8] sm:$0xff]
          %v4438 = vld [vmem:[#allocation2 + $0xd0] sm:$0xff]
          %v4439 = vld [vmem:[#allocation2 + $0xd8] sm:$0xff]
          %v4440 = vld [vmem:[#allocation2 + $0xe0] sm:$0xff]
          %v4441 = vld [vmem:[#allocation2 + $0xe8] sm:$0xff]
          %v4442 = vld [vmem:[#allocation2 + $0xf0] sm:$0xff]
          %v4443 = vld [vmem:[#allocation2 + $0xf8] sm:$0xff]
          %v4444 = vld [vmem:[%s280] sm:$0x1]
          %v4446 = vlaneseq
          %v4447 = vshrl.u32 %v4446, 7
          %v4448 = vsub.s32 0, %v4447
          %v4449 = vrot.slane %v4444, %v4448
          %v4451 = vmul.f32 %v4412, %v4449
          %v4452 = vmul.f32 %v4413, %v4449
          %v4453 = vmul.f32 %v4414, %v4449
          %v4454 = vmul.f32 %v4415, %v4449
          %v4455 = vmul.f32 %v4416, %v4449
          %v4456 = vmul.f32 %v4417, %v4449
          %v4457 = vmul.f32 %v4418, %v4449
          %v4458 = vmul.f32 %v4419, %v4449
          %v4459 = vmul.f32 %v4420, %v4449
          %v4460 = vmul.f32 %v4421, %v4449
          %v4461 = vmul.f32 %v4422, %v4449
          %v4462 = vmul.f32 %v4423, %v4449
          %v4463 = vmul.f32 %v4424, %v4449
          %v4464 = vmul.f32 %v4425, %v4449
          %v4465 = vmul.f32 %v4426, %v4449
          %v4466 = vmul.f32 %v4427, %v4449
          %v4467 = vmul.f32 %v4428, %v4449
          %v4468 = vmul.f32 %v4429, %v4449
          %v4469 = vmul.f32 %v4430, %v4449
          %v4470 = vmul.f32 %v4431, %v4449
          %v4471 = vmul.f32 %v4432, %v4449
          %v4472 = vmul.f32 %v4433, %v4449
          %v4473 = vmul.f32 %v4434, %v4449
          %v4474 = vmul.f32 %v4435, %v4449
          %v4475 = vmul.f32 %v4436, %v4449
          %v4476 = vmul.f32 %v4437, %v4449
          %v4477 = vmul.f32 %v4438, %v4449
          %v4478 = vmul.f32 %v4439, %v4449
          %v4479 = vmul.f32 %v4440, %v4449
          %v4480 = vmul.f32 %v4441, %v4449
          %v4481 = vmul.f32 %v4442, %v4449
          %v4482 = vmul.f32 %v4443, %v4449
          %v4483 = vld [vmem:[%s283] sm:$0x1]
          %v4485 = vlaneseq
          %v4486 = vshrl.u32 %v4485, 7
          %v4487 = vsub.s32 0, %v4486
          %v4488 = vrot.slane %v4483, %v4487
          %v4490 = vadd.f32 %v4451, %v4488
          %v4491 = vadd.f32 %v4452, %v4488
          %v4492 = vadd.f32 %v4453, %v4488
          %v4493 = vadd.f32 %v4454, %v4488
          %v4494 = vadd.f32 %v4455, %v4488
          %v4495 = vadd.f32 %v4456, %v4488
          %v4496 = vadd.f32 %v4457, %v4488
          %v4497 = vadd.f32 %v4458, %v4488
          %v4498 = vadd.f32 %v4459, %v4488
          %v4499 = vadd.f32 %v4460, %v4488
          %v4500 = vadd.f32 %v4461, %v4488
          %v4501 = vadd.f32 %v4462, %v4488
          %v4502 = vadd.f32 %v4463, %v4488
          %v4503 = vadd.f32 %v4464, %v4488
          %v4504 = vadd.f32 %v4465, %v4488
          %v4505 = vadd.f32 %v4466, %v4488
          %v4506 = vadd.f32 %v4467, %v4488
          %v4507 = vadd.f32 %v4468, %v4488
          %v4508 = vadd.f32 %v4469, %v4488
          %v4509 = vadd.f32 %v4470, %v4488
          %v4510 = vadd.f32 %v4471, %v4488
          %v4511 = vadd.f32 %v4472, %v4488
          %v4512 = vadd.f32 %v4473, %v4488
          %v4513 = vadd.f32 %v4474, %v4488
          %v4514 = vadd.f32 %v4475, %v4488
          %v4515 = vadd.f32 %v4476, %v4488
          %v4516 = vadd.f32 %v4477, %v4488
          %v4517 = vadd.f32 %v4478, %v4488
          %v4518 = vadd.f32 %v4479, %v4488
          %v4519 = vadd.f32 %v4480, %v4488
          %v4520 = vadd.f32 %v4481, %v4488
          %v4521 = vadd.f32 %v4482, %v4488
          %v4522 = vmax.f32 %v4490, 0.0
          %v4523 = vmax.f32 %v4491, 0.0
          %v4524 = vmax.f32 %v4492, 0.0
          %v4525 = vmax.f32 %v4493, 0.0
          %v4526 = vmax.f32 %v4494, 0.0
          %v4527 = vmax.f32 %v4495, 0.0
          %v4528 = vmax.f32 %v4496, 0.0
          %v4529 = vmax.f32 %v4497, 0.0
          %v4530 = vmax.f32 %v4498, 0.0
          %v4531 = vmax.f32 %v4499, 0.0
          %v4532 = vmax.f32 %v4500, 0.0
          %v4533 = vmax.f32 %v4501, 0.0
          %v4534 = vmax.f32 %v4502, 0.0
          %v4535 = vmax.f32 %v4503, 0.0
          %v4536 = vmax.f32 %v4504, 0.0
          %v4537 = vmax.f32 %v4505, 0.0
          %v4538 = vmax.f32 %v4506, 0.0
          %v4539 = vmax.f32 %v4507, 0.0
          %v4540 = vmax.f32 %v4508, 0.0
          %v4541 = vmax.f32 %v4509, 0.0
          %v4542 = vmax.f32 %v4510, 0.0
          %v4543 = vmax.f32 %v4511, 0.0
          %v4544 = vmax.f32 %v4512, 0.0
          %v4545 = vmax.f32 %v4513, 0.0
          %v4546 = vmax.f32 %v4514, 0.0
          %v4547 = vmax.f32 %v4515, 0.0
          %v4548 = vmax.f32 %v4516, 0.0
          %v4549 = vmax.f32 %v4517, 0.0
          %v4550 = vmax.f32 %v4518, 0.0
          %v4551 = vmax.f32 %v4519, 0.0
          %v4552 = vmax.f32 %v4520, 0.0
          %v4553 = vmax.f32 %v4521, 0.0
          %4554 = vst [vmem:[%s262] sm:$0xff] %v4522
          %4555 = vst [vmem:[%s262 + $0x8] sm:$0xff] %v4523
          %4556 = vst [vmem:[%s262 + $0x10] sm:$0xff] %v4524
          %4557 = vst [vmem:[%s262 + $0x18] sm:$0xff] %v4525
          %4558 = vst [vmem:[%s262 + $0x20] sm:$0xff] %v4526
          %4559 = vst [vmem:[%s262 + $0x28] sm:$0xff] %v4527
          %4560 = vst [vmem:[%s262 + $0x30] sm:$0xff] %v4528
          %4561 = vst [vmem:[%s262 + $0x38] sm:$0xff] %v4529
          %4562 = vst [vmem:[%s262 + $0x40] sm:$0xff] %v4530
          %4563 = vst [vmem:[%s262 + $0x48] sm:$0xff] %v4531
          %4564 = vst [vmem:[%s262 + $0x50] sm:$0xff] %v4532
          %4565 = vst [vmem:[%s262 + $0x58] sm:$0xff] %v4533
          %4566 = vst [vmem:[%s262 + $0x60] sm:$0xff] %v4534
          %4567 = vst [vmem:[%s262 + $0x68] sm:$0xff] %v4535
          %4568 = vst [vmem:[%s262 + $0x70] sm:$0xff] %v4536
          %4569 = vst [vmem:[%s262 + $0x78] sm:$0xff] %v4537
          %4570 = vst [vmem:[%s262 + $0x80] sm:$0xff] %v4538
          %4571 = vst [vmem:[%s262 + $0x88] sm:$0xff] %v4539
          %4572 = vst [vmem:[%s262 + $0x90] sm:$0xff] %v4540
          %4573 = vst [vmem:[%s262 + $0x98] sm:$0xff] %v4541
          %4574 = vst [vmem:[%s262 + $0xa0] sm:$0xff] %v4542
          %4575 = vst [vmem:[%s262 + $0xa8] sm:$0xff] %v4543
          %4576 = vst [vmem:[%s262 + $0xb0] sm:$0xff] %v4544
          %4577 = vst [vmem:[%s262 + $0xb8] sm:$0xff] %v4545
          %4578 = vst [vmem:[%s262 + $0xc0] sm:$0xff] %v4546
          %4579 = vst [vmem:[%s262 + $0xc8] sm:$0xff] %v4547
          %4580 = vst [vmem:[%s262 + $0xd0] sm:$0xff] %v4548
          %4581 = vst [vmem:[%s262 + $0xd8] sm:$0xff] %v4549
          %4582 = vst [vmem:[%s262 + $0xe0] sm:$0xff] %v4550
          %4583 = vst [vmem:[%s262 + $0xe8] sm:$0xff] %v4551
          %4584 = vst [vmem:[%s262 + $0xf0] sm:$0xff] %v4552
          %4585 = vst [vmem:[%s262 + $0xf8] sm:$0xff] %v4553
        $region44: #{tpu_custom_call.1} parent=35 // pred_fallthru
          _
        %s4586 = sand.u32 %s155, 1
        %s4587 = scalar_lea.sflag [#allocation4], %s4586
        %s4588 = sand.u32 %s155, 1
        %s4589 = smul.addr %s4588, 256
        %s4590 = scalar_lea.vmem [#allocation3], %s4589
        // Predicated region
        $region45: #{tpu_custom_call.1} parent=35 // pred_check
          %p4591 = pneg %p165
        $region46: #{tpu_custom_call.1} parent=35 // pred_check_branch
          %4593 = sbr.rel (%p4591) target = $region48
        $region47: #{tpu_custom_call.1} parent=35 // pred_region
          %s4595 = ssub.s32 4096, 4096
          %4596 = vsyncadd %s4587, %s4595
          %s4597 = smul.addr %s23, 32
          %s4598 = sadd.s32 %s24, %s4597
          %s4599 = smul.addr %s4598, 128
          %s4600 = scalar_lea.hbm %s4, %s4599
          %s4601 = sshll.u32 %s4590, 4
          %s4602 = int_to_ptr.vmem [resolvable:$true] %s4601
          %4607 = dma.vmem_to_hbm [thread:$0]  %s4602, 4096, %s4600, %s4587, 128, 128, 8
        $region48: #{tpu_custom_call.1} parent=35 // pred_fallthru
          _
      $region36: #{tpu_custom_call.1} parent=5 // pred_fallthru
        _
      %p4608 = scmp.le.s32.totalorder 2, %s13
      // Predicated region
      $region49: #{tpu_custom_call.1} parent=5 // pred_check
        %p4609 = pneg %p4608
      $region50: #{tpu_custom_call.1} parent=5 // pred_check_branch
        %4611 = sbr.rel (%p4609) target = $region52
      $region51: #{tpu_custom_call.1} parent=5 // pred_region
        %s4612 = ssub.s32 %s13, 2
        // Predicated region
        $region53: #{tpu_custom_call.1} parent=51 // pred_check
          %p4613 = pneg %p171
        $region54: #{tpu_custom_call.1} parent=51 // pred_check_branch
          %4615 = sbr.rel (%p4613) target = $region56
        $region55: #{tpu_custom_call.1} parent=51 // pred_region
          %s4616 = sand.u32 %s156, 1
          %s4617 = scalar_lea.sflag [#allocation4], %s4616
          %s4618 = sand.u32 %s156, 1
          %s4619 = smul.addr %s4618, 256
          %s4620 = scalar_lea.vmem [#allocation3], %s4619
          %4621 = dma.done %s4617, 4096
        $region56: #{tpu_custom_call.1} parent=51 // pred_fallthru
          _
      $region52: #{tpu_custom_call.1} parent=5 // pred_fallthru
        _
    $region6: #{tpu_custom_call.1} parent=1 // loop_footer
      %s17 = sadd.s32 1, %s13
    $region7: #{tpu_custom_call.1} parent=1 // loop_footer_branch
      %12 = sbr.rel target = $region3
    $region8: #{tpu_custom_call.1} parent=1 // loop_exit
      _
    %4622 = vsyncpa [#allocation4], 1
    %s4623 = scalar_lea.sflag [#allocation4], 1
    %4624 = vsyncpa %s4623, 1

</llo_original>
